<compile_context>
chip_gen: v6e
topology: v6e:2x2x1
jax: 0.10.0
libtpu: 0.0.40
codegen_flags: <defaults>
</compile_context>

<pallas_src>
import jax
import jax.numpy as jnp
from jax import lax
from jax.experimental import pallas as pl
from jax.experimental.pallas import tpu as pltpu

# ---- synthetic "config" (small ELMo) -------------------------------------
N_CHARS    = 50                              # fixed by the module docstring
CHAR_VOCAB = 262                             # ELMo char vocab size
CHAR_DIM   = 16
FILTERS    = ((1, 32), (2, 32), (3, 64))     # (kernel width, n_filters)
N_FILT     = sum(f for _, f in FILTERS)      # 128  (lane-dense)
MAX_W      = max(w for w, _ in FILTERS)      # 3
N_POS      = N_CHARS - MAX_W + 1             # 48 shared conv positions
WIN_K      = MAX_W * CHAR_DIM                # 48 = fused im2col K
TOK_DIM    = 32                              # char-CNN projection dim
LSTM_H     = 32                              # per-direction hidden
G4         = 4 * LSTM_H                      # 128 gates (lane-dense)
ELMO_DIM   = 2 * LSTM_H                      # output representation dim

MATMUL_DTYPE = jnp.bfloat16                  # MXU-native on v6e/v7x; f32 accumulate
VMEM_LIMIT   = 32 * 1024 * 1024


def _round_up(x, m):
    return (x + m - 1) // m * m


def _pick_chunk(t, max_chunk=32):
    """Largest divisor of t that is <= max_chunk (keeps semantics w/o time pad)."""
    for c in range(min(max_chunk, t), 0, -1):
        if t % c == 0:
            return c
    return 1


# ---- kernel 1: fused char-CNN token encoder + hoisted LSTM input proj ------
def _char_cnn_kernel(win_ref, convw_ref, convb_ref,
                     hw_wh_ref, hw_bh_ref, hw_wg_ref, hw_bg_ref,
                     proj_w_ref, proj_b_ref,
                     wxe_f_ref, bxe_f_ref, wxe_b_ref, bxe_b_ref,
                     tok_ref, zxf_ref, zxb_ref):
    tile = tok_ref.shape[0]

    # one fused, lane-dense MXU call for all filter widths (K=48 -> N=128)
    y = jnp.dot(win_ref[...], convw_ref[...],
                preferred_element_type=jnp.float32)          # (tile*N_POS, 128)
    y = y.reshape(tile, N_POS, N_FILT)
    pooled = jnp.max(y, axis=1)                              # max-over-time
    # bias hoisted out of the position loop; max(., 0) is the ReLU
    feat = jnp.maximum(pooled + convb_ref[...], 0.0)         # (tile, 128) f32

    # one highway layer (128-wide, lane-dense)
    fb = feat.astype(MATMUL_DTYPE)
    h = jnp.maximum(
        jnp.dot(fb, hw_wh_ref[...], preferred_element_type=jnp.float32)
        + hw_bh_ref[...], 0.0)
    g = jax.nn.sigmoid(
        jnp.dot(fb, hw_wg_ref[...], preferred_element_type=jnp.float32)
        + hw_bg_ref[...])
    hw = g * h + (1.0 - g) * feat
    hwb = hw.astype(MATMUL_DTYPE)

    # token projection (needed for the scalar-mix layer-0 half)
    tok_ref[...] = (jnp.dot(hwb, proj_w_ref[...], preferred_element_type=jnp.float32)
                    + proj_b_ref[...]).astype(tok_ref.dtype)
    # LSTM input-to-hidden projections hoisted out of the recurrence
    # (proj_w already folded into wx_eff, so we stay 128-wide here)
    zxf_ref[...] = (jnp.dot(hwb, wxe_f_ref[...], preferred_element_type=jnp.float32)
                    + bxe_f_ref[...]).astype(zxf_ref.dtype)
    zxb_ref[...] = (jnp.dot(hwb, wxe_b_ref[...], preferred_element_type=jnp.float32)
                    + bxe_b_ref[...]).astype(zxb_ref.dtype)


def char_cnn(windows, p, n_pad, tile):
    def full(shape):
        return pl.BlockSpec(shape, lambda i: (0,) * len(shape))

    return pl.pallas_call(
        _char_cnn_kernel,
        out_shape=(jax.ShapeDtypeStruct((n_pad, TOK_DIM), jnp.float32),
                   jax.ShapeDtypeStruct((n_pad, G4), jnp.float32),
                   jax.ShapeDtypeStruct((n_pad, G4), jnp.float32)),
        grid=(n_pad // tile,),
        in_specs=[
            pl.BlockSpec((tile * N_POS, WIN_K), lambda i: (i, 0)),   # im2col windows
            full((WIN_K, N_FILT)), full((1, N_FILT)),                # fused conv w/b
            full((N_FILT, N_FILT)), full((1, N_FILT)),               # highway H
            full((N_FILT, N_FILT)), full((1, N_FILT)),               # highway gate
            full((N_FILT, TOK_DIM)), full((1, TOK_DIM)),             # token proj
            full((N_FILT, G4)), full((1, G4)),                       # folded wx fwd
            full((N_FILT, G4)), full((1, G4)),                       # folded wx bwd
        ],
        out_specs=(pl.BlockSpec((tile, TOK_DIM), lambda i: (i, 0)),
                   pl.BlockSpec((tile, G4), lambda i: (i, 0)),
                   pl.BlockSpec((tile, G4), lambda i: (i, 0))),
        compiler_params=pltpu.CompilerParams(
            dimension_semantics=("parallel",),
            vmem_limit_bytes=VMEM_LIMIT),
    )(windows,
      p["conv_w"], p["conv_b"],
      p["hw_wh"], p["hw_bh"], p["hw_wg"], p["hw_bg"],
      p["proj_w"], p["proj_b"],
      p["wx_eff_f"], p["bx_eff_f"], p["wx_eff_b"], p["bx_eff_b"])


# ---- kernel 2: chunked BiLSTM recurrence with fused scalar-mix epilogue ----
def _bilstm_mix_kernel(mix_ref, zx_ref, tok_ref, wh_ref, out_ref, h_s, c_s):
    chunk = zx_ref.shape[1]
    H = LSTM_H

    @pl.when(pl.program_id(1) == 0)           # new direction -> reset state
    def _():
        h_s[...] = jnp.zeros_like(h_s)
        c_s[...] = jnp.zeros_like(c_s)

    w0 = mix_ref[0, 0]
    w1 = mix_ref[0, 1]
    wh = wh_ref[0]                            # (H, 4H)

    def step(s, carry):
        h, c = carry
        # input projection precomputed; only the recurrent matmul is serial
        z = zx_ref[0, s] + jnp.dot(h, wh, preferred_element_type=jnp.float32)  # (B,4H)
        zs = jax.nn.sigmoid(z)                # full 128-lane EUP activations
        zt = jnp.tanh(z)
        i_g = zs[:, 0:H]
        f_g = zs[:, H:2 * H]
        g_g = zt[:, 2 * H:3 * H]
        o_g = zs[:, 3 * H:4 * H]
        c_new = f_g * c + i_g * g_g
        h_new = o_g * jnp.tanh(c_new)
        # fused scalar mix: this half of the ELMo representation is w0*tok + w1*h
        out_ref[0, s] = (w0 * tok_ref[0, s] + w1 * h_new).astype(out_ref.dtype)
        return h_new, c_new

    h_fin, c_fin = lax.fori_loop(0, chunk, step, (h_s[...], c_s[...]), unroll=True)
    h_s[...] = h_fin
    c_s[...] = c_fin


def bilstm_mix(zx_stacked, tok_stacked, wh_stacked, mix_w, chunk):
    _, t, b, _ = zx_stacked.shape
    return pl.pallas_call(
        _bilstm_mix_kernel,
        out_shape=jax.ShapeDtypeStruct((2, t, b, LSTM_H), jnp.float32),
        grid=(2, t // chunk),                 # (direction, time-chunk)
        in_specs=[
            pl.BlockSpec((1, 2), lambda d, c: (0, 0),
                         memory_space=pltpu.MemorySpace.SMEM),        # mix scalars
            pl.BlockSpec((1, chunk, b, G4), lambda d, c: (d, c, 0, 0)),
            pl.BlockSpec((1, chunk, b, LSTM_H), lambda d, c: (d, c, 0, 0)),
            pl.BlockSpec((1, LSTM_H, G4), lambda d, c: (d, 0, 0)),
        ],
        out_specs=pl.BlockSpec((1, chunk, b, LSTM_H), lambda d, c: (d, c, 0, 0)),
        scratch_shapes=[pltpu.VMEM((b, LSTM_H), jnp.float32),
                        pltpu.VMEM((b, LSTM_H), jnp.float32)],
        compiler_params=pltpu.CompilerParams(
            # direction axis "parallel": one LSTM direction per TensorCore on v7x
            dimension_semantics=("parallel", "arbitrary"),
            vmem_limit_bytes=VMEM_LIMIT),
    )(mix_w, zx_stacked, tok_stacked, wh_stacked)


# ---- parameter init (deterministic synthetic weights) ----------------------
def init_params(key):
    keys = jax.random.split(key, 24)

    def nrm(k, shape, scale=0.1):
        return scale * jax.random.normal(k, shape, jnp.float32)

    p = {}
    p["char_embed"] = nrm(keys[0], (CHAR_VOCAB, CHAR_DIM), 1.0)
    i = 1

    # per-width conv filters, zero-padded to width MAX_W and fused column-wise
    w_blocks, b_blocks = [], []
    for width, n_filt in FILTERS:
        w = nrm(keys[i], (width * CHAR_DIM, n_filt)); i += 1
        b = nrm(keys[i], (1, n_filt)); i += 1
        w_pad = jnp.zeros((WIN_K, n_filt), jnp.float32).at[: width * CHAR_DIM].set(w)
        w_blocks.append(w_pad)
        b_blocks.append(b)
    p["conv_w"] = jnp.concatenate(w_blocks, axis=1).astype(MATMUL_DTYPE)   # (48,128)
    p["conv_b"] = jnp.concatenate(b_blocks, axis=1)                        # (1,128)

    hw_wh = nrm(keys[i], (N_FILT, N_FILT)); i += 1
    hw_bh = nrm(keys[i], (1, N_FILT)); i += 1
    hw_wg = nrm(keys[i], (N_FILT, N_FILT)); i += 1
    hw_bg = nrm(keys[i], (1, N_FILT)); i += 1
    proj_w = nrm(keys[i], (N_FILT, TOK_DIM)); i += 1
    proj_b = nrm(keys[i], (1, TOK_DIM)); i += 1
    p["hw_wh"] = hw_wh.astype(MATMUL_DTYPE); p["hw_bh"] = hw_bh
    p["hw_wg"] = hw_wg.astype(MATMUL_DTYPE); p["hw_bg"] = hw_bg
    p["proj_w"] = proj_w.astype(MATMUL_DTYPE); p["proj_b"] = proj_b

    for d in ("f", "b"):
        wx = nrm(keys[i], (TOK_DIM, G4)); i += 1
        wh = nrm(keys[i], (LSTM_H, G4)); i += 1
        bx = nrm(keys[i], (1, G4)); i += 1
        # fold the token projection into the LSTM input weights:
        #   zx = tok @ wx + b = hw_rep @ (proj_w @ wx) + (proj_b @ wx + b)
        p[f"wx_eff_{d}"] = (proj_w @ wx).astype(MATMUL_DTYPE)    # (128, 128)
        p[f"bx_eff_{d}"] = proj_b @ wx + bx                      # (1, 128)
        p[f"wh_{d}"] = wh                                        # recurrence stays f32

    # scalar mix: gamma * softmax(s) over the 2 ELMo layers
    s = jax.random.normal(keys[i], (2,), jnp.float32)
    gamma = jnp.float32(1.0)
    p["mix_w"] = (gamma * jax.nn.softmax(s)).reshape(1, 2)
    return p


# ---- full forward: ELMoEmbedding.forward(batch_ids) ------------------------
def elmo_embedding_forward(batch_ids, params):
    """batch_ids: (batch, padded_length, 50) int32 ELMo character ids."""
    B, T, _ = batch_ids.shape
    N = B * T

    # character-id embedding lookup (gather) + im2col unfold -- plain-JAX glue
    ce = jnp.take(params["char_embed"], batch_ids.reshape(N, N_CHARS), axis=0)  # (N,50,16)
    wins = jnp.concatenate(
        [ce[:, j:j + N_POS, :] for j in range(MAX_W)], axis=-1)                 # (N,48,48)

    tile = min(128, _round_up(N, 8))
    n_pad = _round_up(N, tile)
    wins = jnp.pad(wins, ((0, n_pad - N), (0, 0), (0, 0)))
    wins = wins.reshape(n_pad * N_POS, WIN_K).astype(MATMUL_DTYPE)

    tok, zxf, zxb = char_cnn(wins, params, n_pad, tile)
    tok = tok[:N].reshape(B, T, TOK_DIM)
    zxf = zxf[:N].reshape(B, T, G4)
    zxb = zxb[:N].reshape(B, T, G4)

    # time-major; stack the two directions (dir 1 pre-reversed so the kernel
    # always walks forward and v7x can run one direction per TensorCore)
    tok_tm = jnp.transpose(tok, (1, 0, 2))                       # (T,B,H)
    zxf_tm = jnp.transpose(zxf, (1, 0, 2))                       # (T,B,4H)
    zxb_tm = jnp.transpose(zxb, (1, 0, 2))
    zx_st = jnp.stack([zxf_tm, jnp.flip(zxb_tm, axis=0)], axis=0)   # (2,T,B,4H)
    tok_st = jnp.stack([tok_tm, jnp.flip(tok_tm, axis=0)], axis=0)  # (2,T,B,H)
    wh_st = jnp.stack([params["wh_f"], params["wh_b"]], axis=0)     # (2,H,4H)

    chunk = _pick_chunk(T)
    mixed = bilstm_mix(zx_st, tok_st, wh_st, params["mix_w"], chunk)  # (2,T,B,H)

    mixed_f = mixed[0]                                           # fwd half, time order
    mixed_b = jnp.flip(mixed[1], axis=0)                         # bwd half, back to time order
    out = jnp.concatenate([mixed_f, mixed_b], axis=-1)           # (T,B,2H)
    return jnp.transpose(out, (1, 0, 2))                         # (B,T,2H)


if __name__ == "__main__":
    key = jax.random.PRNGKey(0)
    pkey, dkey = jax.random.split(key)
    params = init_params(pkey)

    B, T = 2, 8
    batch_ids = jax.random.randint(dkey, (B, T, N_CHARS), 0, CHAR_VOCAB, dtype=jnp.int32)

    out = jax.jit(elmo_embedding_forward)(batch_ids, params)
    jax.block_until_ready(out)

    assert out.shape == (B, T, ELMO_DIM), out.shape
    assert out.dtype == jnp.float32
    assert bool(jnp.all(jnp.isfinite(out)))
    print("KERNEL_OK")
</pallas_src>

<mosaic_0001>
module attributes {stable_mosaic.version = 11 : i64} {
  func.func @_char_cnn_kernel(%arg0: i32, %arg1: memref<768x48xbf16, #tpu.memory_space<vmem>>, %arg2: memref<48x128xbf16, #tpu.memory_space<vmem>>, %arg3: memref<1x128xf32, #tpu.memory_space<vmem>>, %arg4: memref<128x128xbf16, #tpu.memory_space<vmem>>, %arg5: memref<1x128xf32, #tpu.memory_space<vmem>>, %arg6: memref<128x128xbf16, #tpu.memory_space<vmem>>, %arg7: memref<1x128xf32, #tpu.memory_space<vmem>>, %arg8: memref<128x32xbf16, #tpu.memory_space<vmem>>, %arg9: memref<1x32xf32, #tpu.memory_space<vmem>>, %arg10: memref<128x128xbf16, #tpu.memory_space<vmem>>, %arg11: memref<1x128xf32, #tpu.memory_space<vmem>>, %arg12: memref<128x128xbf16, #tpu.memory_space<vmem>>, %arg13: memref<1x128xf32, #tpu.memory_space<vmem>>, %arg14: memref<16x32xf32, #tpu.memory_space<vmem>>, %arg15: memref<16x128xf32, #tpu.memory_space<vmem>>, %arg16: memref<16x128xf32, #tpu.memory_space<vmem>>) attributes {dimension_semantics = [#tpu.dimension_semantics<parallel>], iteration_bounds = array<i64: 1>, scalar_prefetch = 0 : i64, scratch_operands = 0 : i64, tpu.core_type = #tpu.core_type<tc>, window_params = [{transform_indices = @transform_0, window_bounds = array<i64: 768, 48>}, {pipeline_mode = #tpu.pipeline_mode<synchronous>, transform_indices = @transform_1, window_bounds = array<i64: 48, 128>}, {pipeline_mode = #tpu.pipeline_mode<synchronous>, transform_indices = @transform_2, window_bounds = array<i64: 1, 128>}, {pipeline_mode = #tpu.pipeline_mode<synchronous>, transform_indices = @transform_3, window_bounds = array<i64: 128, 128>}, {pipeline_mode = #tpu.pipeline_mode<synchronous>, transform_indices = @transform_4, window_bounds = array<i64: 1, 128>}, {pipeline_mode = #tpu.pipeline_mode<synchronous>, transform_indices = @transform_5, window_bounds = array<i64: 128, 128>}, {pipeline_mode = #tpu.pipeline_mode<synchronous>, transform_indices = @transform_6, window_bounds = array<i64: 1, 128>}, {pipeline_mode = #tpu.pipeline_mode<synchronous>, transform_indices = @transform_7, window_bounds = array<i64: 128, 32>}, {pipeline_mode = #tpu.pipeline_mode<synchronous>, transform_indices = @transform_8, window_bounds = array<i64: 1, 32>}, {pipeline_mode = #tpu.pipeline_mode<synchronous>, transform_indices = @transform_9, window_bounds = array<i64: 128, 128>}, {pipeline_mode = #tpu.pipeline_mode<synchronous>, transform_indices = @transform_10, window_bounds = array<i64: 1, 128>}, {pipeline_mode = #tpu.pipeline_mode<synchronous>, transform_indices = @transform_11, window_bounds = array<i64: 128, 128>}, {pipeline_mode = #tpu.pipeline_mode<synchronous>, transform_indices = @transform_12, window_bounds = array<i64: 1, 128>}, {transform_indices = @transform_13, window_bounds = array<i64: 16, 32>}, {transform_indices = @transform_14, window_bounds = array<i64: 16, 128>}, {transform_indices = @transform_15, window_bounds = array<i64: 16, 128>}]} {
    %c0 = arith.constant 0 : index
    %c0_0 = arith.constant 0 : index
    %0 = vector.load %arg1[%c0, %c0_0] : memref<768x48xbf16, #tpu.memory_space<vmem>>, vector<768x48xbf16>
    %c0_1 = arith.constant 0 : index
    %c0_2 = arith.constant 0 : index
    %1 = vector.load %arg2[%c0_1, %c0_2] : memref<48x128xbf16, #tpu.memory_space<vmem>>, vector<48x128xbf16>
    %cst = arith.constant dense<0.000000e+00> : vector<768x128xf32>
    %2 = tpu.matmul %0, %1, %cst {dimension_numbers = #tpu.dot_dimension_numbers<[1], [0], [0], [1], [0, 0, 1, 1], [], []>} : vector<768x48xbf16>, vector<48x128xbf16>, vector<768x128xf32> -> vector<768x128xf32>
    %3 = vector.shape_cast %2 : vector<768x128xf32> to vector<16x48x128xf32>
    %cst_3 = arith.constant dense<0xFF800000> : vector<16x128xf32>
    %4 = vector.multi_reduction <maximumf>, %3, %cst_3 [1] : vector<16x48x128xf32> to vector<16x128xf32>
    %c0_4 = arith.constant 0 : index
    %c0_5 = arith.constant 0 : index
    %5 = vector.load %arg3[%c0_4, %c0_5] : memref<1x128xf32, #tpu.memory_space<vmem>>, vector<1x128xf32>
    %6 = vector.broadcast %5 : vector<1x128xf32> to vector<16x128xf32>
    %7 = arith.addf %4, %6 : vector<16x128xf32>
    %cst_6 = arith.constant 0.000000e+00 : f32
    %8 = vector.broadcast %cst_6 : f32 to vector<16x128xf32>
    %9 = arith.maximumf %7, %8 : vector<16x128xf32>
    %10 = arith.truncf %9 : vector<16x128xf32> to vector<16x128xbf16>
    %c0_7 = arith.constant 0 : index
    %c0_8 = arith.constant 0 : index
    %11 = vector.load %arg4[%c0_7, %c0_8] : memref<128x128xbf16, #tpu.memory_space<vmem>>, vector<128x128xbf16>
    %cst_9 = arith.constant dense<0.000000e+00> : vector<16x128xf32>
    %12 = tpu.matmul %10, %11, %cst_9 {dimension_numbers = #tpu.dot_dimension_numbers<[1], [0], [0], [1], [0, 0, 1, 1], [], []>} : vector<16x128xbf16>, vector<128x128xbf16>, vector<16x128xf32> -> vector<16x128xf32>
    %c0_10 = arith.constant 0 : index
    %c0_11 = arith.constant 0 : index
    %13 = vector.load %arg5[%c0_10, %c0_11] : memref<1x128xf32, #tpu.memory_space<vmem>>, vector<1x128xf32>
    %14 = vector.broadcast %13 : vector<1x128xf32> to vector<16x128xf32>
    %15 = arith.addf %12, %14 : vector<16x128xf32>
    %cst_12 = arith.constant 0.000000e+00 : f32
    %16 = vector.broadcast %cst_12 : f32 to vector<16x128xf32>
    %17 = arith.maximumf %15, %16 : vector<16x128xf32>
    %c0_13 = arith.constant 0 : index
    %c0_14 = arith.constant 0 : index
    %18 = vector.load %arg6[%c0_13, %c0_14] : memref<128x128xbf16, #tpu.memory_space<vmem>>, vector<128x128xbf16>
    %cst_15 = arith.constant dense<0.000000e+00> : vector<16x128xf32>
    %19 = tpu.matmul %10, %18, %cst_15 {dimension_numbers = #tpu.dot_dimension_numbers<[1], [0], [0], [1], [0, 0, 1, 1], [], []>} : vector<16x128xbf16>, vector<128x128xbf16>, vector<16x128xf32> -> vector<16x128xf32>
    %c0_16 = arith.constant 0 : index
    %c0_17 = arith.constant 0 : index
    %20 = vector.load %arg7[%c0_16, %c0_17] : memref<1x128xf32, #tpu.memory_space<vmem>>, vector<1x128xf32>
    %21 = vector.broadcast %20 : vector<1x128xf32> to vector<16x128xf32>
    %22 = arith.addf %19, %21 : vector<16x128xf32>
    %23 = arith.negf %22 : vector<16x128xf32>
    %24 = math.exp %23 : vector<16x128xf32>
    %cst_18 = arith.constant 1.000000e+00 : f32
    %25 = vector.broadcast %cst_18 : f32 to vector<16x128xf32>
    %26 = arith.addf %25, %24 : vector<16x128xf32>
    %27 = arith.divf %25, %26 : vector<16x128xf32>
    %28 = arith.mulf %27, %17 : vector<16x128xf32>
    %cst_19 = arith.constant 1.000000e+00 : f32
    %29 = vector.broadcast %cst_19 : f32 to vector<16x128xf32>
    %30 = arith.subf %29, %27 : vector<16x128xf32>
    %31 = arith.mulf %30, %9 : vector<16x128xf32>
    %32 = arith.addf %28, %31 : vector<16x128xf32>
    %33 = arith.truncf %32 : vector<16x128xf32> to vector<16x128xbf16>
    %c0_20 = arith.constant 0 : index
    %c0_21 = arith.constant 0 : index
    %34 = vector.load %arg8[%c0_20, %c0_21] : memref<128x32xbf16, #tpu.memory_space<vmem>>, vector<128x32xbf16>
    %cst_22 = arith.constant dense<0.000000e+00> : vector<16x32xf32>
    %35 = tpu.matmul %33, %34, %cst_22 {dimension_numbers = #tpu.dot_dimension_numbers<[1], [0], [0], [1], [0, 0, 1, 1], [], []>} : vector<16x128xbf16>, vector<128x32xbf16>, vector<16x32xf32> -> vector<16x32xf32>
    %c0_23 = arith.constant 0 : index
    %c0_24 = arith.constant 0 : index
    %36 = vector.load %arg9[%c0_23, %c0_24] : memref<1x32xf32, #tpu.memory_space<vmem>>, vector<1x32xf32>
    %37 = vector.broadcast %36 : vector<1x32xf32> to vector<16x32xf32>
    %38 = arith.addf %35, %37 : vector<16x32xf32>
    %c0_25 = arith.constant 0 : index
    %c0_26 = arith.constant 0 : index
    %39 = vector.load %arg14[%c0_25, %c0_26] : memref<16x32xf32, #tpu.memory_space<vmem>>, vector<16x32xf32>
    tpu.vector_store %arg14[%c0_25, %c0_26], %38 {strides = array<i32>} : memref<16x32xf32, #tpu.memory_space<vmem>>, vector<16x32xf32>,
    %c0_27 = arith.constant 0 : index
    %c0_28 = arith.constant 0 : index
    %40 = vector.load %arg10[%c0_27, %c0_28] : memref<128x128xbf16, #tpu.memory_space<vmem>>, vector<128x128xbf16>
    %cst_29 = arith.constant dense<0.000000e+00> : vector<16x128xf32>
    %41 = tpu.matmul %33, %40, %cst_29 {dimension_numbers = #tpu.dot_dimension_numbers<[1], [0], [0], [1], [0, 0, 1, 1], [], []>} : vector<16x128xbf16>, vector<128x128xbf16>, vector<16x128xf32> -> vector<16x128xf32>
    %c0_30 = arith.constant 0 : index
    %c0_31 = arith.constant 0 : index
    %42 = vector.load %arg11[%c0_30, %c0_31] : memref<1x128xf32, #tpu.memory_space<vmem>>, vector<1x128xf32>
    %43 = vector.broadcast %42 : vector<1x128xf32> to vector<16x128xf32>
    %44 = arith.addf %41, %43 : vector<16x128xf32>
    %c0_32 = arith.constant 0 : index
    %c0_33 = arith.constant 0 : index
    %45 = vector.load %arg15[%c0_32, %c0_33] : memref<16x128xf32, #tpu.memory_space<vmem>>, vector<16x128xf32>
    tpu.vector_store %arg15[%c0_32, %c0_33], %44 {strides = array<i32>} : memref<16x128xf32, #tpu.memory_space<vmem>>, vector<16x128xf32>,
    %c0_34 = arith.constant 0 : index
    %c0_35 = arith.constant 0 : index
    %46 = vector.load %arg12[%c0_34, %c0_35] : memref<128x128xbf16, #tpu.memory_space<vmem>>, vector<128x128xbf16>
    %cst_36 = arith.constant dense<0.000000e+00> : vector<16x128xf32>
    %47 = tpu.matmul %33, %46, %cst_36 {dimension_numbers = #tpu.dot_dimension_numbers<[1], [0], [0], [1], [0, 0, 1, 1], [], []>} : vector<16x128xbf16>, vector<128x128xbf16>, vector<16x128xf32> -> vector<16x128xf32>
    %c0_37 = arith.constant 0 : index
    %c0_38 = arith.constant 0 : index
    %48 = vector.load %arg13[%c0_37, %c0_38] : memref<1x128xf32, #tpu.memory_space<vmem>>, vector<1x128xf32>
    %49 = vector.broadcast %48 : vector<1x128xf32> to vector<16x128xf32>
    %50 = arith.addf %47, %49 : vector<16x128xf32>
    %c0_39 = arith.constant 0 : index
    %c0_40 = arith.constant 0 : index
    %51 = vector.load %arg16[%c0_39, %c0_40] : memref<16x128xf32, #tpu.memory_space<vmem>>, vector<16x128xf32>
    tpu.vector_store %arg16[%c0_39, %c0_40], %50 {strides = array<i32>} : memref<16x128xf32, #tpu.memory_space<vmem>>, vector<16x128xf32>,
    return
  }
  func.func @transform_0(%arg0: i32) -> (i32, i32) {
    %c0_i32 = arith.constant 0 : i32
    %c0_i32_0 = arith.constant 0 : i32
    return %arg0, %c0_i32 : i32, i32
  }
  func.func @transform_1(%arg0: i32) -> (i32, i32) {
    %c0_i32 = arith.constant 0 : i32
    %c0_i32_0 = arith.constant 0 : i32
    %c0_i32_1 = arith.constant 0 : i32
    return %c0_i32, %c0_i32_0 : i32, i32
  }
  func.func @transform_2(%arg0: i32) -> (i32, i32) {
    %c0_i32 = arith.constant 0 : i32
    %c0_i32_0 = arith.constant 0 : i32
    %c0_i32_1 = arith.constant 0 : i32
    return %c0_i32, %c0_i32_0 : i32, i32
  }
  func.func @transform_3(%arg0: i32) -> (i32, i32) {
    %c0_i32 = arith.constant 0 : i32
    %c0_i32_0 = arith.constant 0 : i32
    %c0_i32_1 = arith.constant 0 : i32
    return %c0_i32, %c0_i32_0 : i32, i32
  }
  func.func @transform_4(%arg0: i32) -> (i32, i32) {
    %c0_i32 = arith.constant 0 : i32
    %c0_i32_0 = arith.constant 0 : i32
    %c0_i32_1 = arith.constant 0 : i32
    return %c0_i32, %c0_i32_0 : i32, i32
  }
  func.func @transform_5(%arg0: i32) -> (i32, i32) {
    %c0_i32 = arith.constant 0 : i32
    %c0_i32_0 = arith.constant 0 : i32
    %c0_i32_1 = arith.constant 0 : i32
    return %c0_i32, %c0_i32_0 : i32, i32
  }
  func.func @transform_6(%arg0: i32) -> (i32, i32) {
    %c0_i32 = arith.constant 0 : i32
    %c0_i32_0 = arith.constant 0 : i32
    %c0_i32_1 = arith.constant 0 : i32
    return %c0_i32, %c0_i32_0 : i32, i32
  }
  func.func @transform_7(%arg0: i32) -> (i32, i32) {
    %c0_i32 = arith.constant 0 : i32
    %c0_i32_0 = arith.constant 0 : i32
    %c0_i32_1 = arith.constant 0 : i32
    return %c0_i32, %c0_i32_0 : i32, i32
  }
  func.func @transform_8(%arg0: i32) -> (i32, i32) {
    %c0_i32 = arith.constant 0 : i32
    %c0_i32_0 = arith.constant 0 : i32
    %c0_i32_1 = arith.constant 0 : i32
    return %c0_i32, %c0_i32_0 : i32, i32
  }
  func.func @transform_9(%arg0: i32) -> (i32, i32) {
    %c0_i32 = arith.constant 0 : i32
    %c0_i32_0 = arith.constant 0 : i32
    %c0_i32_1 = arith.constant 0 : i32
    return %c0_i32, %c0_i32_0 : i32, i32
  }
  func.func @transform_10(%arg0: i32) -> (i32, i32) {
    %c0_i32 = arith.constant 0 : i32
    %c0_i32_0 = arith.constant 0 : i32
    %c0_i32_1 = arith.constant 0 : i32
    return %c0_i32, %c0_i32_0 : i32, i32
  }
  func.func @transform_11(%arg0: i32) -> (i32, i32) {
    %c0_i32 = arith.constant 0 : i32
    %c0_i32_0 = arith.constant 0 : i32
    %c0_i32_1 = arith.constant 0 : i32
    return %c0_i32, %c0_i32_0 : i32, i32
  }
  func.func @transform_12(%arg0: i32) -> (i32, i32) {
    %c0_i32 = arith.constant 0 : i32
    %c0_i32_0 = arith.constant 0 : i32
    %c0_i32_1 = arith.constant 0 : i32
    return %c0_i32, %c0_i32_0 : i32, i32
  }
  func.func @transform_13(%arg0: i32) -> (i32, i32) {
    %c0_i32 = arith.constant 0 : i32
    %c0_i32_0 = arith.constant 0 : i32
    return %arg0, %c0_i32 : i32, i32
  }
  func.func @transform_14(%arg0: i32) -> (i32, i32) {
    %c0_i32 = arith.constant 0 : i32
    %c0_i32_0 = arith.constant 0 : i32
    return %arg0, %c0_i32 : i32, i32
  }
  func.func @transform_15(%arg0: i32) -> (i32, i32) {
    %c0_i32 = arith.constant 0 : i32
    %c0_i32_0 = arith.constant 0 : i32
    return %arg0, %c0_i32 : i32, i32
  }
}

module attributes {stable_mosaic.version = 11 : i64} {
  func.func @_bilstm_mix_kernel(%arg0: i32, %arg1: i32, %arg2: memref<1x2xf32, #tpu.memory_space<smem>>, %arg3: memref<1x8x2x128xf32, #tpu.memory_space<vmem>>, %arg4: memref<1x8x2x32xf32, #tpu.memory_space<vmem>>, %arg5: memref<1x32x128xf32, #tpu.memory_space<vmem>>, %arg6: memref<1x8x2x32xf32, #tpu.memory_space<vmem>>, %arg7: memref<2x32xf32, #tpu.memory_space<vmem>>, %arg8: memref<2x32xf32, #tpu.memory_space<vmem>>) attributes {dimension_semantics = [#tpu.dimension_semantics<parallel>, #tpu.dimension_semantics<arbitrary>], iteration_bounds = array<i64: 2, 1>, scalar_prefetch = 0 : i64, scratch_operands = 2 : i64, tpu.core_type = #tpu.core_type<tc>, window_params = [{transform_indices = @transform_0, window_bounds = array<i64: 1, 2>}, {transform_indices = @transform_1, window_bounds = array<i64: 1, 8, 2, 128>}, {transform_indices = @transform_2, window_bounds = array<i64: 1, 8, 2, 32>}, {transform_indices = @transform_3, window_bounds = array<i64: 1, 32, 128>}, {transform_indices = @transform_4, window_bounds = array<i64: 1, 8, 2, 32>}]} {
    %c0_i32 = arith.constant 0 : i32
    %0 = arith.cmpi eq, %arg1, %c0_i32 : i32
    %1 = arith.extui %0 : i1 to i32
    %c0_i32_0 = arith.constant 0 : i32
    %2 = arith.cmpi ne, %1, %c0_i32_0 : i32
    scf.if %2 {
      %cst_102 = arith.constant 0.000000e+00 : f32
      %267 = vector.broadcast %cst_102 : f32 to vector<2x32xf32>
      %c0_103 = arith.constant 0 : index
      %c0_104 = arith.constant 0 : index
      %268 = vector.load %arg7[%c0_103, %c0_104] : memref<2x32xf32, #tpu.memory_space<vmem>>, vector<2x32xf32>
      tpu.vector_store %arg7[%c0_103, %c0_104], %267 {strides = array<i32>} : memref<2x32xf32, #tpu.memory_space<vmem>>, vector<2x32xf32>,
      %cst_105 = arith.constant 0.000000e+00 : f32
      %269 = vector.broadcast %cst_105 : f32 to vector<2x32xf32>
      %c0_106 = arith.constant 0 : index
      %c0_107 = arith.constant 0 : index
      %270 = vector.load %arg8[%c0_106, %c0_107] : memref<2x32xf32, #tpu.memory_space<vmem>>, vector<2x32xf32>
      tpu.vector_store %arg8[%c0_106, %c0_107], %269 {strides = array<i32>} : memref<2x32xf32, #tpu.memory_space<vmem>>, vector<2x32xf32>,
    } else {
    }
    %c0 = arith.constant 0 : index
    %c0_1 = arith.constant 0 : index
    %3 = memref.load %arg2[%c0, %c0_1] : memref<1x2xf32, #tpu.memory_space<smem>>
    %c0_2 = arith.constant 0 : index
    %c1 = arith.constant 1 : index
    %4 = memref.load %arg2[%c0_2, %c1] : memref<1x2xf32, #tpu.memory_space<smem>>
    %c0_3 = arith.constant 0 : index
    %c0_4 = arith.constant 0 : index
    %c0_5 = arith.constant 0 : index
    %5 = vector.load %arg5[%c0_3, %c0_4, %c0_5] : memref<1x32x128xf32, #tpu.memory_space<vmem>>, vector<1x32x128xf32>
    %6 = vector.shape_cast %5 : vector<1x32x128xf32> to vector<32x128xf32>
    %c0_6 = arith.constant 0 : index
    %c0_7 = arith.constant 0 : index
    %7 = vector.load %arg7[%c0_6, %c0_7] : memref<2x32xf32, #tpu.memory_space<vmem>>, vector<2x32xf32>
    %c0_8 = arith.constant 0 : index
    %c0_9 = arith.constant 0 : index
    %8 = vector.load %arg8[%c0_8, %c0_9] : memref<2x32xf32, #tpu.memory_space<vmem>>, vector<2x32xf32>
    %c0_i32_10 = arith.constant 0 : i32
    %c0_11 = arith.constant 0 : index
    %9 = arith.index_cast %c0_i32_10 : i32 to index
    %c0_12 = arith.constant 0 : index
    %c0_13 = arith.constant 0 : index
    %10 = vector.load %arg3[%c0_11, %9, %c0_12, %c0_13] : memref<1x8x2x128xf32, #tpu.memory_space<vmem>>, vector<1x1x2x128xf32>
    %11 = vector.shape_cast %10 : vector<1x1x2x128xf32> to vector<2x128xf32>
    %cst = arith.constant dense<0.000000e+00> : vector<2x128xf32>
    %12 = tpu.matmul %7, %6, %cst {dimension_numbers = #tpu.dot_dimension_numbers<[1], [0], [0], [1], [0, 0, 1, 1], [], []>} : vector<2x32xf32>, vector<32x128xf32>, vector<2x128xf32> -> vector<2x128xf32>
    %13 = arith.addf %11, %12 : vector<2x128xf32>
    %14 = arith.negf %13 : vector<2x128xf32>
    %15 = math.exp %14 : vector<2x128xf32>
    %cst_14 = arith.constant 1.000000e+00 : f32
    %16 = vector.broadcast %cst_14 : f32 to vector<2x128xf32>
    %17 = arith.addf %16, %15 : vector<2x128xf32>
    %18 = arith.divf %16, %17 : vector<2x128xf32>
    %19 = math.tanh %13 : vector<2x128xf32>
    %20 = vector.extract_strided_slice %18 {offsets = [0, 0], sizes = [2, 32], strides = [1, 1]} : vector<2x128xf32> to vector<2x32xf32>
    %21 = vector.extract_strided_slice %18 {offsets = [0, 32], sizes = [2, 32], strides = [1, 1]} : vector<2x128xf32> to vector<2x32xf32>
    %22 = vector.extract_strided_slice %19 {offsets = [0, 64], sizes = [2, 32], strides = [1, 1]} : vector<2x128xf32> to vector<2x32xf32>
    %23 = vector.extract_strided_slice %18 {offsets = [0, 96], sizes = [2, 32], strides = [1, 1]} : vector<2x128xf32> to vector<2x32xf32>
    %24 = arith.mulf %21, %8 : vector<2x32xf32>
    %25 = arith.mulf %20, %22 : vector<2x32xf32>
    %26 = arith.addf %24, %25 : vector<2x32xf32>
    %27 = math.tanh %26 : vector<2x32xf32>
    %28 = arith.mulf %23, %27 : vector<2x32xf32>
    %c0_15 = arith.constant 0 : index
    %29 = arith.index_cast %c0_i32_10 : i32 to index
    %c0_16 = arith.constant 0 : index
    %c0_17 = arith.constant 0 : index
    %30 = vector.load %arg4[%c0_15, %29, %c0_16, %c0_17] : memref<1x8x2x32xf32, #tpu.memory_space<vmem>>, vector<1x1x2x32xf32>
    %31 = vector.shape_cast %30 : vector<1x1x2x32xf32> to vector<2x32xf32>
    %32 = vector.broadcast %3 : f32 to vector<2x32xf32>
    %33 = arith.mulf %32, %31 : vector<2x32xf32>
    %34 = vector.broadcast %4 : f32 to vector<2x32xf32>
    %35 = arith.mulf %34, %28 : vector<2x32xf32>
    %36 = arith.addf %33, %35 : vector<2x32xf32>
    %c0_18 = arith.constant 0 : index
    %37 = arith.index_cast %c0_i32_10 : i32 to index
    %c0_19 = arith.constant 0 : index
    %c0_20 = arith.constant 0 : index
    %38 = vector.load %arg6[%c0_18, %37, %c0_19, %c0_20] : memref<1x8x2x32xf32, #tpu.memory_space<vmem>>, vector<1x1x2x32xf32>
    %39 = vector.shape_cast %38 : vector<1x1x2x32xf32> to vector<2x32xf32>
    %40 = vector.shape_cast %36 : vector<2x32xf32> to vector<1x1x2x32xf32>
    tpu.vector_store %arg6[%c0_18, %37, %c0_19, %c0_20], %40 {strides = array<i32>} : memref<1x8x2x32xf32, #tpu.memory_space<vmem>>, vector<1x1x2x32xf32>,
    %c1_i32 = arith.constant 1 : i32
    %c0_21 = arith.constant 0 : index
    %41 = arith.index_cast %c1_i32 : i32 to index
    %c0_22 = arith.constant 0 : index
    %c0_23 = arith.constant 0 : index
    %42 = vector.load %arg3[%c0_21, %41, %c0_22, %c0_23] : memref<1x8x2x128xf32, #tpu.memory_space<vmem>>, vector<1x1x2x128xf32>
    %43 = vector.shape_cast %42 : vector<1x1x2x128xf32> to vector<2x128xf32>
    %cst_24 = arith.constant dense<0.000000e+00> : vector<2x128xf32>
    %44 = tpu.matmul %28, %6, %cst_24 {dimension_numbers = #tpu.dot_dimension_numbers<[1], [0], [0], [1], [0, 0, 1, 1], [], []>} : vector<2x32xf32>, vector<32x128xf32>, vector<2x128xf32> -> vector<2x128xf32>
    %45 = arith.addf %43, %44 : vector<2x128xf32>
    %46 = arith.negf %45 : vector<2x128xf32>
    %47 = math.exp %46 : vector<2x128xf32>
    %cst_25 = arith.constant 1.000000e+00 : f32
    %48 = vector.broadcast %cst_25 : f32 to vector<2x128xf32>
    %49 = arith.addf %48, %47 : vector<2x128xf32>
    %50 = arith.divf %48, %49 : vector<2x128xf32>
    %51 = math.tanh %45 : vector<2x128xf32>
    %52 = vector.extract_strided_slice %50 {offsets = [0, 0], sizes = [2, 32], strides = [1, 1]} : vector<2x128xf32> to vector<2x32xf32>
    %53 = vector.extract_strided_slice %50 {offsets = [0, 32], sizes = [2, 32], strides = [1, 1]} : vector<2x128xf32> to vector<2x32xf32>
    %54 = vector.extract_strided_slice %51 {offsets = [0, 64], sizes = [2, 32], strides = [1, 1]} : vector<2x128xf32> to vector<2x32xf32>
    %55 = vector.extract_strided_slice %50 {offsets = [0, 96], sizes = [2, 32], strides = [1, 1]} : vector<2x128xf32> to vector<2x32xf32>
    %56 = arith.mulf %53, %26 : vector<2x32xf32>
    %57 = arith.mulf %52, %54 : vector<2x32xf32>
    %58 = arith.addf %56, %57 : vector<2x32xf32>
    %59 = math.tanh %58 : vector<2x32xf32>
    %60 = arith.mulf %55, %59 : vector<2x32xf32>
    %c0_26 = arith.constant 0 : index
    %61 = arith.index_cast %c1_i32 : i32 to index
    %c0_27 = arith.constant 0 : index
    %c0_28 = arith.constant 0 : index
    %62 = vector.load %arg4[%c0_26, %61, %c0_27, %c0_28] : memref<1x8x2x32xf32, #tpu.memory_space<vmem>>, vector<1x1x2x32xf32>
    %63 = vector.shape_cast %62 : vector<1x1x2x32xf32> to vector<2x32xf32>
    %64 = vector.broadcast %3 : f32 to vector<2x32xf32>
    %65 = arith.mulf %64, %63 : vector<2x32xf32>
    %66 = vector.broadcast %4 : f32 to vector<2x32xf32>
    %67 = arith.mulf %66, %60 : vector<2x32xf32>
    %68 = arith.addf %65, %67 : vector<2x32xf32>
    %c0_29 = arith.constant 0 : index
    %69 = arith.index_cast %c1_i32 : i32 to index
    %c0_30 = arith.constant 0 : index
    %c0_31 = arith.constant 0 : index
    %70 = vector.load %arg6[%c0_29, %69, %c0_30, %c0_31] : memref<1x8x2x32xf32, #tpu.memory_space<vmem>>, vector<1x1x2x32xf32>
    %71 = vector.shape_cast %70 : vector<1x1x2x32xf32> to vector<2x32xf32>
    %72 = vector.shape_cast %68 : vector<2x32xf32> to vector<1x1x2x32xf32>
    tpu.vector_store %arg6[%c0_29, %69, %c0_30, %c0_31], %72 {strides = array<i32>} : memref<1x8x2x32xf32, #tpu.memory_space<vmem>>, vector<1x1x2x32xf32>,
    %c2_i32 = arith.constant 2 : i32
    %c0_32 = arith.constant 0 : index
    %73 = arith.index_cast %c2_i32 : i32 to index
    %c0_33 = arith.constant 0 : index
    %c0_34 = arith.constant 0 : index
    %74 = vector.load %arg3[%c0_32, %73, %c0_33, %c0_34] : memref<1x8x2x128xf32, #tpu.memory_space<vmem>>, vector<1x1x2x128xf32>
    %75 = vector.shape_cast %74 : vector<1x1x2x128xf32> to vector<2x128xf32>
    %cst_35 = arith.constant dense<0.000000e+00> : vector<2x128xf32>
    %76 = tpu.matmul %60, %6, %cst_35 {dimension_numbers = #tpu.dot_dimension_numbers<[1], [0], [0], [1], [0, 0, 1, 1], [], []>} : vector<2x32xf32>, vector<32x128xf32>, vector<2x128xf32> -> vector<2x128xf32>
    %77 = arith.addf %75, %76 : vector<2x128xf32>
    %78 = arith.negf %77 : vector<2x128xf32>
    %79 = math.exp %78 : vector<2x128xf32>
    %cst_36 = arith.constant 1.000000e+00 : f32
    %80 = vector.broadcast %cst_36 : f32 to vector<2x128xf32>
    %81 = arith.addf %80, %79 : vector<2x128xf32>
    %82 = arith.divf %80, %81 : vector<2x128xf32>
    %83 = math.tanh %77 : vector<2x128xf32>
    %84 = vector.extract_strided_slice %82 {offsets = [0, 0], sizes = [2, 32], strides = [1, 1]} : vector<2x128xf32> to vector<2x32xf32>
    %85 = vector.extract_strided_slice %82 {offsets = [0, 32], sizes = [2, 32], strides = [1, 1]} : vector<2x128xf32> to vector<2x32xf32>
    %86 = vector.extract_strided_slice %83 {offsets = [0, 64], sizes = [2, 32], strides = [1, 1]} : vector<2x128xf32> to vector<2x32xf32>
    %87 = vector.extract_strided_slice %82 {offsets = [0, 96], sizes = [2, 32], strides = [1, 1]} : vector<2x128xf32> to vector<2x32xf32>
    %88 = arith.mulf %85, %58 : vector<2x32xf32>
    %89 = arith.mulf %84, %86 : vector<2x32xf32>
    %90 = arith.addf %88, %89 : vector<2x32xf32>
    %91 = math.tanh %90 : vector<2x32xf32>
    %92 = arith.mulf %87, %91 : vector<2x32xf32>
    %c0_37 = arith.constant 0 : index
    %93 = arith.index_cast %c2_i32 : i32 to index
    %c0_38 = arith.constant 0 : index
    %c0_39 = arith.constant 0 : index
    %94 = vector.load %arg4[%c0_37, %93, %c0_38, %c0_39] : memref<1x8x2x32xf32, #tpu.memory_space<vmem>>, vector<1x1x2x32xf32>
    %95 = vector.shape_cast %94 : vector<1x1x2x32xf32> to vector<2x32xf32>
    %96 = vector.broadcast %3 : f32 to vector<2x32xf32>
    %97 = arith.mulf %96, %95 : vector<2x32xf32>
    %98 = vector.broadcast %4 : f32 to vector<2x32xf32>
    %99 = arith.mulf %98, %92 : vector<2x32xf32>
    %100 = arith.addf %97, %99 : vector<2x32xf32>
    %c0_40 = arith.constant 0 : index
    %101 = arith.index_cast %c2_i32 : i32 to index
    %c0_41 = arith.constant 0 : index
    %c0_42 = arith.constant 0 : index
    %102 = vector.load %arg6[%c0_40, %101, %c0_41, %c0_42] : memref<1x8x2x32xf32, #tpu.memory_space<vmem>>, vector<1x1x2x32xf32>
    %103 = vector.shape_cast %102 : vector<1x1x2x32xf32> to vector<2x32xf32>
    %104 = vector.shape_cast %100 : vector<2x32xf32> to vector<1x1x2x32xf32>
    tpu.vector_store %arg6[%c0_40, %101, %c0_41, %c0_42], %104 {strides = array<i32>} : memref<1x8x2x32xf32, #tpu.memory_space<vmem>>, vector<1x1x2x32xf32>,
    %c3_i32 = arith.constant 3 : i32
    %c0_43 = arith.constant 0 : index
    %105 = arith.index_cast %c3_i32 : i32 to index
    %c0_44 = arith.constant 0 : index
    %c0_45 = arith.constant 0 : index
    %106 = vector.load %arg3[%c0_43, %105, %c0_44, %c0_45] : memref<1x8x2x128xf32, #tpu.memory_space<vmem>>, vector<1x1x2x128xf32>
    %107 = vector.shape_cast %106 : vector<1x1x2x128xf32> to vector<2x128xf32>
    %cst_46 = arith.constant dense<0.000000e+00> : vector<2x128xf32>
    %108 = tpu.matmul %92, %6, %cst_46 {dimension_numbers = #tpu.dot_dimension_numbers<[1], [0], [0], [1], [0, 0, 1, 1], [], []>} : vector<2x32xf32>, vector<32x128xf32>, vector<2x128xf32> -> vector<2x128xf32>
    %109 = arith.addf %107, %108 : vector<2x128xf32>
    %110 = arith.negf %109 : vector<2x128xf32>
    %111 = math.exp %110 : vector<2x128xf32>
    %cst_47 = arith.constant 1.000000e+00 : f32
    %112 = vector.broadcast %cst_47 : f32 to vector<2x128xf32>
    %113 = arith.addf %112, %111 : vector<2x128xf32>
    %114 = arith.divf %112, %113 : vector<2x128xf32>
    %115 = math.tanh %109 : vector<2x128xf32>
    %116 = vector.extract_strided_slice %114 {offsets = [0, 0], sizes = [2, 32], strides = [1, 1]} : vector<2x128xf32> to vector<2x32xf32>
    %117 = vector.extract_strided_slice %114 {offsets = [0, 32], sizes = [2, 32], strides = [1, 1]} : vector<2x128xf32> to vector<2x32xf32>
    %118 = vector.extract_strided_slice %115 {offsets = [0, 64], sizes = [2, 32], strides = [1, 1]} : vector<2x128xf32> to vector<2x32xf32>
    %119 = vector.extract_strided_slice %114 {offsets = [0, 96], sizes = [2, 32], strides = [1, 1]} : vector<2x128xf32> to vector<2x32xf32>
    %120 = arith.mulf %117, %90 : vector<2x32xf32>
    %121 = arith.mulf %116, %118 : vector<2x32xf32>
    %122 = arith.addf %120, %121 : vector<2x32xf32>
    %123 = math.tanh %122 : vector<2x32xf32>
    %124 = arith.mulf %119, %123 : vector<2x32xf32>
    %c0_48 = arith.constant 0 : index
    %125 = arith.index_cast %c3_i32 : i32 to index
    %c0_49 = arith.constant 0 : index
    %c0_50 = arith.constant 0 : index
    %126 = vector.load %arg4[%c0_48, %125, %c0_49, %c0_50] : memref<1x8x2x32xf32, #tpu.memory_space<vmem>>, vector<1x1x2x32xf32>
    %127 = vector.shape_cast %126 : vector<1x1x2x32xf32> to vector<2x32xf32>
    %128 = vector.broadcast %3 : f32 to vector<2x32xf32>
    %129 = arith.mulf %128, %127 : vector<2x32xf32>
    %130 = vector.broadcast %4 : f32 to vector<2x32xf32>
    %131 = arith.mulf %130, %124 : vector<2x32xf32>
    %132 = arith.addf %129, %131 : vector<2x32xf32>
    %c0_51 = arith.constant 0 : index
    %133 = arith.index_cast %c3_i32 : i32 to index
    %c0_52 = arith.constant 0 : index
    %c0_53 = arith.constant 0 : index
    %134 = vector.load %arg6[%c0_51, %133, %c0_52, %c0_53] : memref<1x8x2x32xf32, #tpu.memory_space<vmem>>, vector<1x1x2x32xf32>
    %135 = vector.shape_cast %134 : vector<1x1x2x32xf32> to vector<2x32xf32>
    %136 = vector.shape_cast %132 : vector<2x32xf32> to vector<1x1x2x32xf32>
    tpu.vector_store %arg6[%c0_51, %133, %c0_52, %c0_53], %136 {strides = array<i32>} : memref<1x8x2x32xf32, #tpu.memory_space<vmem>>, vector<1x1x2x32xf32>,
    %c4_i32 = arith.constant 4 : i32
    %c0_54 = arith.constant 0 : index
    %137 = arith.index_cast %c4_i32 : i32 to index
    %c0_55 = arith.constant 0 : index
    %c0_56 = arith.constant 0 : index
    %138 = vector.load %arg3[%c0_54, %137, %c0_55, %c0_56] : memref<1x8x2x128xf32, #tpu.memory_space<vmem>>, vector<1x1x2x128xf32>
    %139 = vector.shape_cast %138 : vector<1x1x2x128xf32> to vector<2x128xf32>
    %cst_57 = arith.constant dense<0.000000e+00> : vector<2x128xf32>
    %140 = tpu.matmul %124, %6, %cst_57 {dimension_numbers = #tpu.dot_dimension_numbers<[1], [0], [0], [1], [0, 0, 1, 1], [], []>} : vector<2x32xf32>, vector<32x128xf32>, vector<2x128xf32> -> vector<2x128xf32>
    %141 = arith.addf %139, %140 : vector<2x128xf32>
    %142 = arith.negf %141 : vector<2x128xf32>
    %143 = math.exp %142 : vector<2x128xf32>
    %cst_58 = arith.constant 1.000000e+00 : f32
    %144 = vector.broadcast %cst_58 : f32 to vector<2x128xf32>
    %145 = arith.addf %144, %143 : vector<2x128xf32>
    %146 = arith.divf %144, %145 : vector<2x128xf32>
    %147 = math.tanh %141 : vector<2x128xf32>
    %148 = vector.extract_strided_slice %146 {offsets = [0, 0], sizes = [2, 32], strides = [1, 1]} : vector<2x128xf32> to vector<2x32xf32>
    %149 = vector.extract_strided_slice %146 {offsets = [0, 32], sizes = [2, 32], strides = [1, 1]} : vector<2x128xf32> to vector<2x32xf32>
    %150 = vector.extract_strided_slice %147 {offsets = [0, 64], sizes = [2, 32], strides = [1, 1]} : vector<2x128xf32> to vector<2x32xf32>
    %151 = vector.extract_strided_slice %146 {offsets = [0, 96], sizes = [2, 32], strides = [1, 1]} : vector<2x128xf32> to vector<2x32xf32>
    %152 = arith.mulf %149, %122 : vector<2x32xf32>
    %153 = arith.mulf %148, %150 : vector<2x32xf32>
    %154 = arith.addf %152, %153 : vector<2x32xf32>
    %155 = math.tanh %154 : vector<2x32xf32>
    %156 = arith.mulf %151, %155 : vector<2x32xf32>
    %c0_59 = arith.constant 0 : index
    %157 = arith.index_cast %c4_i32 : i32 to index
    %c0_60 = arith.constant 0 : index
    %c0_61 = arith.constant 0 : index
    %158 = vector.load %arg4[%c0_59, %157, %c0_60, %c0_61] : memref<1x8x2x32xf32, #tpu.memory_space<vmem>>, vector<1x1x2x32xf32>
    %159 = vector.shape_cast %158 : vector<1x1x2x32xf32> to vector<2x32xf32>
    %160 = vector.broadcast %3 : f32 to vector<2x32xf32>
    %161 = arith.mulf %160, %159 : vector<2x32xf32>
    %162 = vector.broadcast %4 : f32 to vector<2x32xf32>
    %163 = arith.mulf %162, %156 : vector<2x32xf32>
    %164 = arith.addf %161, %163 : vector<2x32xf32>
    %c0_62 = arith.constant 0 : index
    %165 = arith.index_cast %c4_i32 : i32 to index
    %c0_63 = arith.constant 0 : index
    %c0_64 = arith.constant 0 : index
    %166 = vector.load %arg6[%c0_62, %165, %c0_63, %c0_64] : memref<1x8x2x32xf32, #tpu.memory_space<vmem>>, vector<1x1x2x32xf32>
    %167 = vector.shape_cast %166 : vector<1x1x2x32xf32> to vector<2x32xf32>
    %168 = vector.shape_cast %164 : vector<2x32xf32> to vector<1x1x2x32xf32>
    tpu.vector_store %arg6[%c0_62, %165, %c0_63, %c0_64], %168 {strides = array<i32>} : memref<1x8x2x32xf32, #tpu.memory_space<vmem>>, vector<1x1x2x32xf32>,
    %c5_i32 = arith.constant 5 : i32
    %c0_65 = arith.constant 0 : index
    %169 = arith.index_cast %c5_i32 : i32 to index
    %c0_66 = arith.constant 0 : index
    %c0_67 = arith.constant 0 : index
    %170 = vector.load %arg3[%c0_65, %169, %c0_66, %c0_67] : memref<1x8x2x128xf32, #tpu.memory_space<vmem>>, vector<1x1x2x128xf32>
    %171 = vector.shape_cast %170 : vector<1x1x2x128xf32> to vector<2x128xf32>
    %cst_68 = arith.constant dense<0.000000e+00> : vector<2x128xf32>
    %172 = tpu.matmul %156, %6, %cst_68 {dimension_numbers = #tpu.dot_dimension_numbers<[1], [0], [0], [1], [0, 0, 1, 1], [], []>} : vector<2x32xf32>, vector<32x128xf32>, vector<2x128xf32> -> vector<2x128xf32>
    %173 = arith.addf %171, %172 : vector<2x128xf32>
    %174 = arith.negf %173 : vector<2x128xf32>
    %175 = math.exp %174 : vector<2x128xf32>
    %cst_69 = arith.constant 1.000000e+00 : f32
    %176 = vector.broadcast %cst_69 : f32 to vector<2x128xf32>
    %177 = arith.addf %176, %175 : vector<2x128xf32>
    %178 = arith.divf %176, %177 : vector<2x128xf32>
    %179 = math.tanh %173 : vector<2x128xf32>
    %180 = vector.extract_strided_slice %178 {offsets = [0, 0], sizes = [2, 32], strides = [1, 1]} : vector<2x128xf32> to vector<2x32xf32>
    %181 = vector.extract_strided_slice %178 {offsets = [0, 32], sizes = [2, 32], strides = [1, 1]} : vector<2x128xf32> to vector<2x32xf32>
    %182 = vector.extract_strided_slice %179 {offsets = [0, 64], sizes = [2, 32], strides = [1, 1]} : vector<2x128xf32> to vector<2x32xf32>
    %183 = vector.extract_strided_slice %178 {offsets = [0, 96], sizes = [2, 32], strides = [1, 1]} : vector<2x128xf32> to vector<2x32xf32>
    %184 = arith.mulf %181, %154 : vector<2x32xf32>
    %185 = arith.mulf %180, %182 : vector<2x32xf32>
    %186 = arith.addf %184, %185 : vector<2x32xf32>
    %187 = math.tanh %186 : vector<2x32xf32>
    %188 = arith.mulf %183, %187 : vector<2x32xf32>
    %c0_70 = arith.constant 0 : index
    %189 = arith.index_cast %c5_i32 : i32 to index
    %c0_71 = arith.constant 0 : index
    %c0_72 = arith.constant 0 : index
    %190 = vector.load %arg4[%c0_70, %189, %c0_71, %c0_72] : memref<1x8x2x32xf32, #tpu.memory_space<vmem>>, vector<1x1x2x32xf32>
    %191 = vector.shape_cast %190 : vector<1x1x2x32xf32> to vector<2x32xf32>
    %192 = vector.broadcast %3 : f32 to vector<2x32xf32>
    %193 = arith.mulf %192, %191 : vector<2x32xf32>
    %194 = vector.broadcast %4 : f32 to vector<2x32xf32>
    %195 = arith.mulf %194, %188 : vector<2x32xf32>
    %196 = arith.addf %193, %195 : vector<2x32xf32>
    %c0_73 = arith.constant 0 : index
    %197 = arith.index_cast %c5_i32 : i32 to index
    %c0_74 = arith.constant 0 : index
    %c0_75 = arith.constant 0 : index
    %198 = vector.load %arg6[%c0_73, %197, %c0_74, %c0_75] : memref<1x8x2x32xf32, #tpu.memory_space<vmem>>, vector<1x1x2x32xf32>
    %199 = vector.shape_cast %198 : vector<1x1x2x32xf32> to vector<2x32xf32>
    %200 = vector.shape_cast %196 : vector<2x32xf32> to vector<1x1x2x32xf32>
    tpu.vector_store %arg6[%c0_73, %197, %c0_74, %c0_75], %200 {strides = array<i32>} : memref<1x8x2x32xf32, #tpu.memory_space<vmem>>, vector<1x1x2x32xf32>,
    %c6_i32 = arith.constant 6 : i32
    %c0_76 = arith.constant 0 : index
    %201 = arith.index_cast %c6_i32 : i32 to index
    %c0_77 = arith.constant 0 : index
    %c0_78 = arith.constant 0 : index
    %202 = vector.load %arg3[%c0_76, %201, %c0_77, %c0_78] : memref<1x8x2x128xf32, #tpu.memory_space<vmem>>, vector<1x1x2x128xf32>
    %203 = vector.shape_cast %202 : vector<1x1x2x128xf32> to vector<2x128xf32>
    %cst_79 = arith.constant dense<0.000000e+00> : vector<2x128xf32>
    %204 = tpu.matmul %188, %6, %cst_79 {dimension_numbers = #tpu.dot_dimension_numbers<[1], [0], [0], [1], [0, 0, 1, 1], [], []>} : vector<2x32xf32>, vector<32x128xf32>, vector<2x128xf32> -> vector<2x128xf32>
    %205 = arith.addf %203, %204 : vector<2x128xf32>
    %206 = arith.negf %205 : vector<2x128xf32>
    %207 = math.exp %206 : vector<2x128xf32>
    %cst_80 = arith.constant 1.000000e+00 : f32
    %208 = vector.broadcast %cst_80 : f32 to vector<2x128xf32>
    %209 = arith.addf %208, %207 : vector<2x128xf32>
    %210 = arith.divf %208, %209 : vector<2x128xf32>
    %211 = math.tanh %205 : vector<2x128xf32>
    %212 = vector.extract_strided_slice %210 {offsets = [0, 0], sizes = [2, 32], strides = [1, 1]} : vector<2x128xf32> to vector<2x32xf32>
    %213 = vector.extract_strided_slice %210 {offsets = [0, 32], sizes = [2, 32], strides = [1, 1]} : vector<2x128xf32> to vector<2x32xf32>
    %214 = vector.extract_strided_slice %211 {offsets = [0, 64], sizes = [2, 32], strides = [1, 1]} : vector<2x128xf32> to vector<2x32xf32>
    %215 = vector.extract_strided_slice %210 {offsets = [0, 96], sizes = [2, 32], strides = [1, 1]} : vector<2x128xf32> to vector<2x32xf32>
    %216 = arith.mulf %213, %186 : vector<2x32xf32>
    %217 = arith.mulf %212, %214 : vector<2x32xf32>
    %218 = arith.addf %216, %217 : vector<2x32xf32>
    %219 = math.tanh %218 : vector<2x32xf32>
    %220 = arith.mulf %215, %219 : vector<2x32xf32>
    %c0_81 = arith.constant 0 : index
    %221 = arith.index_cast %c6_i32 : i32 to index
    %c0_82 = arith.constant 0 : index
    %c0_83 = arith.constant 0 : index
    %222 = vector.load %arg4[%c0_81, %221, %c0_82, %c0_83] : memref<1x8x2x32xf32, #tpu.memory_space<vmem>>, vector<1x1x2x32xf32>
    %223 = vector.shape_cast %222 : vector<1x1x2x32xf32> to vector<2x32xf32>
    %224 = vector.broadcast %3 : f32 to vector<2x32xf32>
    %225 = arith.mulf %224, %223 : vector<2x32xf32>
    %226 = vector.broadcast %4 : f32 to vector<2x32xf32>
    %227 = arith.mulf %226, %220 : vector<2x32xf32>
    %228 = arith.addf %225, %227 : vector<2x32xf32>
    %c0_84 = arith.constant 0 : index
    %229 = arith.index_cast %c6_i32 : i32 to index
    %c0_85 = arith.constant 0 : index
    %c0_86 = arith.constant 0 : index
    %230 = vector.load %arg6[%c0_84, %229, %c0_85, %c0_86] : memref<1x8x2x32xf32, #tpu.memory_space<vmem>>, vector<1x1x2x32xf32>
    %231 = vector.shape_cast %230 : vector<1x1x2x32xf32> to vector<2x32xf32>
    %232 = vector.shape_cast %228 : vector<2x32xf32> to vector<1x1x2x32xf32>
    tpu.vector_store %arg6[%c0_84, %229, %c0_85, %c0_86], %232 {strides = array<i32>} : memref<1x8x2x32xf32, #tpu.memory_space<vmem>>, vector<1x1x2x32xf32>,
    %c7_i32 = arith.constant 7 : i32
    %c0_87 = arith.constant 0 : index
    %233 = arith.index_cast %c7_i32 : i32 to index
    %c0_88 = arith.constant 0 : index
    %c0_89 = arith.constant 0 : index
    %234 = vector.load %arg3[%c0_87, %233, %c0_88, %c0_89] : memref<1x8x2x128xf32, #tpu.memory_space<vmem>>, vector<1x1x2x128xf32>
    %235 = vector.shape_cast %234 : vector<1x1x2x128xf32> to vector<2x128xf32>
    %cst_90 = arith.constant dense<0.000000e+00> : vector<2x128xf32>
    %236 = tpu.matmul %220, %6, %cst_90 {dimension_numbers = #tpu.dot_dimension_numbers<[1], [0], [0], [1], [0, 0, 1, 1], [], []>} : vector<2x32xf32>, vector<32x128xf32>, vector<2x128xf32> -> vector<2x128xf32>
    %237 = arith.addf %235, %236 : vector<2x128xf32>
    %238 = arith.negf %237 : vector<2x128xf32>
    %239 = math.exp %238 : vector<2x128xf32>
    %cst_91 = arith.constant 1.000000e+00 : f32
    %240 = vector.broadcast %cst_91 : f32 to vector<2x128xf32>
    %241 = arith.addf %240, %239 : vector<2x128xf32>
    %242 = arith.divf %240, %241 : vector<2x128xf32>
    %243 = math.tanh %237 : vector<2x128xf32>
    %244 = vector.extract_strided_slice %242 {offsets = [0, 0], sizes = [2, 32], strides = [1, 1]} : vector<2x128xf32> to vector<2x32xf32>
    %245 = vector.extract_strided_slice %242 {offsets = [0, 32], sizes = [2, 32], strides = [1, 1]} : vector<2x128xf32> to vector<2x32xf32>
    %246 = vector.extract_strided_slice %243 {offsets = [0, 64], sizes = [2, 32], strides = [1, 1]} : vector<2x128xf32> to vector<2x32xf32>
    %247 = vector.extract_strided_slice %242 {offsets = [0, 96], sizes = [2, 32], strides = [1, 1]} : vector<2x128xf32> to vector<2x32xf32>
    %248 = arith.mulf %245, %218 : vector<2x32xf32>
    %249 = arith.mulf %244, %246 : vector<2x32xf32>
    %250 = arith.addf %248, %249 : vector<2x32xf32>
    %251 = math.tanh %250 : vector<2x32xf32>
    %252 = arith.mulf %247, %251 : vector<2x32xf32>
    %c0_92 = arith.constant 0 : index
    %253 = arith.index_cast %c7_i32 : i32 to index
    %c0_93 = arith.constant 0 : index
    %c0_94 = arith.constant 0 : index
    %254 = vector.load %arg4[%c0_92, %253, %c0_93, %c0_94] : memref<1x8x2x32xf32, #tpu.memory_space<vmem>>, vector<1x1x2x32xf32>
    %255 = vector.shape_cast %254 : vector<1x1x2x32xf32> to vector<2x32xf32>
    %256 = vector.broadcast %3 : f32 to vector<2x32xf32>
    %257 = arith.mulf %256, %255 : vector<2x32xf32>
    %258 = vector.broadcast %4 : f32 to vector<2x32xf32>
    %259 = arith.mulf %258, %252 : vector<2x32xf32>
    %260 = arith.addf %257, %259 : vector<2x32xf32>
    %c0_95 = arith.constant 0 : index
    %261 = arith.index_cast %c7_i32 : i32 to index
    %c0_96 = arith.constant 0 : index
    %c0_97 = arith.constant 0 : index
    %262 = vector.load %arg6[%c0_95, %261, %c0_96, %c0_97] : memref<1x8x2x32xf32, #tpu.memory_space<vmem>>, vector<1x1x2x32xf32>
    %263 = vector.shape_cast %262 : vector<1x1x2x32xf32> to vector<2x32xf32>
    %264 = vector.shape_cast %260 : vector<2x32xf32> to vector<1x1x2x32xf32>
    tpu.vector_store %arg6[%c0_95, %261, %c0_96, %c0_97], %264 {strides = array<i32>} : memref<1x8x2x32xf32, #tpu.memory_space<vmem>>, vector<1x1x2x32xf32>,
    %c8_i32 = arith.constant 8 : i32
    %c0_98 = arith.constant 0 : index
    %c0_99 = arith.constant 0 : index
    %265 = vector.load %arg7[%c0_98, %c0_99] : memref<2x32xf32, #tpu.memory_space<vmem>>, vector<2x32xf32>
    tpu.vector_store %arg7[%c0_98, %c0_99], %252 {strides = array<i32>} : memref<2x32xf32, #tpu.memory_space<vmem>>, vector<2x32xf32>,
    %c0_100 = arith.constant 0 : index
    %c0_101 = arith.constant 0 : index
    %266 = vector.load %arg8[%c0_100, %c0_101] : memref<2x32xf32, #tpu.memory_space<vmem>>, vector<2x32xf32>
    tpu.vector_store %arg8[%c0_100, %c0_101], %250 {strides = array<i32>} : memref<2x32xf32, #tpu.memory_space<vmem>>, vector<2x32xf32>,
    return
  }
  func.func @transform_0(%arg0: i32, %arg1: i32) -> (i32, i32) {
    %c0_i32 = arith.constant 0 : i32
    %c0_i32_0 = arith.constant 0 : i32
    %c0_i32_1 = arith.constant 0 : i32
    return %c0_i32, %c0_i32_0 : i32, i32
  }
  func.func @transform_1(%arg0: i32, %arg1: i32) -> (i32, i32, i32, i32) {
    %c0_i32 = arith.constant 0 : i32
    %c0_i32_0 = arith.constant 0 : i32
    %c0_i32_1 = arith.constant 0 : i32
    return %arg0, %arg1, %c0_i32, %c0_i32_0 : i32, i32, i32, i32
  }
  func.func @transform_2(%arg0: i32, %arg1: i32) -> (i32, i32, i32, i32) {
    %c0_i32 = arith.constant 0 : i32
    %c0_i32_0 = arith.constant 0 : i32
    %c0_i32_1 = arith.constant 0 : i32
    return %arg0, %arg1, %c0_i32, %c0_i32_0 : i32, i32, i32, i32
  }
  func.func @transform_3(%arg0: i32, %arg1: i32) -> (i32, i32, i32) {
    %c0_i32 = arith.constant 0 : i32
    %c0_i32_0 = arith.constant 0 : i32
    %c0_i32_1 = arith.constant 0 : i32
    return %arg0, %c0_i32, %c0_i32_0 : i32, i32, i32
  }
  func.func @transform_4(%arg0: i32, %arg1: i32) -> (i32, i32, i32, i32) {
    %c0_i32 = arith.constant 0 : i32
    %c0_i32_0 = arith.constant 0 : i32
    %c0_i32_1 = arith.constant 0 : i32
    return %arg0, %arg1, %c0_i32, %c0_i32_0 : i32, i32, i32, i32
  }
}

</mosaic_0001>

<llo_original>
// kernel: elmo_embedding_forward.3
$region0: #{elmo_embedding_forward.3}
  #allocation0 [shape = 'u32[]', space=smem, size = 0x4, offset = 0x4, fixed_abs, tag = 'smem constant byte address 0x4 - core index']
  #allocation1 [shape = 'u32[144,128]{1,0:T(1,128)}', space=vmem, size = 0x12000, scoped, tag = 'internal scratch']
  #allocation2 [shape = 'f32[2,32]{1,0:T(2,128)}', space=vmem, size = 0x400, scoped, tag = 'scratch operand']
  #allocation3 [shape = 'f32[2,32]{1,0:T(2,128)}', space=vmem, size = 0x400, scoped, tag = 'scratch operand']
  %s0 = inlined_call_operand.vmem [shape: f32[1,2], index: 0, kind: input, shape index: {}]
  %s1 = inlined_call_operand.vmem [shape: f32[2,8,2,128], index: 1, kind: input, shape index: {}]
  %s2 = inlined_call_operand.vmem [shape: f32[2,8,2,32], index: 2, kind: input, shape index: {}]
  %s3 = inlined_call_operand.vmem [shape: f32[2,32,128], index: 3, kind: input, shape index: {}]
  %s4 = inlined_call_operand.vmem [shape: f32[2,8,2,32], index: 4, kind: output, shape index: {}]
  %s5 = sld [smem:[#allocation0]]
  $region57: #{elmo_embedding_forward.3} parent=0
    _
  %s7 = ssub.s32 1, %s5
  %s8 = scalar_select 0, %s7, %s5
  $region1: #{elmo_embedding_forward.3} parent=0
    #allocation4 [shape = 'u8[512]{0}', space=smem, size = 0x200, scoped, tag = 'input window, operand 0, single buffered']
    #allocation5 [shape = 's32[2]{0}', space=sflag, size = 0x8, scoped, tag = 'scoped memory for elmo_embedding_forward.3']
    %9 = vsyncpa [#allocation5], 0
    loop: start=0, step=1, limit=4
    $region2: #{elmo_embedding_forward.3} parent=1 // loop_pre_header
      _
    $region3: #{elmo_embedding_forward.3} parent=1 // loop_header
      %s11 = sphi 0, %s15
      %p12 = scmp.ge.s32.totalorder %s11, 4
      %s18 = sphi 0, %s30
      %s19 = sphi 0, %s26
      %s20 = sphi 0, %s18
      %s21 = sphi 0, %s19
      %s22 = sphi 0, %s20
      %s23 = sphi 0, %s21
      %s31 = sphi 0, %s31
      %s33 = sphi 0, %s31
      %s34 = sphi 0, %s33
      %s48 = sphi 0, %s34
      %s56 = sphi 0, %s58
      %s59 = sphi 0, %s56
      %s60 = sphi 0, %s59
      %s76 = sphi 0, %s60
      %s84 = sphi 0, %s86
      %s87 = sphi 0, %s84
      %s88 = sphi 0, %s87
      %s104 = sphi 0, %s88
      %s110 = sphi 0, %s112
      %s113 = sphi 0, %s110
      %s114 = sphi 0, %s113
      %s130 = sphi 0, %s114
      %s138 = sphi 0, %s140
      %s141 = sphi 0, %s138
      %s142 = sphi 0, %s141
      %s158 = sphi 0, %s142
    $region4: #{elmo_embedding_forward.3} parent=1 // loop_header_branch
      %14 = sbr.rel (%p12) target = $region8
    $region5: #{elmo_embedding_forward.3} parent=1 // loop_body
      %s16 = ssub.s32 %s11, 1
      %s17 = ssub.s32 %s11, 2
      %s24 = sadd.s32 1, %s19
      %p25 = scmp.ge.s32.totalorder %s24, 1
      %s26 = scalar_select %p25, 0, %s24
      %s27 = sadd.s32 1, %s18
      %s28 = scalar_select %p25, %s27, %s18
      %p29 = scmp.ge.s32.totalorder %s28, 2
      %s30 = scalar_select %p29, 0, %s28
      %s32 = sadd.s32 %s31, 1
      %p35 = scmp.eq.s32.totalorder %s11, 1
      %p36 = scmp.ne.s32.totalorder %s31, %s33
      %p37 = scmp.eq.s32.totalorder %s11, 0
      %p38 = por %p36, %p37
      %p39 = scmp.ne.s32.totalorder %s31, %s33
      %p40 = scmp.eq.s32.totalorder %s16, 1
      %p41 = por %p39, %p40
      %p42 = scmp.ne.s32.totalorder %s33, %s34
      %p43 = scmp.eq.s32.totalorder %s16, 0
      %p44 = por %p42, %p43
      %p45 = scmp.ne.s32.totalorder %s33, %s34
      %p46 = scmp.eq.s32.totalorder %s17, 1
      %p47 = por %p45, %p46
      %p49 = scmp.ne.s32.totalorder %s34, %s48
      %p50 = scmp.eq.s32.totalorder %s17, 0
      %p51 = por %p49, %p50
      %s52 = ssub.s32 %s18, %s30
      %s53 = ssub.s32 %s19, %s26
      %s54 = sor.u32 %s52, %s53
      %p55 = scmp.eq.s32.totalorder %s54, 0
      %s57 = sadd.s32 %s56, 1
      %s58 = scalar_select %p55, %s56, %s57
      %p61 = pneg %p55
      %p62 = scmp.eq.s32.totalorder %s11, 1
      %p63 = por %p61, %p62
      %p64 = scmp.ne.s32.totalorder %s56, %s59
      %p65 = scmp.eq.s32.totalorder %s11, 0
      %p66 = por %p64, %p65
      %p67 = scmp.ne.s32.totalorder %s56, %s59
      %p68 = scmp.eq.s32.totalorder %s16, 1
      %p69 = por %p67, %p68
      %p70 = scmp.ne.s32.totalorder %s59, %s60
      %p71 = scmp.eq.s32.totalorder %s16, 0
      %p72 = por %p70, %p71
      %p73 = scmp.ne.s32.totalorder %s59, %s60
      %p74 = scmp.eq.s32.totalorder %s17, 1
      %p75 = por %p73, %p74
      %p77 = scmp.ne.s32.totalorder %s60, %s76
      %p78 = scmp.eq.s32.totalorder %s17, 0
      %p79 = por %p77, %p78
      %s80 = ssub.s32 %s18, %s30
      %s81 = ssub.s32 %s19, %s26
      %s82 = sor.u32 %s80, %s81
      %p83 = scmp.eq.s32.totalorder %s82, 0
      %s85 = sadd.s32 %s84, 1
      %s86 = scalar_select %p83, %s84, %s85
      %p89 = pneg %p83
      %p90 = scmp.eq.s32.totalorder %s11, 1
      %p91 = por %p89, %p90
      %p92 = scmp.ne.s32.totalorder %s84, %s87
      %p93 = scmp.eq.s32.totalorder %s11, 0
      %p94 = por %p92, %p93
      %p95 = scmp.ne.s32.totalorder %s84, %s87
      %p96 = scmp.eq.s32.totalorder %s16, 1
      %p97 = por %p95, %p96
      %p98 = scmp.ne.s32.totalorder %s87, %s88
      %p99 = scmp.eq.s32.totalorder %s16, 0
      %p100 = por %p98, %p99
      %p101 = scmp.ne.s32.totalorder %s87, %s88
      %p102 = scmp.eq.s32.totalorder %s17, 1
      %p103 = por %p101, %p102
      %p105 = scmp.ne.s32.totalorder %s88, %s104
      %p106 = scmp.eq.s32.totalorder %s17, 0
      %p107 = por %p105, %p106
      %s108 = ssub.s32 %s18, %s30
      %p109 = scmp.eq.s32.totalorder %s108, 0
      %s111 = sadd.s32 %s110, 1
      %s112 = scalar_select %p109, %s110, %s111
      %p115 = pneg %p109
      %p116 = scmp.eq.s32.totalorder %s11, 1
      %p117 = por %p115, %p116
      %p118 = scmp.ne.s32.totalorder %s110, %s113
      %p119 = scmp.eq.s32.totalorder %s11, 0
      %p120 = por %p118, %p119
      %p121 = scmp.ne.s32.totalorder %s110, %s113
      %p122 = scmp.eq.s32.totalorder %s16, 1
      %p123 = por %p121, %p122
      %p124 = scmp.ne.s32.totalorder %s113, %s114
      %p125 = scmp.eq.s32.totalorder %s16, 0
      %p126 = por %p124, %p125
      %p127 = scmp.ne.s32.totalorder %s113, %s114
      %p128 = scmp.eq.s32.totalorder %s17, 1
      %p129 = por %p127, %p128
      %p131 = scmp.ne.s32.totalorder %s114, %s130
      %p132 = scmp.eq.s32.totalorder %s17, 0
      %p133 = por %p131, %p132
      %s134 = ssub.s32 %s18, %s30
      %s135 = ssub.s32 %s19, %s26
      %s136 = sor.u32 %s134, %s135
      %p137 = scmp.eq.s32.totalorder %s136, 0
      %s139 = sadd.s32 %s138, 1
      %s140 = scalar_select %p137, %s138, %s139
      %p143 = pneg %p137
      %p144 = scmp.eq.s32.totalorder %s11, 1
      %p145 = por %p143, %p144
      %p146 = scmp.ne.s32.totalorder %s138, %s141
      %p147 = scmp.eq.s32.totalorder %s11, 0
      %p148 = por %p146, %p147
      %p149 = scmp.ne.s32.totalorder %s138, %s141
      %p150 = scmp.eq.s32.totalorder %s16, 1
      %p151 = por %p149, %p150
      %p152 = scmp.ne.s32.totalorder %s141, %s142
      %p153 = scmp.eq.s32.totalorder %s16, 0
      %p154 = por %p152, %p153
      %p155 = scmp.ne.s32.totalorder %s141, %s142
      %p156 = scmp.eq.s32.totalorder %s17, 1
      %p157 = por %p155, %p156
      %p159 = scmp.ne.s32.totalorder %s142, %s158
      %p160 = scmp.eq.s32.totalorder %s17, 0
      %p161 = por %p159, %p160
      %p162 = scmp.le.s32.totalorder 1, %s11
      %p163 = scmp.lt.s32.totalorder %s11, 3
      %p164 = pnand %p162, %p163
      %p165 = pneg %p164
      // Predicated region
      $region9: #{elmo_embedding_forward.3} parent=5 // pred_check
        _
      $region10: #{elmo_embedding_forward.3} parent=5 // pred_check_branch
        %167 = sbr.rel (%p164) target = $region12
      $region11: #{elmo_embedding_forward.3} parent=5 // pred_region
        %s168 = ssub.s32 %s11, 1
        // Predicated region
        $region13: #{elmo_embedding_forward.3} parent=11 // pred_check
          %p169 = pneg %p44
        $region14: #{elmo_embedding_forward.3} parent=11 // pred_check_branch
          %171 = sbr.rel (%p169) target = $region16
        $region15: #{elmo_embedding_forward.3} parent=11 // pred_region
          %s173 = ssub.s32 16, 16
          %174 = vsyncadd [#allocation5], %s173
          %s176 = sshll.u32 %s0, 4
          %s177 = int_to_ptr.vmem [resolvable:$true] %s176
          %179 = dma.vmem_to_smem %s177, 16, [#allocation4], [#allocation5]
        $region16: #{elmo_embedding_forward.3} parent=11 // pred_fallthru
          _
      $region12: #{elmo_embedding_forward.3} parent=5 // pred_fallthru
        _
      %p180 = scmp.lt.s32.totalorder %s11, 2
      // Predicated region
      $region17: #{elmo_embedding_forward.3} parent=5 // pred_check
        %p181 = pneg %p180
      $region18: #{elmo_embedding_forward.3} parent=5 // pred_check_branch
        %183 = sbr.rel (%p181) target = $region20
      $region19: #{elmo_embedding_forward.3} parent=5 // pred_region
        // Predicated region
        $region21: #{elmo_embedding_forward.3} parent=19 // pred_check
          %p184 = pneg %p66
        $region22: #{elmo_embedding_forward.3} parent=19 // pred_check_branch
          %186 = sbr.rel (%p184) target = $region24
        $region23: #{elmo_embedding_forward.3} parent=19 // pred_region
          %s187 = smul.u32 8, %s19
          %p188 = scmp.lt.s32.totalorder %s18, 1
          %s189 = scalar_select %p188, %s18, 1
          %p190 = scmp.lt.s32.totalorder %s187, 7
          %s191 = scalar_select %p190, %s187, 7
          %s192 = smul.addr %s189, 8
          %s193 = sadd.s32 %s191, %s192
          %s194 = smul.addr %s193, 2
          %s195 = scalar_lea.vmem %s1, %s194
          %s196 = smul.u32 8, %s19
        $region24: #{elmo_embedding_forward.3} parent=19 // pred_fallthru
          _
        // Predicated region
        $region25: #{elmo_embedding_forward.3} parent=19 // pred_check
          %p197 = pneg %p94
        $region26: #{elmo_embedding_forward.3} parent=19 // pred_check_branch
          %199 = sbr.rel (%p197) target = $region28
        $region27: #{elmo_embedding_forward.3} parent=19 // pred_region
          %s200 = smul.u32 8, %s19
          %p201 = scmp.lt.s32.totalorder %s18, 1
          %s202 = scalar_select %p201, %s18, 1
          %p203 = scmp.lt.s32.totalorder %s200, 7
          %s204 = scalar_select %p203, %s200, 7
          %s205 = smul.addr %s202, 8
          %s206 = sadd.s32 %s204, %s205
          %s207 = smul.addr %s206, 2
          %s208 = scalar_lea.vmem %s2, %s207
          %s209 = smul.u32 8, %s19
        $region28: #{elmo_embedding_forward.3} parent=19 // pred_fallthru
          _
        // Predicated region
        $region29: #{elmo_embedding_forward.3} parent=19 // pred_check
          %p210 = pneg %p120
        $region30: #{elmo_embedding_forward.3} parent=19 // pred_check_branch
          %212 = sbr.rel (%p210) target = $region32
        $region31: #{elmo_embedding_forward.3} parent=19 // pred_region
          %p213 = scmp.lt.s32.totalorder %s18, 1
          %s214 = scalar_select %p213, %s18, 1
          %s215 = smul.addr %s214, 4
          %s216 = smul.addr %s215, 8
          %s217 = scalar_lea.vmem %s3, %s216
        $region32: #{elmo_embedding_forward.3} parent=19 // pred_fallthru
          _
      $region20: #{elmo_embedding_forward.3} parent=5 // pred_fallthru
        _
      %p218 = scmp.le.s32.totalorder 1, %s11
      %p219 = scmp.lt.s32.totalorder %s11, 3
      %p220 = pnand %p218, %p219
      %p221 = pneg %p220
      // Predicated region
      $region33: #{elmo_embedding_forward.3} parent=5 // pred_check
        _
      $region34: #{elmo_embedding_forward.3} parent=5 // pred_check_branch
        %223 = sbr.rel (%p220) target = $region36
      $region35: #{elmo_embedding_forward.3} parent=5 // pred_region
        %s224 = ssub.s32 %s11, 1
        // Predicated region
        $region37: #{elmo_embedding_forward.3} parent=35 // pred_check
          %p225 = pneg %p44
        $region38: #{elmo_embedding_forward.3} parent=35 // pred_check_branch
          %227 = sbr.rel (%p225) target = $region40
        $region39: #{elmo_embedding_forward.3} parent=35 // pred_region
          %228 = dma.done [#allocation5], 16
        $region40: #{elmo_embedding_forward.3} parent=35 // pred_fallthru
          _
        %229 = sfence
        %p230 = pneg %p44
        %p231 = pneg %p41
        %s232 = smul.u32 8, %s21
        %p233 = scmp.lt.s32.totalorder %s20, 1
        %s234 = scalar_select %p233, %s20, 1
        %p235 = scmp.lt.s32.totalorder %s232, 7
        %s236 = scalar_select %p235, %s232, 7
        %s237 = smul.addr %s234, 8
        %s238 = sadd.s32 %s236, %s237
        %s239 = smul.addr %s238, 2
        %s240 = scalar_lea.vmem %s1, %s239
        %p241 = pneg %p72
        %p242 = pneg %p69
        %s243 = smul.u32 8, %s21
        %p244 = scmp.lt.s32.totalorder %s20, 1
        %s245 = scalar_select %p244, %s20, 1
        %p246 = scmp.lt.s32.totalorder %s243, 7
        %s247 = scalar_select %p246, %s243, 7
        %s248 = smul.addr %s245, 8
        %s249 = sadd.s32 %s247, %s248
        %s250 = smul.addr %s249, 2
        %s251 = scalar_lea.vmem %s2, %s250
        %p252 = pneg %p100
        %p253 = pneg %p97
        %p254 = scmp.lt.s32.totalorder %s20, 1
        %s255 = scalar_select %p254, %s20, 1
        %s256 = smul.addr %s255, 4
        %s257 = smul.addr %s256, 8
        %s258 = scalar_lea.vmem %s3, %s257
        %p259 = pneg %p126
        %p260 = pneg %p123
        %p261 = pneg %p154
        %p262 = pneg %p151
        %s263 = smul.u32 8, %s21
        %p264 = scmp.lt.s32.totalorder %s20, 1
        %s265 = scalar_select %p264, %s20, 1
        %p266 = scmp.lt.s32.totalorder %s263, 7
        %s267 = scalar_select %p266, %s263, 7
        %s268 = smul.addr %s265, 8
        %s269 = sadd.s32 %s267, %s268
        %s270 = smul.addr %s269, 2
        %s271 = scalar_lea.vmem %s4, %s270
        %s272 = smul.u32 8, %s21
        %p273 = scmp.lt.s32.totalorder %s20, 1
        %s274 = scalar_select %p273, %s20, 1
        %p275 = scmp.lt.s32.totalorder %s272, 7
        %s276 = scalar_select %p275, %s272, 7
        %s277 = smul.addr %s274, 8
        %s278 = sadd.s32 %s276, %s277
        %s279 = smul.addr %s278, 2
        %s280 = scalar_lea.vmem %s1, %s279
        %s281 = smul.u32 8, %s21
        %s282 = smul.u32 8, %s21
        %p283 = scmp.lt.s32.totalorder %s20, 1
        %s284 = scalar_select %p283, %s20, 1
        %p285 = scmp.lt.s32.totalorder %s282, 7
        %s286 = scalar_select %p285, %s282, 7
        %s287 = smul.addr %s284, 8
        %s288 = sadd.s32 %s286, %s287
        %s289 = smul.addr %s288, 2
        %s290 = scalar_lea.vmem %s2, %s289
        %s291 = smul.u32 8, %s21
        %p292 = scmp.lt.s32.totalorder %s20, 1
        %s293 = scalar_select %p292, %s20, 1
        %s294 = smul.addr %s293, 4
        %s295 = smul.addr %s294, 8
        %s296 = scalar_lea.vmem %s3, %s295
        %s297 = smul.u32 8, %s21
        %p298 = scmp.lt.s32.totalorder %s20, 1
        %s299 = scalar_select %p298, %s20, 1
        %p300 = scmp.lt.s32.totalorder %s297, 7
        %s301 = scalar_select %p300, %s297, 7
        %s302 = smul.addr %s299, 8
        %s303 = sadd.s32 %s301, %s302
        %s304 = smul.addr %s303, 2
        %s305 = scalar_lea.vmem %s4, %s304
        %s306 = smul.u32 8, %s21
        %p307 = scmp.eq.s32.totalorder %s21, 0
        // Predicated region
        $region41: #{elmo_embedding_forward.3} parent=35 // pred_check
          %p308 = pneg %p307
        $region42: #{elmo_embedding_forward.3} parent=35 // pred_check_branch
          %310 = sbr.rel (%p308) target = $region44
        $region43: #{elmo_embedding_forward.3} parent=35 // pred_region
          %vm311 = vcmask 254976
          %312 = vst.msk [vmem:[#allocation2] sm:$0x3] %vm311, 0.0
          %313 = vst.msk [vmem:[#allocation3] sm:$0x3] %vm311, 0.0
        $region44: #{elmo_embedding_forward.3} parent=35 // pred_fallthru
          _
        %s314 = sld [smem:[#allocation4]]
        %s315 = sld [smem:[#allocation4 + $0x1]]
        %v316 = vld [vmem:[%s296] sm:$0xff]
        %v317 = vld [vmem:[%s296 + $0x8] sm:$0xff]
        %v318 = vld [vmem:[%s296 + $0x10] sm:$0xff]
        %v319 = vld [vmem:[%s296 + $0x18] sm:$0xff]
        %v320 = vld [vmem:[#allocation2] sm:$0x3]
        %v321 = vld [vmem:[#allocation3] sm:$0x3]
        %v322 = vld [vmem:[%s280] sm:$0x3]
        %vm323 = vcmask 261120
        %v325 = vsel %vm323, %v320, 0
        %327 = vmatprep.subr.mxu0 0.0
        %328 = vmatpush1.msra.mxu0 0.0
        %329 = vmatprep.subr.mxu0 0.0
        %330 = vmatpush1.msra.mxu0 0.0
        %331 = vmatprep.subr.mxu0 0.0
        %332 = vmatpush1.msra.mxu0 0.0
        %333 = vmatprep.subr.mxu0 0.0
        %334 = vmatpush1.msra.mxu0 0.0
        %335 = vmatprep.subr.mxu0 0.0
        %336 = vmatpush1.msra.mxu0 0.0
        %337 = vmatprep.subr.mxu0 0.0
        %338 = vmatpush1.msra.mxu0 0.0
        %339 = vmatprep.subr.mxu0 0.0
        %340 = vmatpush1.msra.mxu0 0.0
        %341 = vmatprep.subr.mxu0 0.0
        %342 = vmatpush1.msra.mxu0 0.0
        %343 = vmatprep.subr.mxu0 0.0
        %344 = vmatpush1.msra.mxu0 0.0
        %345 = vmatprep.subr.mxu0 0.0
        %346 = vmatpush1.msra.mxu0 0.0
        %347 = vmatprep.subr.mxu0 0.0
        %348 = vmatpush1.msra.mxu0 0.0
        %349 = vmatprep.subr.mxu0 0.0
        %350 = vmatpush1.msra.mxu0 0.0
        %351 = vmatprep.subr.mxu0 0.0
        %352 = vmatpush1.msra.mxu0 %v319
        %353 = vmatprep.subr.mxu0 0.0
        %354 = vmatpush1.msra.mxu0 %v318
        %355 = vmatprep.subr.mxu0 0.0
        %356 = vmatpush1.msra.mxu0 %v317
        %357 = vmatprep.subr.mxu0 0.0
        %358 = vmatpush1.msra.mxu0 %v316
        %359 = vmatprep.subr.mxu0 0.0
        %360 = vmatpush2.msra.mxu0 0.0
        %361 = vmatprep.subr.mxu0 0.0
        %362 = vmatpush2.msra.mxu0 0.0
        %363 = vmatprep.subr.mxu0 0.0
        %364 = vmatpush2.msra.mxu0 0.0
        %365 = vmatprep.subr.mxu0 0.0
        %366 = vmatpush2.msra.mxu0 0.0
        %367 = vmatprep.subr.mxu0 0.0
        %368 = vmatpush2.msra.mxu0 0.0
        %369 = vmatprep.subr.mxu0 0.0
        %370 = vmatpush2.msra.mxu0 0.0
        %371 = vmatprep.subr.mxu0 0.0
        %372 = vmatpush2.msra.mxu0 0.0
        %373 = vmatprep.subr.mxu0 0.0
        %374 = vmatpush2.msra.mxu0 0.0
        %375 = vmatprep.subr.mxu0 0.0
        %376 = vmatpush2.msra.mxu0 0.0
        %377 = vmatprep.subr.mxu0 0.0
        %378 = vmatpush2.msra.mxu0 0.0
        %379 = vmatprep.subr.mxu0 0.0
        %380 = vmatpush2.msra.mxu0 0.0
        %381 = vmatprep.subr.mxu0 0.0
        %382 = vmatpush2.msra.mxu0 0.0
        %383 = vmatprep.subr.mxu0 0.0
        %384 = vmatpush2.msra.mxu0 0.0
        %385 = vmatprep.subr.mxu0 0.0
        %386 = vmatpush2.msra.mxu0 0.0
        %387 = vmatprep.subr.mxu0 0.0
        %388 = vmatpush2.msra.mxu0 0.0
        %389 = vmatprep.subr.mxu0 0.0
        %390 = vmatpush2.msra.mxu0 0.0
        %391 = vmatprep.mubr.f32.mxu0 0.0
        %392 = vmatmul.mubr.f32.gmra.mxu0 %v325
        %v393 = vpop.f32.mrf.mxu0
        %v394 = vadd.f32 0.0, %v393
        %v395 = vpop.f32.mrf.mxu0
        %396 = vdwg.mxu0
        %v397 = vadd.f32 %v322, %v394
        %v398 = vxor.u32 %v397, 2147483648
        %v399 = vmul.f32 %v398, 1.442695
        %v400 = vpow.pop %v399
        %v401 = vadd.f32 %v400, 1.0
        %v402 = vrcp.pop %v401
        %v403 = vmul.f32 1.0, %v402
        %v404 = vtanh.pop %v397
        %406 = vrot.lane.b32.xlu0 %v321, 32
        %v407 = vpop.permute.xlu0 %406
        %v409 = vmul.f32 %v403, %v407
        %411 = vrot.lane.b32.xlu0 %v404, 64
        %v412 = vpop.permute.xlu0 %411
        %v414 = vmul.f32 %v403, %v412
        %416 = vrot.lane.b32.xlu0 %v414, 32
        %v417 = vpop.permute.xlu0 %416
        %v419 = vadd.f32 %v409, %v417
        %v420 = vtanh.pop %v419
        %422 = vrot.lane.b32.xlu0 %v420, 64
        %v423 = vpop.permute.xlu0 %422
        %v425 = vmul.f32 %v403, %v423
        %v426 = vld [vmem:[%s290] sm:$0x3]
        %v427 = vstv %s314
        %v428 = vmul.f32 %v427, %v426
        %v429 = vstv %s315
        %v430 = vmul.f32 %v429, %v425
        %432 = vrot.lane.b32.xlu0 %v430, 32
        %v433 = vpop.permute.xlu0 %432
        %v435 = vadd.f32 %v428, %v433
        %vm436 = vcmask 254976
        %437 = vst.msk [vmem:[%s305] sm:$0x3] %vm436, %v435
        %s438 = scalar_lea.vmem %s280, 2
        %v439 = vld [vmem:[%s438] sm:$0x3]
        %441 = vrot.lane.b32.xlu0 %v425, 32
        %v442 = vpop.permute.xlu0 %441
        %v443 = vsel %vm323, %v442, 0
        %445 = vmatprep.subr.mxu0 0.0
        %446 = vmatpush1.msra.mxu0 0.0
        %447 = vmatprep.subr.mxu0 0.0
        %448 = vmatpush1.msra.mxu0 0.0
        %449 = vmatprep.subr.mxu0 0.0
        %450 = vmatpush1.msra.mxu0 0.0
        %451 = vmatprep.subr.mxu0 0.0
        %452 = vmatpush1.msra.mxu0 0.0
        %453 = vmatprep.subr.mxu0 0.0
        %454 = vmatpush1.msra.mxu0 0.0
        %455 = vmatprep.subr.mxu0 0.0
        %456 = vmatpush1.msra.mxu0 0.0
        %457 = vmatprep.subr.mxu0 0.0
        %458 = vmatpush1.msra.mxu0 0.0
        %459 = vmatprep.subr.mxu0 0.0
        %460 = vmatpush1.msra.mxu0 0.0
        %461 = vmatprep.subr.mxu0 0.0
        %462 = vmatpush1.msra.mxu0 0.0
        %463 = vmatprep.subr.mxu0 0.0
        %464 = vmatpush1.msra.mxu0 0.0
        %465 = vmatprep.subr.mxu0 0.0
        %466 = vmatpush1.msra.mxu0 0.0
        %467 = vmatprep.subr.mxu0 0.0
        %468 = vmatpush1.msra.mxu0 0.0
        %469 = vmatprep.subr.mxu0 0.0
        %470 = vmatpush1.msra.mxu0 %v319
        %471 = vmatprep.subr.mxu0 0.0
        %472 = vmatpush1.msra.mxu0 %v318
        %473 = vmatprep.subr.mxu0 0.0
        %474 = vmatpush1.msra.mxu0 %v317
        %475 = vmatprep.subr.mxu0 0.0
        %476 = vmatpush1.msra.mxu0 %v316
        %477 = vmatprep.subr.mxu0 0.0
        %478 = vmatpush2.msra.mxu0 0.0
        %479 = vmatprep.subr.mxu0 0.0
        %480 = vmatpush2.msra.mxu0 0.0
        %481 = vmatprep.subr.mxu0 0.0
        %482 = vmatpush2.msra.mxu0 0.0
        %483 = vmatprep.subr.mxu0 0.0
        %484 = vmatpush2.msra.mxu0 0.0
        %485 = vmatprep.subr.mxu0 0.0
        %486 = vmatpush2.msra.mxu0 0.0
        %487 = vmatprep.subr.mxu0 0.0
        %488 = vmatpush2.msra.mxu0 0.0
        %489 = vmatprep.subr.mxu0 0.0
        %490 = vmatpush2.msra.mxu0 0.0
        %491 = vmatprep.subr.mxu0 0.0
        %492 = vmatpush2.msra.mxu0 0.0
        %493 = vmatprep.subr.mxu0 0.0
        %494 = vmatpush2.msra.mxu0 0.0
        %495 = vmatprep.subr.mxu0 0.0
        %496 = vmatpush2.msra.mxu0 0.0
        %497 = vmatprep.subr.mxu0 0.0
        %498 = vmatpush2.msra.mxu0 0.0
        %499 = vmatprep.subr.mxu0 0.0
        %500 = vmatpush2.msra.mxu0 0.0
        %501 = vmatprep.subr.mxu0 0.0
        %502 = vmatpush2.msra.mxu0 0.0
        %503 = vmatprep.subr.mxu0 0.0
        %504 = vmatpush2.msra.mxu0 0.0
        %505 = vmatprep.subr.mxu0 0.0
        %506 = vmatpush2.msra.mxu0 0.0
        %507 = vmatprep.subr.mxu0 0.0
        %508 = vmatpush2.msra.mxu0 0.0
        %509 = vmatprep.mubr.f32.mxu0 0.0
        %510 = vmatmul.mubr.f32.gmra.mxu0 %v443
        %v511 = vpop.f32.mrf.mxu0
        %v512 = vadd.f32 0.0, %v511
        %v513 = vpop.f32.mrf.mxu0
        %514 = vdwg.mxu0
        %v515 = vadd.f32 %v439, %v512
        %v516 = vxor.u32 %v515, 2147483648
        %v517 = vmul.f32 %v516, 1.442695
        %v518 = vpow.pop %v517
        %v519 = vadd.f32 %v518, 1.0
        %v520 = vrcp.pop %v519
        %v521 = vmul.f32 1.0, %v520
        %v522 = vtanh.pop %v515
        %v523 = vmul.f32 %v521, %v419
        %525 = vrot.lane.b32.xlu0 %v522, 64
        %v526 = vpop.permute.xlu0 %525
        %v528 = vmul.f32 %v521, %v526
        %530 = vrot.lane.b32.xlu0 %v528, 32
        %v531 = vpop.permute.xlu0 %530
        %v533 = vadd.f32 %v523, %v531
        %v534 = vtanh.pop %v533
        %536 = vrot.lane.b32.xlu0 %v534, 64
        %v537 = vpop.permute.xlu0 %536
        %v539 = vmul.f32 %v521, %v537
        %s540 = scalar_lea.vmem %s290, 2
        %v541 = vld [vmem:[%s540] sm:$0x3]
        %v542 = vmul.f32 %v427, %v541
        %v543 = vmul.f32 %v429, %v539
        %545 = vrot.lane.b32.xlu0 %v543, 32
        %v546 = vpop.permute.xlu0 %545
        %v548 = vadd.f32 %v542, %v546
        %s549 = scalar_lea.vmem %s305, 2
        %550 = vst.msk [vmem:[%s549] sm:$0x3] %vm436, %v548
        %s551 = scalar_lea.vmem %s280, 4
        %v552 = vld [vmem:[%s551] sm:$0x3]
        %554 = vrot.lane.b32.xlu0 %v539, 32
        %v555 = vpop.permute.xlu0 %554
        %v556 = vsel %vm323, %v555, 0
        %558 = vmatprep.subr.mxu0 0.0
        %559 = vmatpush1.msra.mxu0 0.0
        %560 = vmatprep.subr.mxu0 0.0
        %561 = vmatpush1.msra.mxu0 0.0
        %562 = vmatprep.subr.mxu0 0.0
        %563 = vmatpush1.msra.mxu0 0.0
        %564 = vmatprep.subr.mxu0 0.0
        %565 = vmatpush1.msra.mxu0 0.0
        %566 = vmatprep.subr.mxu0 0.0
        %567 = vmatpush1.msra.mxu0 0.0
        %568 = vmatprep.subr.mxu0 0.0
        %569 = vmatpush1.msra.mxu0 0.0
        %570 = vmatprep.subr.mxu0 0.0
        %571 = vmatpush1.msra.mxu0 0.0
        %572 = vmatprep.subr.mxu0 0.0
        %573 = vmatpush1.msra.mxu0 0.0
        %574 = vmatprep.subr.mxu0 0.0
        %575 = vmatpush1.msra.mxu0 0.0
        %576 = vmatprep.subr.mxu0 0.0
        %577 = vmatpush1.msra.mxu0 0.0
        %578 = vmatprep.subr.mxu0 0.0
        %579 = vmatpush1.msra.mxu0 0.0
        %580 = vmatprep.subr.mxu0 0.0
        %581 = vmatpush1.msra.mxu0 0.0
        %582 = vmatprep.subr.mxu0 0.0
        %583 = vmatpush1.msra.mxu0 %v319
        %584 = vmatprep.subr.mxu0 0.0
        %585 = vmatpush1.msra.mxu0 %v318
        %586 = vmatprep.subr.mxu0 0.0
        %587 = vmatpush1.msra.mxu0 %v317
        %588 = vmatprep.subr.mxu0 0.0
        %589 = vmatpush1.msra.mxu0 %v316
        %590 = vmatprep.subr.mxu0 0.0
        %591 = vmatpush2.msra.mxu0 0.0
        %592 = vmatprep.subr.mxu0 0.0
        %593 = vmatpush2.msra.mxu0 0.0
        %594 = vmatprep.subr.mxu0 0.0
        %595 = vmatpush2.msra.mxu0 0.0
        %596 = vmatprep.subr.mxu0 0.0
        %597 = vmatpush2.msra.mxu0 0.0
        %598 = vmatprep.subr.mxu0 0.0
        %599 = vmatpush2.msra.mxu0 0.0
        %600 = vmatprep.subr.mxu0 0.0
        %601 = vmatpush2.msra.mxu0 0.0
        %602 = vmatprep.subr.mxu0 0.0
        %603 = vmatpush2.msra.mxu0 0.0
        %604 = vmatprep.subr.mxu0 0.0
        %605 = vmatpush2.msra.mxu0 0.0
        %606 = vmatprep.subr.mxu0 0.0
        %607 = vmatpush2.msra.mxu0 0.0
        %608 = vmatprep.subr.mxu0 0.0
        %609 = vmatpush2.msra.mxu0 0.0
        %610 = vmatprep.subr.mxu0 0.0
        %611 = vmatpush2.msra.mxu0 0.0
        %612 = vmatprep.subr.mxu0 0.0
        %613 = vmatpush2.msra.mxu0 0.0
        %614 = vmatprep.subr.mxu0 0.0
        %615 = vmatpush2.msra.mxu0 0.0
        %616 = vmatprep.subr.mxu0 0.0
        %617 = vmatpush2.msra.mxu0 0.0
        %618 = vmatprep.subr.mxu0 0.0
        %619 = vmatpush2.msra.mxu0 0.0
        %620 = vmatprep.subr.mxu0 0.0
        %621 = vmatpush2.msra.mxu0 0.0
        %622 = vmatprep.mubr.f32.mxu0 0.0
        %623 = vmatmul.mubr.f32.gmra.mxu0 %v556
        %v624 = vpop.f32.mrf.mxu0
        %v625 = vadd.f32 0.0, %v624
        %v626 = vpop.f32.mrf.mxu0
        %627 = vdwg.mxu0
        %v628 = vadd.f32 %v552, %v625
        %v629 = vxor.u32 %v628, 2147483648
        %v630 = vmul.f32 %v629, 1.442695
        %v631 = vpow.pop %v630
        %v632 = vadd.f32 %v631, 1.0
        %v633 = vrcp.pop %v632
        %v634 = vmul.f32 1.0, %v633
        %v635 = vtanh.pop %v628
        %v636 = vmul.f32 %v634, %v533
        %638 = vrot.lane.b32.xlu0 %v635, 64
        %v639 = vpop.permute.xlu0 %638
        %v641 = vmul.f32 %v634, %v639
        %643 = vrot.lane.b32.xlu0 %v641, 32
        %v644 = vpop.permute.xlu0 %643
        %v646 = vadd.f32 %v636, %v644
        %v647 = vtanh.pop %v646
        %649 = vrot.lane.b32.xlu0 %v647, 64
        %v650 = vpop.permute.xlu0 %649
        %v652 = vmul.f32 %v634, %v650
        %s653 = scalar_lea.vmem %s290, 4
        %v654 = vld [vmem:[%s653] sm:$0x3]
        %v655 = vmul.f32 %v427, %v654
        %v656 = vmul.f32 %v429, %v652
        %658 = vrot.lane.b32.xlu0 %v656, 32
        %v659 = vpop.permute.xlu0 %658
        %v661 = vadd.f32 %v655, %v659
        %s662 = scalar_lea.vmem %s305, 4
        %663 = vst.msk [vmem:[%s662] sm:$0x3] %vm436, %v661
        %s664 = scalar_lea.vmem %s280, 6
        %v665 = vld [vmem:[%s664] sm:$0x3]
        %667 = vrot.lane.b32.xlu0 %v652, 32
        %v668 = vpop.permute.xlu0 %667
        %v669 = vsel %vm323, %v668, 0
        %671 = vmatprep.subr.mxu0 0.0
        %672 = vmatpush1.msra.mxu0 0.0
        %673 = vmatprep.subr.mxu0 0.0
        %674 = vmatpush1.msra.mxu0 0.0
        %675 = vmatprep.subr.mxu0 0.0
        %676 = vmatpush1.msra.mxu0 0.0
        %677 = vmatprep.subr.mxu0 0.0
        %678 = vmatpush1.msra.mxu0 0.0
        %679 = vmatprep.subr.mxu0 0.0
        %680 = vmatpush1.msra.mxu0 0.0
        %681 = vmatprep.subr.mxu0 0.0
        %682 = vmatpush1.msra.mxu0 0.0
        %683 = vmatprep.subr.mxu0 0.0
        %684 = vmatpush1.msra.mxu0 0.0
        %685 = vmatprep.subr.mxu0 0.0
        %686 = vmatpush1.msra.mxu0 0.0
        %687 = vmatprep.subr.mxu0 0.0
        %688 = vmatpush1.msra.mxu0 0.0
        %689 = vmatprep.subr.mxu0 0.0
        %690 = vmatpush1.msra.mxu0 0.0
        %691 = vmatprep.subr.mxu0 0.0
        %692 = vmatpush1.msra.mxu0 0.0
        %693 = vmatprep.subr.mxu0 0.0
        %694 = vmatpush1.msra.mxu0 0.0
        %695 = vmatprep.subr.mxu0 0.0
        %696 = vmatpush1.msra.mxu0 %v319
        %697 = vmatprep.subr.mxu0 0.0
        %698 = vmatpush1.msra.mxu0 %v318
        %699 = vmatprep.subr.mxu0 0.0
        %700 = vmatpush1.msra.mxu0 %v317
        %701 = vmatprep.subr.mxu0 0.0
        %702 = vmatpush1.msra.mxu0 %v316
        %703 = vmatprep.subr.mxu0 0.0
        %704 = vmatpush2.msra.mxu0 0.0
        %705 = vmatprep.subr.mxu0 0.0
        %706 = vmatpush2.msra.mxu0 0.0
        %707 = vmatprep.subr.mxu0 0.0
        %708 = vmatpush2.msra.mxu0 0.0
        %709 = vmatprep.subr.mxu0 0.0
        %710 = vmatpush2.msra.mxu0 0.0
        %711 = vmatprep.subr.mxu0 0.0
        %712 = vmatpush2.msra.mxu0 0.0
        %713 = vmatprep.subr.mxu0 0.0
        %714 = vmatpush2.msra.mxu0 0.0
        %715 = vmatprep.subr.mxu0 0.0
        %716 = vmatpush2.msra.mxu0 0.0
        %717 = vmatprep.subr.mxu0 0.0
        %718 = vmatpush2.msra.mxu0 0.0
        %719 = vmatprep.subr.mxu0 0.0
        %720 = vmatpush2.msra.mxu0 0.0
        %721 = vmatprep.subr.mxu0 0.0
        %722 = vmatpush2.msra.mxu0 0.0
        %723 = vmatprep.subr.mxu0 0.0
        %724 = vmatpush2.msra.mxu0 0.0
        %725 = vmatprep.subr.mxu0 0.0
        %726 = vmatpush2.msra.mxu0 0.0
        %727 = vmatprep.subr.mxu0 0.0
        %728 = vmatpush2.msra.mxu0 0.0
        %729 = vmatprep.subr.mxu0 0.0
        %730 = vmatpush2.msra.mxu0 0.0
        %731 = vmatprep.subr.mxu0 0.0
        %732 = vmatpush2.msra.mxu0 0.0
        %733 = vmatprep.subr.mxu0 0.0
        %734 = vmatpush2.msra.mxu0 0.0
        %735 = vmatprep.mubr.f32.mxu0 0.0
        %736 = vmatmul.mubr.f32.gmra.mxu0 %v669
        %v737 = vpop.f32.mrf.mxu0
        %v738 = vadd.f32 0.0, %v737
        %v739 = vpop.f32.mrf.mxu0
        %740 = vdwg.mxu0
        %v741 = vadd.f32 %v665, %v738
        %v742 = vxor.u32 %v741, 2147483648
        %v743 = vmul.f32 %v742, 1.442695
        %v744 = vpow.pop %v743
        %v745 = vadd.f32 %v744, 1.0
        %v746 = vrcp.pop %v745
        %v747 = vmul.f32 1.0, %v746
        %v748 = vtanh.pop %v741
        %v749 = vmul.f32 %v747, %v646
        %751 = vrot.lane.b32.xlu0 %v748, 64
        %v752 = vpop.permute.xlu0 %751
        %v754 = vmul.f32 %v747, %v752
        %756 = vrot.lane.b32.xlu0 %v754, 32
        %v757 = vpop.permute.xlu0 %756
        %v759 = vadd.f32 %v749, %v757
        %v760 = vtanh.pop %v759
        %762 = vrot.lane.b32.xlu0 %v760, 64
        %v763 = vpop.permute.xlu0 %762
        %v765 = vmul.f32 %v747, %v763
        %s766 = scalar_lea.vmem %s290, 6
        %v767 = vld [vmem:[%s766] sm:$0x3]
        %v768 = vmul.f32 %v427, %v767
        %v769 = vmul.f32 %v429, %v765
        %771 = vrot.lane.b32.xlu0 %v769, 32
        %v772 = vpop.permute.xlu0 %771
        %v774 = vadd.f32 %v768, %v772
        %s775 = scalar_lea.vmem %s305, 6
        %776 = vst.msk [vmem:[%s775] sm:$0x3] %vm436, %v774
        %s777 = scalar_lea.vmem %s280, 8
        %v778 = vld [vmem:[%s777] sm:$0x3]
        %780 = vrot.lane.b32.xlu0 %v765, 32
        %v781 = vpop.permute.xlu0 %780
        %v782 = vsel %vm323, %v781, 0
        %784 = vmatprep.subr.mxu0 0.0
        %785 = vmatpush1.msra.mxu0 0.0
        %786 = vmatprep.subr.mxu0 0.0
        %787 = vmatpush1.msra.mxu0 0.0
        %788 = vmatprep.subr.mxu0 0.0
        %789 = vmatpush1.msra.mxu0 0.0
        %790 = vmatprep.subr.mxu0 0.0
        %791 = vmatpush1.msra.mxu0 0.0
        %792 = vmatprep.subr.mxu0 0.0
        %793 = vmatpush1.msra.mxu0 0.0
        %794 = vmatprep.subr.mxu0 0.0
        %795 = vmatpush1.msra.mxu0 0.0
        %796 = vmatprep.subr.mxu0 0.0
        %797 = vmatpush1.msra.mxu0 0.0
        %798 = vmatprep.subr.mxu0 0.0
        %799 = vmatpush1.msra.mxu0 0.0
        %800 = vmatprep.subr.mxu0 0.0
        %801 = vmatpush1.msra.mxu0 0.0
        %802 = vmatprep.subr.mxu0 0.0
        %803 = vmatpush1.msra.mxu0 0.0
        %804 = vmatprep.subr.mxu0 0.0
        %805 = vmatpush1.msra.mxu0 0.0
        %806 = vmatprep.subr.mxu0 0.0
        %807 = vmatpush1.msra.mxu0 0.0
        %808 = vmatprep.subr.mxu0 0.0
        %809 = vmatpush1.msra.mxu0 %v319
        %810 = vmatprep.subr.mxu0 0.0
        %811 = vmatpush1.msra.mxu0 %v318
        %812 = vmatprep.subr.mxu0 0.0
        %813 = vmatpush1.msra.mxu0 %v317
        %814 = vmatprep.subr.mxu0 0.0
        %815 = vmatpush1.msra.mxu0 %v316
        %816 = vmatprep.subr.mxu0 0.0
        %817 = vmatpush2.msra.mxu0 0.0
        %818 = vmatprep.subr.mxu0 0.0
        %819 = vmatpush2.msra.mxu0 0.0
        %820 = vmatprep.subr.mxu0 0.0
        %821 = vmatpush2.msra.mxu0 0.0
        %822 = vmatprep.subr.mxu0 0.0
        %823 = vmatpush2.msra.mxu0 0.0
        %824 = vmatprep.subr.mxu0 0.0
        %825 = vmatpush2.msra.mxu0 0.0
        %826 = vmatprep.subr.mxu0 0.0
        %827 = vmatpush2.msra.mxu0 0.0
        %828 = vmatprep.subr.mxu0 0.0
        %829 = vmatpush2.msra.mxu0 0.0
        %830 = vmatprep.subr.mxu0 0.0
        %831 = vmatpush2.msra.mxu0 0.0
        %832 = vmatprep.subr.mxu0 0.0
        %833 = vmatpush2.msra.mxu0 0.0
        %834 = vmatprep.subr.mxu0 0.0
        %835 = vmatpush2.msra.mxu0 0.0
        %836 = vmatprep.subr.mxu0 0.0
        %837 = vmatpush2.msra.mxu0 0.0
        %838 = vmatprep.subr.mxu0 0.0
        %839 = vmatpush2.msra.mxu0 0.0
        %840 = vmatprep.subr.mxu0 0.0
        %841 = vmatpush2.msra.mxu0 0.0
        %842 = vmatprep.subr.mxu0 0.0
        %843 = vmatpush2.msra.mxu0 0.0
        %844 = vmatprep.subr.mxu0 0.0
        %845 = vmatpush2.msra.mxu0 0.0
        %846 = vmatprep.subr.mxu0 0.0
        %847 = vmatpush2.msra.mxu0 0.0
        %848 = vmatprep.mubr.f32.mxu0 0.0
        %849 = vmatmul.mubr.f32.gmra.mxu0 %v782
        %v850 = vpop.f32.mrf.mxu0
        %v851 = vadd.f32 0.0, %v850
        %v852 = vpop.f32.mrf.mxu0
        %853 = vdwg.mxu0
        %v854 = vadd.f32 %v778, %v851
        %v855 = vxor.u32 %v854, 2147483648
        %v856 = vmul.f32 %v855, 1.442695
        %v857 = vpow.pop %v856
        %v858 = vadd.f32 %v857, 1.0
        %v859 = vrcp.pop %v858
        %v860 = vmul.f32 1.0, %v859
        %v861 = vtanh.pop %v854
        %v862 = vmul.f32 %v860, %v759
        %864 = vrot.lane.b32.xlu0 %v861, 64
        %v865 = vpop.permute.xlu0 %864
        %v867 = vmul.f32 %v860, %v865
        %869 = vrot.lane.b32.xlu0 %v867, 32
        %v870 = vpop.permute.xlu0 %869
        %v872 = vadd.f32 %v862, %v870
        %v873 = vtanh.pop %v872
        %875 = vrot.lane.b32.xlu0 %v873, 64
        %v876 = vpop.permute.xlu0 %875
        %v878 = vmul.f32 %v860, %v876
        %s879 = scalar_lea.vmem %s290, 8
        %v880 = vld [vmem:[%s879] sm:$0x3]
        %v881 = vmul.f32 %v427, %v880
        %v882 = vmul.f32 %v429, %v878
        %884 = vrot.lane.b32.xlu0 %v882, 32
        %v885 = vpop.permute.xlu0 %884
        %v887 = vadd.f32 %v881, %v885
        %s888 = scalar_lea.vmem %s305, 8
        %889 = vst.msk [vmem:[%s888] sm:$0x3] %vm436, %v887
        %s890 = scalar_lea.vmem %s280, 10
        %v891 = vld [vmem:[%s890] sm:$0x3]
        %893 = vrot.lane.b32.xlu0 %v878, 32
        %v894 = vpop.permute.xlu0 %893
        %v895 = vsel %vm323, %v894, 0
        %897 = vmatprep.subr.mxu0 0.0
        %898 = vmatpush1.msra.mxu0 0.0
        %899 = vmatprep.subr.mxu0 0.0
        %900 = vmatpush1.msra.mxu0 0.0
        %901 = vmatprep.subr.mxu0 0.0
        %902 = vmatpush1.msra.mxu0 0.0
        %903 = vmatprep.subr.mxu0 0.0
        %904 = vmatpush1.msra.mxu0 0.0
        %905 = vmatprep.subr.mxu0 0.0
        %906 = vmatpush1.msra.mxu0 0.0
        %907 = vmatprep.subr.mxu0 0.0
        %908 = vmatpush1.msra.mxu0 0.0
        %909 = vmatprep.subr.mxu0 0.0
        %910 = vmatpush1.msra.mxu0 0.0
        %911 = vmatprep.subr.mxu0 0.0
        %912 = vmatpush1.msra.mxu0 0.0
        %913 = vmatprep.subr.mxu0 0.0
        %914 = vmatpush1.msra.mxu0 0.0
        %915 = vmatprep.subr.mxu0 0.0
        %916 = vmatpush1.msra.mxu0 0.0
        %917 = vmatprep.subr.mxu0 0.0
        %918 = vmatpush1.msra.mxu0 0.0
        %919 = vmatprep.subr.mxu0 0.0
        %920 = vmatpush1.msra.mxu0 0.0
        %921 = vmatprep.subr.mxu0 0.0
        %922 = vmatpush1.msra.mxu0 %v319
        %923 = vmatprep.subr.mxu0 0.0
        %924 = vmatpush1.msra.mxu0 %v318
        %925 = vmatprep.subr.mxu0 0.0
        %926 = vmatpush1.msra.mxu0 %v317
        %927 = vmatprep.subr.mxu0 0.0
        %928 = vmatpush1.msra.mxu0 %v316
        %929 = vmatprep.subr.mxu0 0.0
        %930 = vmatpush2.msra.mxu0 0.0
        %931 = vmatprep.subr.mxu0 0.0
        %932 = vmatpush2.msra.mxu0 0.0
        %933 = vmatprep.subr.mxu0 0.0
        %934 = vmatpush2.msra.mxu0 0.0
        %935 = vmatprep.subr.mxu0 0.0
        %936 = vmatpush2.msra.mxu0 0.0
        %937 = vmatprep.subr.mxu0 0.0
        %938 = vmatpush2.msra.mxu0 0.0
        %939 = vmatprep.subr.mxu0 0.0
        %940 = vmatpush2.msra.mxu0 0.0
        %941 = vmatprep.subr.mxu0 0.0
        %942 = vmatpush2.msra.mxu0 0.0
        %943 = vmatprep.subr.mxu0 0.0
        %944 = vmatpush2.msra.mxu0 0.0
        %945 = vmatprep.subr.mxu0 0.0
        %946 = vmatpush2.msra.mxu0 0.0
        %947 = vmatprep.subr.mxu0 0.0
        %948 = vmatpush2.msra.mxu0 0.0
        %949 = vmatprep.subr.mxu0 0.0
        %950 = vmatpush2.msra.mxu0 0.0
        %951 = vmatprep.subr.mxu0 0.0
        %952 = vmatpush2.msra.mxu0 0.0
        %953 = vmatprep.subr.mxu0 0.0
        %954 = vmatpush2.msra.mxu0 0.0
        %955 = vmatprep.subr.mxu0 0.0
        %956 = vmatpush2.msra.mxu0 0.0
        %957 = vmatprep.subr.mxu0 0.0
        %958 = vmatpush2.msra.mxu0 0.0
        %959 = vmatprep.subr.mxu0 0.0
        %960 = vmatpush2.msra.mxu0 0.0
        %961 = vmatprep.mubr.f32.mxu0 0.0
        %962 = vmatmul.mubr.f32.gmra.mxu0 %v895
        %v963 = vpop.f32.mrf.mxu0
        %v964 = vadd.f32 0.0, %v963
        %v965 = vpop.f32.mrf.mxu0
        %966 = vdwg.mxu0
        %v967 = vadd.f32 %v891, %v964
        %v968 = vxor.u32 %v967, 2147483648
        %v969 = vmul.f32 %v968, 1.442695
        %v970 = vpow.pop %v969
        %v971 = vadd.f32 %v970, 1.0
        %v972 = vrcp.pop %v971
        %v973 = vmul.f32 1.0, %v972
        %v974 = vtanh.pop %v967
        %v975 = vmul.f32 %v973, %v872
        %977 = vrot.lane.b32.xlu0 %v974, 64
        %v978 = vpop.permute.xlu0 %977
        %v980 = vmul.f32 %v973, %v978
        %982 = vrot.lane.b32.xlu0 %v980, 32
        %v983 = vpop.permute.xlu0 %982
        %v985 = vadd.f32 %v975, %v983
        %v986 = vtanh.pop %v985
        %988 = vrot.lane.b32.xlu0 %v986, 64
        %v989 = vpop.permute.xlu0 %988
        %v991 = vmul.f32 %v973, %v989
        %s992 = scalar_lea.vmem %s290, 10
        %v993 = vld [vmem:[%s992] sm:$0x3]
        %v994 = vmul.f32 %v427, %v993
        %v995 = vmul.f32 %v429, %v991
        %997 = vrot.lane.b32.xlu0 %v995, 32
        %v998 = vpop.permute.xlu0 %997
        %v1000 = vadd.f32 %v994, %v998
        %s1001 = scalar_lea.vmem %s305, 10
        %1002 = vst.msk [vmem:[%s1001] sm:$0x3] %vm436, %v1000
        %s1003 = scalar_lea.vmem %s280, 12
        %v1004 = vld [vmem:[%s1003] sm:$0x3]
        %1006 = vrot.lane.b32.xlu0 %v991, 32
        %v1007 = vpop.permute.xlu0 %1006
        %v1008 = vsel %vm323, %v1007, 0
        %1010 = vmatprep.subr.mxu0 0.0
        %1011 = vmatpush1.msra.mxu0 0.0
        %1012 = vmatprep.subr.mxu0 0.0
        %1013 = vmatpush1.msra.mxu0 0.0
        %1014 = vmatprep.subr.mxu0 0.0
        %1015 = vmatpush1.msra.mxu0 0.0
        %1016 = vmatprep.subr.mxu0 0.0
        %1017 = vmatpush1.msra.mxu0 0.0
        %1018 = vmatprep.subr.mxu0 0.0
        %1019 = vmatpush1.msra.mxu0 0.0
        %1020 = vmatprep.subr.mxu0 0.0
        %1021 = vmatpush1.msra.mxu0 0.0
        %1022 = vmatprep.subr.mxu0 0.0
        %1023 = vmatpush1.msra.mxu0 0.0
        %1024 = vmatprep.subr.mxu0 0.0
        %1025 = vmatpush1.msra.mxu0 0.0
        %1026 = vmatprep.subr.mxu0 0.0
        %1027 = vmatpush1.msra.mxu0 0.0
        %1028 = vmatprep.subr.mxu0 0.0
        %1029 = vmatpush1.msra.mxu0 0.0
        %1030 = vmatprep.subr.mxu0 0.0
        %1031 = vmatpush1.msra.mxu0 0.0
        %1032 = vmatprep.subr.mxu0 0.0
        %1033 = vmatpush1.msra.mxu0 0.0
        %1034 = vmatprep.subr.mxu0 0.0
        %1035 = vmatpush1.msra.mxu0 %v319
        %1036 = vmatprep.subr.mxu0 0.0
        %1037 = vmatpush1.msra.mxu0 %v318
        %1038 = vmatprep.subr.mxu0 0.0
        %1039 = vmatpush1.msra.mxu0 %v317
        %1040 = vmatprep.subr.mxu0 0.0
        %1041 = vmatpush1.msra.mxu0 %v316
        %1042 = vmatprep.subr.mxu0 0.0
        %1043 = vmatpush2.msra.mxu0 0.0
        %1044 = vmatprep.subr.mxu0 0.0
        %1045 = vmatpush2.msra.mxu0 0.0
        %1046 = vmatprep.subr.mxu0 0.0
        %1047 = vmatpush2.msra.mxu0 0.0
        %1048 = vmatprep.subr.mxu0 0.0
        %1049 = vmatpush2.msra.mxu0 0.0
        %1050 = vmatprep.subr.mxu0 0.0
        %1051 = vmatpush2.msra.mxu0 0.0
        %1052 = vmatprep.subr.mxu0 0.0
        %1053 = vmatpush2.msra.mxu0 0.0
        %1054 = vmatprep.subr.mxu0 0.0
        %1055 = vmatpush2.msra.mxu0 0.0
        %1056 = vmatprep.subr.mxu0 0.0
        %1057 = vmatpush2.msra.mxu0 0.0
        %1058 = vmatprep.subr.mxu0 0.0
        %1059 = vmatpush2.msra.mxu0 0.0
        %1060 = vmatprep.subr.mxu0 0.0
        %1061 = vmatpush2.msra.mxu0 0.0
        %1062 = vmatprep.subr.mxu0 0.0
        %1063 = vmatpush2.msra.mxu0 0.0
        %1064 = vmatprep.subr.mxu0 0.0
        %1065 = vmatpush2.msra.mxu0 0.0
        %1066 = vmatprep.subr.mxu0 0.0
        %1067 = vmatpush2.msra.mxu0 0.0
        %1068 = vmatprep.subr.mxu0 0.0
        %1069 = vmatpush2.msra.mxu0 0.0
        %1070 = vmatprep.subr.mxu0 0.0
        %1071 = vmatpush2.msra.mxu0 0.0
        %1072 = vmatprep.subr.mxu0 0.0
        %1073 = vmatpush2.msra.mxu0 0.0
        %1074 = vmatprep.mubr.f32.mxu0 0.0
        %1075 = vmatmul.mubr.f32.gmra.mxu0 %v1008
        %v1076 = vpop.f32.mrf.mxu0
        %v1077 = vadd.f32 0.0, %v1076
        %v1078 = vpop.f32.mrf.mxu0
        %1079 = vdwg.mxu0
        %v1080 = vadd.f32 %v1004, %v1077
        %v1081 = vxor.u32 %v1080, 2147483648
        %v1082 = vmul.f32 %v1081, 1.442695
        %v1083 = vpow.pop %v1082
        %v1084 = vadd.f32 %v1083, 1.0
        %v1085 = vrcp.pop %v1084
        %v1086 = vmul.f32 1.0, %v1085
        %v1087 = vtanh.pop %v1080
        %v1088 = vmul.f32 %v1086, %v985
        %1090 = vrot.lane.b32.xlu0 %v1087, 64
        %v1091 = vpop.permute.xlu0 %1090
        %v1093 = vmul.f32 %v1086, %v1091
        %1095 = vrot.lane.b32.xlu0 %v1093, 32
        %v1096 = vpop.permute.xlu0 %1095
        %v1098 = vadd.f32 %v1088, %v1096
        %v1099 = vtanh.pop %v1098
        %1101 = vrot.lane.b32.xlu0 %v1099, 64
        %v1102 = vpop.permute.xlu0 %1101
        %v1104 = vmul.f32 %v1086, %v1102
        %s1105 = scalar_lea.vmem %s290, 12
        %v1106 = vld [vmem:[%s1105] sm:$0x3]
        %v1107 = vmul.f32 %v427, %v1106
        %v1108 = vmul.f32 %v429, %v1104
        %1110 = vrot.lane.b32.xlu0 %v1108, 32
        %v1111 = vpop.permute.xlu0 %1110
        %v1113 = vadd.f32 %v1107, %v1111
        %s1114 = scalar_lea.vmem %s305, 12
        %1115 = vst.msk [vmem:[%s1114] sm:$0x3] %vm436, %v1113
        %s1116 = scalar_lea.vmem %s280, 14
        %v1117 = vld [vmem:[%s1116] sm:$0x3]
        %1119 = vrot.lane.b32.xlu0 %v1104, 32
        %v1120 = vpop.permute.xlu0 %1119
        %v1121 = vsel %vm323, %v1120, 0
        %1123 = vmatprep.subr.mxu0 0.0
        %1124 = vmatpush1.msra.mxu0 0.0
        %1125 = vmatprep.subr.mxu0 0.0
        %1126 = vmatpush1.msra.mxu0 0.0
        %1127 = vmatprep.subr.mxu0 0.0
        %1128 = vmatpush1.msra.mxu0 0.0
        %1129 = vmatprep.subr.mxu0 0.0
        %1130 = vmatpush1.msra.mxu0 0.0
        %1131 = vmatprep.subr.mxu0 0.0
        %1132 = vmatpush1.msra.mxu0 0.0
        %1133 = vmatprep.subr.mxu0 0.0
        %1134 = vmatpush1.msra.mxu0 0.0
        %1135 = vmatprep.subr.mxu0 0.0
        %1136 = vmatpush1.msra.mxu0 0.0
        %1137 = vmatprep.subr.mxu0 0.0
        %1138 = vmatpush1.msra.mxu0 0.0
        %1139 = vmatprep.subr.mxu0 0.0
        %1140 = vmatpush1.msra.mxu0 0.0
        %1141 = vmatprep.subr.mxu0 0.0
        %1142 = vmatpush1.msra.mxu0 0.0
        %1143 = vmatprep.subr.mxu0 0.0
        %1144 = vmatpush1.msra.mxu0 0.0
        %1145 = vmatprep.subr.mxu0 0.0
        %1146 = vmatpush1.msra.mxu0 0.0
        %1147 = vmatprep.subr.mxu0 0.0
        %1148 = vmatpush1.msra.mxu0 %v319
        %1149 = vmatprep.subr.mxu0 0.0
        %1150 = vmatpush1.msra.mxu0 %v318
        %1151 = vmatprep.subr.mxu0 0.0
        %1152 = vmatpush1.msra.mxu0 %v317
        %1153 = vmatprep.subr.mxu0 0.0
        %1154 = vmatpush1.msra.mxu0 %v316
        %1155 = vmatprep.subr.mxu0 0.0
        %1156 = vmatpush2.msra.mxu0 0.0
        %1157 = vmatprep.subr.mxu0 0.0
        %1158 = vmatpush2.msra.mxu0 0.0
        %1159 = vmatprep.subr.mxu0 0.0
        %1160 = vmatpush2.msra.mxu0 0.0
        %1161 = vmatprep.subr.mxu0 0.0
        %1162 = vmatpush2.msra.mxu0 0.0
        %1163 = vmatprep.subr.mxu0 0.0
        %1164 = vmatpush2.msra.mxu0 0.0
        %1165 = vmatprep.subr.mxu0 0.0
        %1166 = vmatpush2.msra.mxu0 0.0
        %1167 = vmatprep.subr.mxu0 0.0
        %1168 = vmatpush2.msra.mxu0 0.0
        %1169 = vmatprep.subr.mxu0 0.0
        %1170 = vmatpush2.msra.mxu0 0.0
        %1171 = vmatprep.subr.mxu0 0.0
        %1172 = vmatpush2.msra.mxu0 0.0
        %1173 = vmatprep.subr.mxu0 0.0
        %1174 = vmatpush2.msra.mxu0 0.0
        %1175 = vmatprep.subr.mxu0 0.0
        %1176 = vmatpush2.msra.mxu0 0.0
        %1177 = vmatprep.subr.mxu0 0.0
        %1178 = vmatpush2.msra.mxu0 0.0
        %1179 = vmatprep.subr.mxu0 0.0
        %1180 = vmatpush2.msra.mxu0 0.0
        %1181 = vmatprep.subr.mxu0 0.0
        %1182 = vmatpush2.msra.mxu0 0.0
        %1183 = vmatprep.subr.mxu0 0.0
        %1184 = vmatpush2.msra.mxu0 0.0
        %1185 = vmatprep.subr.mxu0 0.0
        %1186 = vmatpush2.msra.mxu0 0.0
        %1187 = vmatprep.mubr.f32.mxu0 0.0
        %1188 = vmatmul.mubr.f32.gmra.mxu0 %v1121
        %v1189 = vpop.f32.mrf.mxu0
        %v1190 = vadd.f32 0.0, %v1189
        %v1191 = vpop.f32.mrf.mxu0
        %1192 = vdwg.mxu0
        %v1193 = vadd.f32 %v1117, %v1190
        %v1194 = vxor.u32 %v1193, 2147483648
        %v1195 = vmul.f32 %v1194, 1.442695
        %v1196 = vpow.pop %v1195
        %v1197 = vadd.f32 %v1196, 1.0
        %v1198 = vrcp.pop %v1197
        %v1199 = vmul.f32 1.0, %v1198
        %v1200 = vtanh.pop %v1193
        %v1201 = vmul.f32 %v1199, %v1098
        %1203 = vrot.lane.b32.xlu0 %v1200, 64
        %v1204 = vpop.permute.xlu0 %1203
        %v1206 = vmul.f32 %v1199, %v1204
        %1208 = vrot.lane.b32.xlu0 %v1206, 32
        %v1209 = vpop.permute.xlu0 %1208
        %v1211 = vadd.f32 %v1201, %v1209
        %v1212 = vtanh.pop %v1211
        %1214 = vrot.lane.b32.xlu0 %v1212, 64
        %v1215 = vpop.permute.xlu0 %1214
        %v1217 = vmul.f32 %v1199, %v1215
        %s1218 = scalar_lea.vmem %s290, 14
        %v1219 = vld [vmem:[%s1218] sm:$0x3]
        %v1220 = vmul.f32 %v427, %v1219
        %v1221 = vmul.f32 %v429, %v1217
        %1223 = vrot.lane.b32.xlu0 %v1221, 32
        %v1224 = vpop.permute.xlu0 %1223
        %v1226 = vadd.f32 %v1220, %v1224
        %s1227 = scalar_lea.vmem %s305, 14
        %1228 = vst.msk [vmem:[%s1227] sm:$0x3] %vm436, %v1226
        %1230 = vrot.lane.b32.xlu0 %v1217, 32
        %v1231 = vpop.permute.xlu0 %1230
        %1233 = vst.msk [vmem:[#allocation2] sm:$0x3] %vm436, %v1231
        %1235 = vrot.lane.b32.xlu0 %v1211, 96
        %v1236 = vpop.permute.xlu0 %1235
        %1238 = vst.msk [vmem:[#allocation3] sm:$0x3] %vm436, %v1236
        %s1239 = smul.u32 8, %s21
        %p1240 = scmp.lt.s32.totalorder %s20, 1
        %s1241 = scalar_select %p1240, %s20, 1
        %p1242 = scmp.lt.s32.totalorder %s1239, 7
        %s1243 = scalar_select %p1242, %s1239, 7
        %s1244 = smul.addr %s1241, 8
        %s1245 = sadd.s32 %s1243, %s1244
        %s1246 = smul.addr %s1245, 2
        %s1247 = scalar_lea.vmem %s4, %s1246
        // Predicated region
        $region45: #{elmo_embedding_forward.3} parent=35 // pred_check
          %p1248 = pneg %p151
        $region46: #{elmo_embedding_forward.3} parent=35 // pred_check_branch
          %1250 = sbr.rel (%p1248) target = $region48
        $region47: #{elmo_embedding_forward.3} parent=35 // pred_region
          %s1251 = smul.u32 8, %s21
        $region48: #{elmo_embedding_forward.3} parent=35 // pred_fallthru
          _
      $region36: #{elmo_embedding_forward.3} parent=5 // pred_fallthru
        _
      %p1252 = scmp.le.s32.totalorder 2, %s11
      // Predicated region
      $region49: #{elmo_embedding_forward.3} parent=5 // pred_check
        %p1253 = pneg %p1252
      $region50: #{elmo_embedding_forward.3} parent=5 // pred_check_branch
        %1255 = sbr.rel (%p1253) target = $region52
      $region51: #{elmo_embedding_forward.3} parent=5 // pred_region
        %s1256 = ssub.s32 %s11, 2
        // Predicated region
        $region53: #{elmo_embedding_forward.3} parent=51 // pred_check
          %p1257 = pneg %p157
        $region54: #{elmo_embedding_forward.3} parent=51 // pred_check_branch
          %1259 = sbr.rel (%p1257) target = $region56
        $region55: #{elmo_embedding_forward.3} parent=51 // pred_region
          %s1260 = smul.u32 8, %s23
          %p1261 = scmp.lt.s32.totalorder %s22, 1
          %s1262 = scalar_select %p1261, %s22, 1
          %p1263 = scmp.lt.s32.totalorder %s1260, 7
          %s1264 = scalar_select %p1263, %s1260, 7
          %s1265 = smul.addr %s1262, 8
          %s1266 = sadd.s32 %s1264, %s1265
          %s1267 = smul.addr %s1266, 2
          %s1268 = scalar_lea.vmem %s4, %s1267
        $region56: #{elmo_embedding_forward.3} parent=51 // pred_fallthru
          _
      $region52: #{elmo_embedding_forward.3} parent=5 // pred_fallthru
        _
    $region6: #{elmo_embedding_forward.3} parent=1 // loop_footer
      %s15 = sadd.s32 1, %s11
    $region7: #{elmo_embedding_forward.3} parent=1 // loop_footer_branch
      %10 = sbr.rel target = $region3
    $region8: #{elmo_embedding_forward.3} parent=1 // loop_exit
      _
    %1269 = vsyncpa [#allocation5], 1
    %s1270 = scalar_lea.sflag [#allocation5], 1
    %1271 = vsyncpa %s1270, 1

// kernel: elmo_embedding_forward.2
$region0: #{elmo_embedding_forward.2}
  #allocation0 [shape = 'u32[]', space=smem, size = 0x4, offset = 0x4, fixed_abs, tag = 'smem constant byte address 0x4 - core index']
  #allocation1 [shape = 'u32[144,128]{1,0:T(1,128)}', space=vmem, size = 0x12000, scoped, tag = 'internal scratch']
  %s0 = inlined_call_operand.vmem [shape: bf16[768,48], index: 0, kind: input, shape index: {}]
  %s1 = inlined_call_operand.vmem [shape: bf16[48,128], index: 1, kind: input, shape index: {}]
  %s2 = inlined_call_operand.vmem [shape: f32[1,128], index: 2, kind: input, shape index: {}]
  %s3 = inlined_call_operand.vmem [shape: bf16[128,128], index: 3, kind: input, shape index: {}]
  %s4 = inlined_call_operand.vmem [shape: f32[1,128], index: 4, kind: input, shape index: {}]
  %s5 = inlined_call_operand.vmem [shape: bf16[128,128], index: 5, kind: input, shape index: {}]
  %s6 = inlined_call_operand.vmem [shape: f32[1,128], index: 6, kind: input, shape index: {}]
  %s7 = inlined_call_operand.vmem [shape: bf16[128,32], index: 7, kind: input, shape index: {}]
  %s8 = inlined_call_operand.vmem [shape: f32[1,32], index: 8, kind: input, shape index: {}]
  %s9 = inlined_call_operand.vmem [shape: bf16[128,128], index: 9, kind: input, shape index: {}]
  %s10 = inlined_call_operand.vmem [shape: f32[1,128], index: 10, kind: input, shape index: {}]
  %s11 = inlined_call_operand.vmem [shape: bf16[128,128], index: 11, kind: input, shape index: {}]
  %s12 = inlined_call_operand.vmem [shape: f32[1,128], index: 12, kind: input, shape index: {}]
  %s13 = inlined_call_operand.vmem [shape: f32[16,32], index: 13, kind: output, shape index: {0}]
  %s14 = inlined_call_operand.vmem [shape: f32[16,128], index: 14, kind: output, shape index: {1}]
  %s15 = inlined_call_operand.vmem [shape: f32[16,128], index: 15, kind: output, shape index: {2}]
  %16 = xla_tuple %s13, %s14, %s15
  %s17 = sld [smem:[#allocation0]]
  $region78: #{elmo_embedding_forward.2} parent=0
    _
  %s19 = ssub.s32 1, %s17
  %s20 = scalar_select 0, %s19, %s17
  // Predicated region
  $region2: #{elmo_embedding_forward.2} parent=0 // pred_check
    _
  $region3: #{elmo_embedding_forward.2} parent=0 // pred_check_branch
    %22 = sbr.rel (0) target = $region5
  $region4: #{elmo_embedding_forward.2} parent=0 // pred_region
    _
  $region5: #{elmo_embedding_forward.2} parent=0 // pred_fallthru
    _
  // Predicated region
  $region6: #{elmo_embedding_forward.2} parent=0 // pred_check
    _
  $region7: #{elmo_embedding_forward.2} parent=0 // pred_check_branch
    %24 = sbr.rel (0) target = $region9
  $region8: #{elmo_embedding_forward.2} parent=0 // pred_region
    _
  $region9: #{elmo_embedding_forward.2} parent=0 // pred_fallthru
    _
  // Predicated region
  $region10: #{elmo_embedding_forward.2} parent=0 // pred_check
    _
  $region11: #{elmo_embedding_forward.2} parent=0 // pred_check_branch
    %26 = sbr.rel (0) target = $region13
  $region12: #{elmo_embedding_forward.2} parent=0 // pred_region
    _
  $region13: #{elmo_embedding_forward.2} parent=0 // pred_fallthru
    _
  // Predicated region
  $region14: #{elmo_embedding_forward.2} parent=0 // pred_check
    _
  $region15: #{elmo_embedding_forward.2} parent=0 // pred_check_branch
    %28 = sbr.rel (0) target = $region17
  $region16: #{elmo_embedding_forward.2} parent=0 // pred_region
    _
  $region17: #{elmo_embedding_forward.2} parent=0 // pred_fallthru
    _
  // Predicated region
  $region18: #{elmo_embedding_forward.2} parent=0 // pred_check
    _
  $region19: #{elmo_embedding_forward.2} parent=0 // pred_check_branch
    %30 = sbr.rel (0) target = $region21
  $region20: #{elmo_embedding_forward.2} parent=0 // pred_region
    _
  $region21: #{elmo_embedding_forward.2} parent=0 // pred_fallthru
    _
  // Predicated region
  $region22: #{elmo_embedding_forward.2} parent=0 // pred_check
    _
  $region23: #{elmo_embedding_forward.2} parent=0 // pred_check_branch
    %32 = sbr.rel (0) target = $region25
  $region24: #{elmo_embedding_forward.2} parent=0 // pred_region
    _
  $region25: #{elmo_embedding_forward.2} parent=0 // pred_fallthru
    _
  // Predicated region
  $region26: #{elmo_embedding_forward.2} parent=0 // pred_check
    _
  $region27: #{elmo_embedding_forward.2} parent=0 // pred_check_branch
    %34 = sbr.rel (0) target = $region29
  $region28: #{elmo_embedding_forward.2} parent=0 // pred_region
    _
  $region29: #{elmo_embedding_forward.2} parent=0 // pred_fallthru
    _
  // Predicated region
  $region30: #{elmo_embedding_forward.2} parent=0 // pred_check
    _
  $region31: #{elmo_embedding_forward.2} parent=0 // pred_check_branch
    %36 = sbr.rel (0) target = $region33
  $region32: #{elmo_embedding_forward.2} parent=0 // pred_region
    _
  $region33: #{elmo_embedding_forward.2} parent=0 // pred_fallthru
    _
  // Predicated region
  $region34: #{elmo_embedding_forward.2} parent=0 // pred_check
    _
  $region35: #{elmo_embedding_forward.2} parent=0 // pred_check_branch
    %38 = sbr.rel (0) target = $region37
  $region36: #{elmo_embedding_forward.2} parent=0 // pred_region
    _
  $region37: #{elmo_embedding_forward.2} parent=0 // pred_fallthru
    _
  // Predicated region
  $region38: #{elmo_embedding_forward.2} parent=0 // pred_check
    _
  $region39: #{elmo_embedding_forward.2} parent=0 // pred_check_branch
    %40 = sbr.rel (0) target = $region41
  $region40: #{elmo_embedding_forward.2} parent=0 // pred_region
    _
  $region41: #{elmo_embedding_forward.2} parent=0 // pred_fallthru
    _
  // Predicated region
  $region42: #{elmo_embedding_forward.2} parent=0 // pred_check
    _
  $region43: #{elmo_embedding_forward.2} parent=0 // pred_check_branch
    %42 = sbr.rel (0) target = $region45
  $region44: #{elmo_embedding_forward.2} parent=0 // pred_region
    _
  $region45: #{elmo_embedding_forward.2} parent=0 // pred_fallthru
    _
  // Predicated region
  $region46: #{elmo_embedding_forward.2} parent=0 // pred_check
    _
  $region47: #{elmo_embedding_forward.2} parent=0 // pred_check_branch
    %44 = sbr.rel (0) target = $region49
  $region48: #{elmo_embedding_forward.2} parent=0 // pred_region
    _
  $region49: #{elmo_embedding_forward.2} parent=0 // pred_fallthru
    _
  // Predicated region
  $region50: #{elmo_embedding_forward.2} parent=0 // pred_check
    _
  $region51: #{elmo_embedding_forward.2} parent=0 // pred_check_branch
    %46 = sbr.rel (0) target = $region53
  $region52: #{elmo_embedding_forward.2} parent=0 // pred_region
    _
  $region53: #{elmo_embedding_forward.2} parent=0 // pred_fallthru
    _
  %v48 = vld [vmem:[%s0] sm:$0xf]
  %v49 = vld [vmem:[%s0 + $0x4] sm:$0xf]
  %v50 = vld [vmem:[%s0 + $0x8] sm:$0xf]
  %v51 = vld [vmem:[%s0 + $0xc] sm:$0xf]
  %v52 = vld [vmem:[%s0 + $0x10] sm:$0xf]
  %v53 = vld [vmem:[%s0 + $0x14] sm:$0xf]
  %v54 = vld [vmem:[%s0 + $0x18] sm:$0xf]
  %v55 = vld [vmem:[%s0 + $0x1c] sm:$0xf]
  %v56 = vld [vmem:[%s0 + $0x20] sm:$0xf]
  %v57 = vld [vmem:[%s0 + $0x24] sm:$0xf]
  %v58 = vld [vmem:[%s0 + $0x28] sm:$0xf]
  %v59 = vld [vmem:[%s0 + $0x2c] sm:$0xf]
  %v60 = vld [vmem:[%s0 + $0x30] sm:$0xf]
  %v61 = vld [vmem:[%s0 + $0x34] sm:$0xf]
  %v62 = vld [vmem:[%s0 + $0x38] sm:$0xf]
  %v63 = vld [vmem:[%s0 + $0x3c] sm:$0xf]
  %v64 = vld [vmem:[%s0 + $0x40] sm:$0xf]
  %v65 = vld [vmem:[%s0 + $0x44] sm:$0xf]
  %v66 = vld [vmem:[%s0 + $0x48] sm:$0xf]
  %v67 = vld [vmem:[%s0 + $0x4c] sm:$0xf]
  %v68 = vld [vmem:[%s0 + $0x50] sm:$0xf]
  %v69 = vld [vmem:[%s0 + $0x54] sm:$0xf]
  %v70 = vld [vmem:[%s0 + $0x58] sm:$0xf]
  %v71 = vld [vmem:[%s0 + $0x5c] sm:$0xf]
  %v72 = vld [vmem:[%s0 + $0x60] sm:$0xf]
  %v73 = vld [vmem:[%s0 + $0x64] sm:$0xf]
  %v74 = vld [vmem:[%s0 + $0x68] sm:$0xf]
  %v75 = vld [vmem:[%s0 + $0x6c] sm:$0xf]
  %v76 = vld [vmem:[%s0 + $0x70] sm:$0xf]
  %v77 = vld [vmem:[%s0 + $0x74] sm:$0xf]
  %v78 = vld [vmem:[%s0 + $0x78] sm:$0xf]
  %v79 = vld [vmem:[%s0 + $0x7c] sm:$0xf]
  %v80 = vld [vmem:[%s0 + $0x80] sm:$0xf]
  %v81 = vld [vmem:[%s0 + $0x84] sm:$0xf]
  %v82 = vld [vmem:[%s0 + $0x88] sm:$0xf]
  %v83 = vld [vmem:[%s0 + $0x8c] sm:$0xf]
  %v84 = vld [vmem:[%s0 + $0x90] sm:$0xf]
  %v85 = vld [vmem:[%s0 + $0x94] sm:$0xf]
  %v86 = vld [vmem:[%s0 + $0x98] sm:$0xf]
  %v87 = vld [vmem:[%s0 + $0x9c] sm:$0xf]
  %v88 = vld [vmem:[%s0 + $0xa0] sm:$0xf]
  %v89 = vld [vmem:[%s0 + $0xa4] sm:$0xf]
  %v90 = vld [vmem:[%s0 + $0xa8] sm:$0xf]
  %v91 = vld [vmem:[%s0 + $0xac] sm:$0xf]
  %v92 = vld [vmem:[%s0 + $0xb0] sm:$0xf]
  %v93 = vld [vmem:[%s0 + $0xb4] sm:$0xf]
  %v94 = vld [vmem:[%s0 + $0xb8] sm:$0xf]
  %v95 = vld [vmem:[%s0 + $0xbc] sm:$0xf]
  %v96 = vld [vmem:[%s0 + $0xc0] sm:$0xf]
  %v97 = vld [vmem:[%s0 + $0xc4] sm:$0xf]
  %v98 = vld [vmem:[%s0 + $0xc8] sm:$0xf]
  %v99 = vld [vmem:[%s0 + $0xcc] sm:$0xf]
  %v100 = vld [vmem:[%s0 + $0xd0] sm:$0xf]
  %v101 = vld [vmem:[%s0 + $0xd4] sm:$0xf]
  %v102 = vld [vmem:[%s0 + $0xd8] sm:$0xf]
  %v103 = vld [vmem:[%s0 + $0xdc] sm:$0xf]
  %v104 = vld [vmem:[%s0 + $0xe0] sm:$0xf]
  %v105 = vld [vmem:[%s0 + $0xe4] sm:$0xf]
  %v106 = vld [vmem:[%s0 + $0xe8] sm:$0xf]
  %v107 = vld [vmem:[%s0 + $0xec] sm:$0xf]
  %v108 = vld [vmem:[%s0 + $0xf0] sm:$0xf]
  %v109 = vld [vmem:[%s0 + $0xf4] sm:$0xf]
  %v110 = vld [vmem:[%s0 + $0xf8] sm:$0xf]
  %v111 = vld [vmem:[%s0 + $0xfc] sm:$0xf]
  %v112 = vld [vmem:[%s0 + $0x100] sm:$0xf]
  %v113 = vld [vmem:[%s0 + $0x104] sm:$0xf]
  %v114 = vld [vmem:[%s0 + $0x108] sm:$0xf]
  %v115 = vld [vmem:[%s0 + $0x10c] sm:$0xf]
  %v116 = vld [vmem:[%s0 + $0x110] sm:$0xf]
  %v117 = vld [vmem:[%s0 + $0x114] sm:$0xf]
  %v118 = vld [vmem:[%s0 + $0x118] sm:$0xf]
  %v119 = vld [vmem:[%s0 + $0x11c] sm:$0xf]
  %v120 = vld [vmem:[%s0 + $0x120] sm:$0xf]
  %v121 = vld [vmem:[%s0 + $0x124] sm:$0xf]
  %v122 = vld [vmem:[%s0 + $0x128] sm:$0xf]
  %v123 = vld [vmem:[%s0 + $0x12c] sm:$0xf]
  %v124 = vld [vmem:[%s0 + $0x130] sm:$0xf]
  %v125 = vld [vmem:[%s0 + $0x134] sm:$0xf]
  %v126 = vld [vmem:[%s0 + $0x138] sm:$0xf]
  %v127 = vld [vmem:[%s0 + $0x13c] sm:$0xf]
  %v128 = vld [vmem:[%s0 + $0x140] sm:$0xf]
  %v129 = vld [vmem:[%s0 + $0x144] sm:$0xf]
  %v130 = vld [vmem:[%s0 + $0x148] sm:$0xf]
  %v131 = vld [vmem:[%s0 + $0x14c] sm:$0xf]
  %v132 = vld [vmem:[%s0 + $0x150] sm:$0xf]
  %v133 = vld [vmem:[%s0 + $0x154] sm:$0xf]
  %v134 = vld [vmem:[%s0 + $0x158] sm:$0xf]
  %v135 = vld [vmem:[%s0 + $0x15c] sm:$0xf]
  %v136 = vld [vmem:[%s0 + $0x160] sm:$0xf]
  %v137 = vld [vmem:[%s0 + $0x164] sm:$0xf]
  %v138 = vld [vmem:[%s0 + $0x168] sm:$0xf]
  %v139 = vld [vmem:[%s0 + $0x16c] sm:$0xf]
  %v140 = vld [vmem:[%s0 + $0x170] sm:$0xf]
  %v141 = vld [vmem:[%s0 + $0x174] sm:$0xf]
  %v142 = vld [vmem:[%s0 + $0x178] sm:$0xf]
  %v143 = vld [vmem:[%s0 + $0x17c] sm:$0xf]
  %v144 = vld [vmem:[%s1] sm:$0xf]
  %v145 = vld [vmem:[%s1 + $0x4] sm:$0xf]
  %v146 = vld [vmem:[%s1 + $0x8] sm:$0xf]
  %v147 = vld [vmem:[%s1 + $0xc] sm:$0xf]
  %v148 = vld [vmem:[%s1 + $0x10] sm:$0xf]
  %v149 = vld [vmem:[%s1 + $0x14] sm:$0xf]
  %v246 = vunpack.c.l.b16 %v48
  %v247 = vunpack.c.l.b16 %v49
  %v248 = vunpack.c.l.b16 %v50
  %v249 = vunpack.c.l.b16 %v51
  %v250 = vunpack.c.l.b16 %v52
  %v251 = vunpack.c.l.b16 %v53
  %v252 = vunpack.c.l.b16 %v54
  %v253 = vunpack.c.l.b16 %v55
  %v254 = vunpack.c.l.b16 %v56
  %v255 = vunpack.c.l.b16 %v57
  %v256 = vunpack.c.l.b16 %v58
  %v257 = vunpack.c.l.b16 %v59
  %v258 = vunpack.c.l.b16 %v60
  %v259 = vunpack.c.l.b16 %v61
  %v260 = vunpack.c.l.b16 %v62
  %v261 = vunpack.c.l.b16 %v63
  %v262 = vunpack.c.l.b16 %v64
  %v263 = vunpack.c.l.b16 %v65
  %v264 = vunpack.c.l.b16 %v66
  %v265 = vunpack.c.l.b16 %v67
  %v266 = vunpack.c.l.b16 %v68
  %v267 = vunpack.c.l.b16 %v69
  %v268 = vunpack.c.l.b16 %v70
  %v269 = vunpack.c.l.b16 %v71
  %v270 = vunpack.c.l.b16 %v72
  %v271 = vunpack.c.l.b16 %v73
  %v272 = vunpack.c.l.b16 %v74
  %v273 = vunpack.c.l.b16 %v75
  %v274 = vunpack.c.l.b16 %v76
  %v275 = vunpack.c.l.b16 %v77
  %v276 = vunpack.c.l.b16 %v78
  %v277 = vunpack.c.l.b16 %v79
  %v278 = vunpack.c.l.b16 %v80
  %v279 = vunpack.c.l.b16 %v81
  %v280 = vunpack.c.l.b16 %v82
  %v281 = vunpack.c.l.b16 %v83
  %v282 = vunpack.c.l.b16 %v84
  %v283 = vunpack.c.l.b16 %v85
  %v284 = vunpack.c.l.b16 %v86
  %v285 = vunpack.c.l.b16 %v87
  %v286 = vunpack.c.l.b16 %v88
  %v287 = vunpack.c.l.b16 %v89
  %v288 = vunpack.c.l.b16 %v90
  %v289 = vunpack.c.l.b16 %v91
  %v290 = vunpack.c.l.b16 %v92
  %v291 = vunpack.c.l.b16 %v93
  %v292 = vunpack.c.l.b16 %v94
  %v293 = vunpack.c.l.b16 %v95
  %v294 = vunpack.c.l.b16 %v96
  %v295 = vunpack.c.l.b16 %v97
  %v296 = vunpack.c.l.b16 %v98
  %v297 = vunpack.c.l.b16 %v99
  %v298 = vunpack.c.l.b16 %v100
  %v299 = vunpack.c.l.b16 %v101
  %v300 = vunpack.c.l.b16 %v102
  %v301 = vunpack.c.l.b16 %v103
  %v302 = vunpack.c.l.b16 %v104
  %v303 = vunpack.c.l.b16 %v105
  %v304 = vunpack.c.l.b16 %v106
  %v305 = vunpack.c.l.b16 %v107
  %v306 = vunpack.c.l.b16 %v108
  %v307 = vunpack.c.l.b16 %v109
  %v308 = vunpack.c.l.b16 %v110
  %v309 = vunpack.c.l.b16 %v111
  %v310 = vunpack.c.l.b16 %v112
  %v311 = vunpack.c.l.b16 %v113
  %v312 = vunpack.c.l.b16 %v114
  %v313 = vunpack.c.l.b16 %v115
  %v314 = vunpack.c.l.b16 %v116
  %v315 = vunpack.c.l.b16 %v117
  %v316 = vunpack.c.l.b16 %v118
  %v317 = vunpack.c.l.b16 %v119
  %v318 = vunpack.c.l.b16 %v120
  %v319 = vunpack.c.l.b16 %v121
  %v320 = vunpack.c.l.b16 %v122
  %v321 = vunpack.c.l.b16 %v123
  %v322 = vunpack.c.l.b16 %v124
  %v323 = vunpack.c.l.b16 %v125
  %v324 = vunpack.c.l.b16 %v126
  %v325 = vunpack.c.l.b16 %v127
  %v326 = vunpack.c.l.b16 %v128
  %v327 = vunpack.c.l.b16 %v129
  %v328 = vunpack.c.l.b16 %v130
  %v329 = vunpack.c.l.b16 %v131
  %v330 = vunpack.c.l.b16 %v132
  %v331 = vunpack.c.l.b16 %v133
  %v332 = vunpack.c.l.b16 %v134
  %v333 = vunpack.c.l.b16 %v135
  %v334 = vunpack.c.l.b16 %v136
  %v335 = vunpack.c.l.b16 %v137
  %v336 = vunpack.c.l.b16 %v138
  %v337 = vunpack.c.l.b16 %v139
  %v338 = vunpack.c.l.b16 %v140
  %v339 = vunpack.c.l.b16 %v141
  %v340 = vunpack.c.l.b16 %v142
  %v341 = vunpack.c.l.b16 %v143
  %v342 = vpack.c.b16 %v247, %v246
  %v343 = vpack.c.b16 %v249, %v248
  %v344 = vpack.c.b16 %v251, %v250
  %v345 = vpack.c.b16 %v253, %v252
  %v346 = vpack.c.b16 %v255, %v254
  %v347 = vpack.c.b16 %v257, %v256
  %v348 = vpack.c.b16 %v259, %v258
  %v349 = vpack.c.b16 %v261, %v260
  %v350 = vpack.c.b16 %v263, %v262
  %v351 = vpack.c.b16 %v265, %v264
  %v352 = vpack.c.b16 %v267, %v266
  %v353 = vpack.c.b16 %v269, %v268
  %v354 = vpack.c.b16 %v271, %v270
  %v355 = vpack.c.b16 %v273, %v272
  %v356 = vpack.c.b16 %v275, %v274
  %v357 = vpack.c.b16 %v277, %v276
  %v358 = vpack.c.b16 %v279, %v278
  %v359 = vpack.c.b16 %v281, %v280
  %v360 = vpack.c.b16 %v283, %v282
  %v361 = vpack.c.b16 %v285, %v284
  %v362 = vpack.c.b16 %v287, %v286
  %v363 = vpack.c.b16 %v289, %v288
  %v364 = vpack.c.b16 %v291, %v290
  %v365 = vpack.c.b16 %v293, %v292
  %v366 = vpack.c.b16 %v295, %v294
  %v367 = vpack.c.b16 %v297, %v296
  %v368 = vpack.c.b16 %v299, %v298
  %v369 = vpack.c.b16 %v301, %v300
  %v370 = vpack.c.b16 %v303, %v302
  %v371 = vpack.c.b16 %v305, %v304
  %v372 = vpack.c.b16 %v307, %v306
  %v373 = vpack.c.b16 %v309, %v308
  %v374 = vpack.c.b16 %v311, %v310
  %v375 = vpack.c.b16 %v313, %v312
  %v376 = vpack.c.b16 %v315, %v314
  %v377 = vpack.c.b16 %v317, %v316
  %v378 = vpack.c.b16 %v319, %v318
  %v379 = vpack.c.b16 %v321, %v320
  %v380 = vpack.c.b16 %v323, %v322
  %v381 = vpack.c.b16 %v325, %v324
  %v382 = vpack.c.b16 %v327, %v326
  %v383 = vpack.c.b16 %v329, %v328
  %v384 = vpack.c.b16 %v331, %v330
  %v385 = vpack.c.b16 %v333, %v332
  %v386 = vpack.c.b16 %v335, %v334
  %v387 = vpack.c.b16 %v337, %v336
  %v388 = vpack.c.b16 %v339, %v338
  %v389 = vpack.c.b16 %v341, %v340
  %v396 = vunpack.c.l.b16 %v144
  %v397 = vunpack.c.l.b16 %v145
  %v398 = vunpack.c.l.b16 %v146
  %v399 = vunpack.c.l.b16 %v147
  %v400 = vunpack.c.l.b16 %v148
  %v401 = vunpack.c.l.b16 %v149
  %v402 = vpack.c.b16 %v397, %v396
  %v403 = vpack.c.b16 %v399, %v398
  %v404 = vpack.c.b16 %v401, %v400
  %vm408 = vcmask 392192
  %v410 = vsel %vm408, %v342, 0
  %v413 = vsel %vm408, %v343, 0
  %v416 = vsel %vm408, %v344, 0
  %v419 = vsel %vm408, %v345, 0
  %v422 = vsel %vm408, %v346, 0
  %v425 = vsel %vm408, %v347, 0
  %v428 = vsel %vm408, %v348, 0
  %v431 = vsel %vm408, %v349, 0
  %v434 = vsel %vm408, %v350, 0
  %v437 = vsel %vm408, %v351, 0
  %v440 = vsel %vm408, %v352, 0
  %v443 = vsel %vm408, %v353, 0
  %v446 = vsel %vm408, %v354, 0
  %v449 = vsel %vm408, %v355, 0
  %v452 = vsel %vm408, %v356, 0
  %v455 = vsel %vm408, %v357, 0
  %v458 = vsel %vm408, %v358, 0
  %v461 = vsel %vm408, %v359, 0
  %v464 = vsel %vm408, %v360, 0
  %v467 = vsel %vm408, %v361, 0
  %v470 = vsel %vm408, %v362, 0
  %v473 = vsel %vm408, %v363, 0
  %v476 = vsel %vm408, %v364, 0
  %v479 = vsel %vm408, %v365, 0
  %v482 = vsel %vm408, %v366, 0
  %v485 = vsel %vm408, %v367, 0
  %v488 = vsel %vm408, %v368, 0
  %v491 = vsel %vm408, %v369, 0
  %v494 = vsel %vm408, %v370, 0
  %v497 = vsel %vm408, %v371, 0
  %v500 = vsel %vm408, %v372, 0
  %v503 = vsel %vm408, %v373, 0
  %v506 = vsel %vm408, %v374, 0
  %v509 = vsel %vm408, %v375, 0
  %v512 = vsel %vm408, %v376, 0
  %v515 = vsel %vm408, %v377, 0
  %v518 = vsel %vm408, %v378, 0
  %v521 = vsel %vm408, %v379, 0
  %v524 = vsel %vm408, %v380, 0
  %v527 = vsel %vm408, %v381, 0
  %v530 = vsel %vm408, %v382, 0
  %v533 = vsel %vm408, %v383, 0
  %v536 = vsel %vm408, %v384, 0
  %v539 = vsel %vm408, %v385, 0
  %v542 = vsel %vm408, %v386, 0
  %v545 = vsel %vm408, %v387, 0
  %v548 = vsel %vm408, %v388, 0
  %v551 = vsel %vm408, %v389, 0
  %553 = vmatprep.subr.bf16.mxu0 0
  %554 = vmatpush1.bf16.msra.mxu0 0
  %555 = vmatprep.subr.bf16.mxu0 0
  %556 = vmatpush1.bf16.msra.mxu0 0
  %557 = vmatprep.subr.bf16.mxu0 0
  %558 = vmatpush1.bf16.msra.mxu0 0
  %559 = vmatprep.subr.bf16.mxu0 0
  %560 = vmatpush1.bf16.msra.mxu0 0
  %561 = vmatprep.subr.bf16.mxu0 0
  %562 = vmatpush1.bf16.msra.mxu0 0
  %563 = vmatprep.subr.bf16.mxu0 0
  %564 = vmatpush1.bf16.msra.mxu0 %v404
  %565 = vmatprep.subr.bf16.mxu0 0
  %566 = vmatpush1.bf16.msra.mxu0 %v403
  %567 = vmatprep.subr.bf16.mxu0 0
  %568 = vmatpush1.bf16.msra.mxu0 %v402
  %569 = vmatprep.subr.bf16.mxu0 0
  %570 = vmatpush2.bf16.msra.mxu0 0
  %571 = vmatprep.subr.bf16.mxu0 0
  %572 = vmatpush2.bf16.msra.mxu0 0
  %573 = vmatprep.subr.bf16.mxu0 0
  %574 = vmatpush2.bf16.msra.mxu0 0
  %575 = vmatprep.subr.bf16.mxu0 0
  %576 = vmatpush2.bf16.msra.mxu0 0
  %577 = vmatprep.subr.bf16.mxu0 0
  %578 = vmatpush2.bf16.msra.mxu0 0
  %579 = vmatprep.subr.bf16.mxu0 0
  %580 = vmatpush2.bf16.msra.mxu0 0
  %581 = vmatprep.subr.bf16.mxu0 0
  %582 = vmatpush2.bf16.msra.mxu0 0
  %583 = vmatprep.subr.bf16.mxu0 0
  %584 = vmatpush2.bf16.msra.mxu0 0
  %585 = vmatprep.mubr.bf16.mxu0 0
  %586 = vmatmul.mubr.bf16.gmra.mxu0 %v410
  %v587 = vpop.f32.mrf.mxu0
  %v588 = vadd.f32 0.0, %v587
  %v589 = vpop.f32.mrf.mxu0
  %v590 = vpop.f32.mrf.mxu0
  %v591 = vadd.f32 0.0, %v590
  %v592 = vpop.f32.mrf.mxu0
  %593 = vmatprep.mubr.bf16.mxu0 0
  %594 = vmatmul.mubr.bf16.gmra.mxu0 %v413
  %v595 = vpop.f32.mrf.mxu0
  %v596 = vadd.f32 0.0, %v595
  %v597 = vpop.f32.mrf.mxu0
  %v598 = vpop.f32.mrf.mxu0
  %v599 = vadd.f32 0.0, %v598
  %v600 = vpop.f32.mrf.mxu0
  %601 = vmatprep.mubr.bf16.mxu0 0
  %602 = vmatmul.mubr.bf16.gmra.mxu0 %v416
  %v603 = vpop.f32.mrf.mxu0
  %v604 = vadd.f32 0.0, %v603
  %v605 = vpop.f32.mrf.mxu0
  %v606 = vpop.f32.mrf.mxu0
  %v607 = vadd.f32 0.0, %v606
  %v608 = vpop.f32.mrf.mxu0
  %609 = vmatprep.mubr.bf16.mxu0 0
  %610 = vmatmul.mubr.bf16.gmra.mxu0 %v419
  %v611 = vpop.f32.mrf.mxu0
  %v612 = vadd.f32 0.0, %v611
  %v613 = vpop.f32.mrf.mxu0
  %v614 = vpop.f32.mrf.mxu0
  %v615 = vadd.f32 0.0, %v614
  %v616 = vpop.f32.mrf.mxu0
  %617 = vmatprep.mubr.bf16.mxu0 0
  %618 = vmatmul.mubr.bf16.gmra.mxu0 %v422
  %v619 = vpop.f32.mrf.mxu0
  %v620 = vadd.f32 0.0, %v619
  %v621 = vpop.f32.mrf.mxu0
  %v622 = vpop.f32.mrf.mxu0
  %v623 = vadd.f32 0.0, %v622
  %v624 = vpop.f32.mrf.mxu0
  %625 = vmatprep.mubr.bf16.mxu0 0
  %626 = vmatmul.mubr.bf16.gmra.mxu0 %v425
  %v627 = vpop.f32.mrf.mxu0
  %v628 = vadd.f32 0.0, %v627
  %v629 = vpop.f32.mrf.mxu0
  %v630 = vpop.f32.mrf.mxu0
  %v631 = vadd.f32 0.0, %v630
  %v632 = vpop.f32.mrf.mxu0
  %633 = vmatprep.mubr.bf16.mxu0 0
  %634 = vmatmul.mubr.bf16.gmra.mxu0 %v428
  %v635 = vpop.f32.mrf.mxu0
  %v636 = vadd.f32 0.0, %v635
  %v637 = vpop.f32.mrf.mxu0
  %v638 = vpop.f32.mrf.mxu0
  %v639 = vadd.f32 0.0, %v638
  %v640 = vpop.f32.mrf.mxu0
  %641 = vmatprep.mubr.bf16.mxu0 0
  %642 = vmatmul.mubr.bf16.gmra.mxu0 %v431
  %v643 = vpop.f32.mrf.mxu0
  %v644 = vadd.f32 0.0, %v643
  %v645 = vpop.f32.mrf.mxu0
  %v646 = vpop.f32.mrf.mxu0
  %v647 = vadd.f32 0.0, %v646
  %v648 = vpop.f32.mrf.mxu0
  %649 = vmatprep.mubr.bf16.mxu0 0
  %650 = vmatmul.mubr.bf16.gmra.mxu0 %v434
  %v651 = vpop.f32.mrf.mxu0
  %v652 = vadd.f32 0.0, %v651
  %v653 = vpop.f32.mrf.mxu0
  %v654 = vpop.f32.mrf.mxu0
  %v655 = vadd.f32 0.0, %v654
  %v656 = vpop.f32.mrf.mxu0
  %657 = vmatprep.mubr.bf16.mxu0 0
  %658 = vmatmul.mubr.bf16.gmra.mxu0 %v437
  %v659 = vpop.f32.mrf.mxu0
  %v660 = vadd.f32 0.0, %v659
  %v661 = vpop.f32.mrf.mxu0
  %v662 = vpop.f32.mrf.mxu0
  %v663 = vadd.f32 0.0, %v662
  %v664 = vpop.f32.mrf.mxu0
  %665 = vmatprep.mubr.bf16.mxu0 0
  %666 = vmatmul.mubr.bf16.gmra.mxu0 %v440
  %v667 = vpop.f32.mrf.mxu0
  %v668 = vadd.f32 0.0, %v667
  %v669 = vpop.f32.mrf.mxu0
  %v670 = vpop.f32.mrf.mxu0
  %v671 = vadd.f32 0.0, %v670
  %v672 = vpop.f32.mrf.mxu0
  %673 = vmatprep.mubr.bf16.mxu0 0
  %674 = vmatmul.mubr.bf16.gmra.mxu0 %v443
  %v675 = vpop.f32.mrf.mxu0
  %v676 = vadd.f32 0.0, %v675
  %v677 = vpop.f32.mrf.mxu0
  %v678 = vpop.f32.mrf.mxu0
  %v679 = vadd.f32 0.0, %v678
  %v680 = vpop.f32.mrf.mxu0
  %681 = vmatprep.mubr.bf16.mxu0 0
  %682 = vmatmul.mubr.bf16.gmra.mxu0 %v446
  %v683 = vpop.f32.mrf.mxu0
  %v684 = vadd.f32 0.0, %v683
  %v685 = vpop.f32.mrf.mxu0
  %v686 = vpop.f32.mrf.mxu0
  %v687 = vadd.f32 0.0, %v686
  %v688 = vpop.f32.mrf.mxu0
  %689 = vmatprep.mubr.bf16.mxu0 0
  %690 = vmatmul.mubr.bf16.gmra.mxu0 %v449
  %v691 = vpop.f32.mrf.mxu0
  %v692 = vadd.f32 0.0, %v691
  %v693 = vpop.f32.mrf.mxu0
  %v694 = vpop.f32.mrf.mxu0
  %v695 = vadd.f32 0.0, %v694
  %v696 = vpop.f32.mrf.mxu0
  %697 = vmatprep.mubr.bf16.mxu0 0
  %698 = vmatmul.mubr.bf16.gmra.mxu0 %v452
  %v699 = vpop.f32.mrf.mxu0
  %v700 = vadd.f32 0.0, %v699
  %v701 = vpop.f32.mrf.mxu0
  %v702 = vpop.f32.mrf.mxu0
  %v703 = vadd.f32 0.0, %v702
  %v704 = vpop.f32.mrf.mxu0
  %705 = vmatprep.mubr.bf16.mxu0 0
  %706 = vmatmul.mubr.bf16.gmra.mxu0 %v455
  %v707 = vpop.f32.mrf.mxu0
  %v708 = vadd.f32 0.0, %v707
  %v709 = vpop.f32.mrf.mxu0
  %v710 = vpop.f32.mrf.mxu0
  %v711 = vadd.f32 0.0, %v710
  %v712 = vpop.f32.mrf.mxu0
  %713 = vmatprep.mubr.bf16.mxu0 0
  %714 = vmatmul.mubr.bf16.gmra.mxu0 %v458
  %v715 = vpop.f32.mrf.mxu0
  %v716 = vadd.f32 0.0, %v715
  %v717 = vpop.f32.mrf.mxu0
  %v718 = vpop.f32.mrf.mxu0
  %v719 = vadd.f32 0.0, %v718
  %v720 = vpop.f32.mrf.mxu0
  %721 = vmatprep.mubr.bf16.mxu0 0
  %722 = vmatmul.mubr.bf16.gmra.mxu0 %v461
  %v723 = vpop.f32.mrf.mxu0
  %v724 = vadd.f32 0.0, %v723
  %v725 = vpop.f32.mrf.mxu0
  %v726 = vpop.f32.mrf.mxu0
  %v727 = vadd.f32 0.0, %v726
  %v728 = vpop.f32.mrf.mxu0
  %729 = vmatprep.mubr.bf16.mxu0 0
  %730 = vmatmul.mubr.bf16.gmra.mxu0 %v464
  %v731 = vpop.f32.mrf.mxu0
  %v732 = vadd.f32 0.0, %v731
  %v733 = vpop.f32.mrf.mxu0
  %v734 = vpop.f32.mrf.mxu0
  %v735 = vadd.f32 0.0, %v734
  %v736 = vpop.f32.mrf.mxu0
  %737 = vmatprep.mubr.bf16.mxu0 0
  %738 = vmatmul.mubr.bf16.gmra.mxu0 %v467
  %v739 = vpop.f32.mrf.mxu0
  %v740 = vadd.f32 0.0, %v739
  %v741 = vpop.f32.mrf.mxu0
  %v742 = vpop.f32.mrf.mxu0
  %v743 = vadd.f32 0.0, %v742
  %v744 = vpop.f32.mrf.mxu0
  %745 = vmatprep.mubr.bf16.mxu0 0
  %746 = vmatmul.mubr.bf16.gmra.mxu0 %v470
  %v747 = vpop.f32.mrf.mxu0
  %v748 = vadd.f32 0.0, %v747
  %v749 = vpop.f32.mrf.mxu0
  %v750 = vpop.f32.mrf.mxu0
  %v751 = vadd.f32 0.0, %v750
  %v752 = vpop.f32.mrf.mxu0
  %753 = vmatprep.mubr.bf16.mxu0 0
  %754 = vmatmul.mubr.bf16.gmra.mxu0 %v473
  %v755 = vpop.f32.mrf.mxu0
  %v756 = vadd.f32 0.0, %v755
  %v757 = vpop.f32.mrf.mxu0
  %v758 = vpop.f32.mrf.mxu0
  %v759 = vadd.f32 0.0, %v758
  %v760 = vpop.f32.mrf.mxu0
  %761 = vmatprep.mubr.bf16.mxu0 0
  %762 = vmatmul.mubr.bf16.gmra.mxu0 %v476
  %v763 = vpop.f32.mrf.mxu0
  %v764 = vadd.f32 0.0, %v763
  %v765 = vpop.f32.mrf.mxu0
  %v766 = vpop.f32.mrf.mxu0
  %v767 = vadd.f32 0.0, %v766
  %v768 = vpop.f32.mrf.mxu0
  %769 = vmatprep.mubr.bf16.mxu0 0
  %770 = vmatmul.mubr.bf16.gmra.mxu0 %v479
  %v771 = vpop.f32.mrf.mxu0
  %v772 = vadd.f32 0.0, %v771
  %v773 = vpop.f32.mrf.mxu0
  %v774 = vpop.f32.mrf.mxu0
  %v775 = vadd.f32 0.0, %v774
  %v776 = vpop.f32.mrf.mxu0
  %777 = vmatprep.mubr.bf16.mxu0 0
  %778 = vmatmul.mubr.bf16.gmra.mxu0 %v482
  %v779 = vpop.f32.mrf.mxu0
  %v780 = vadd.f32 0.0, %v779
  %v781 = vpop.f32.mrf.mxu0
  %v782 = vpop.f32.mrf.mxu0
  %v783 = vadd.f32 0.0, %v782
  %v784 = vpop.f32.mrf.mxu0
  %785 = vmatprep.mubr.bf16.mxu0 0
  %786 = vmatmul.mubr.bf16.gmra.mxu0 %v485
  %v787 = vpop.f32.mrf.mxu0
  %v788 = vadd.f32 0.0, %v787
  %v789 = vpop.f32.mrf.mxu0
  %v790 = vpop.f32.mrf.mxu0
  %v791 = vadd.f32 0.0, %v790
  %v792 = vpop.f32.mrf.mxu0
  %793 = vmatprep.mubr.bf16.mxu0 0
  %794 = vmatmul.mubr.bf16.gmra.mxu0 %v488
  %v795 = vpop.f32.mrf.mxu0
  %v796 = vadd.f32 0.0, %v795
  %v797 = vpop.f32.mrf.mxu0
  %v798 = vpop.f32.mrf.mxu0
  %v799 = vadd.f32 0.0, %v798
  %v800 = vpop.f32.mrf.mxu0
  %801 = vmatprep.mubr.bf16.mxu0 0
  %802 = vmatmul.mubr.bf16.gmra.mxu0 %v491
  %v803 = vpop.f32.mrf.mxu0
  %v804 = vadd.f32 0.0, %v803
  %v805 = vpop.f32.mrf.mxu0
  %v806 = vpop.f32.mrf.mxu0
  %v807 = vadd.f32 0.0, %v806
  %v808 = vpop.f32.mrf.mxu0
  %809 = vmatprep.mubr.bf16.mxu0 0
  %810 = vmatmul.mubr.bf16.gmra.mxu0 %v494
  %v811 = vpop.f32.mrf.mxu0
  %v812 = vadd.f32 0.0, %v811
  %v813 = vpop.f32.mrf.mxu0
  %v814 = vpop.f32.mrf.mxu0
  %v815 = vadd.f32 0.0, %v814
  %v816 = vpop.f32.mrf.mxu0
  %817 = vmatprep.mubr.bf16.mxu0 0
  %818 = vmatmul.mubr.bf16.gmra.mxu0 %v497
  %v819 = vpop.f32.mrf.mxu0
  %v820 = vadd.f32 0.0, %v819
  %v821 = vpop.f32.mrf.mxu0
  %v822 = vpop.f32.mrf.mxu0
  %v823 = vadd.f32 0.0, %v822
  %v824 = vpop.f32.mrf.mxu0
  %825 = vmatprep.mubr.bf16.mxu0 0
  %826 = vmatmul.mubr.bf16.gmra.mxu0 %v500
  %v827 = vpop.f32.mrf.mxu0
  %v828 = vadd.f32 0.0, %v827
  %v829 = vpop.f32.mrf.mxu0
  %v830 = vpop.f32.mrf.mxu0
  %v831 = vadd.f32 0.0, %v830
  %v832 = vpop.f32.mrf.mxu0
  %833 = vmatprep.mubr.bf16.mxu0 0
  %834 = vmatmul.mubr.bf16.gmra.mxu0 %v503
  %v835 = vpop.f32.mrf.mxu0
  %v836 = vadd.f32 0.0, %v835
  %v837 = vpop.f32.mrf.mxu0
  %v838 = vpop.f32.mrf.mxu0
  %v839 = vadd.f32 0.0, %v838
  %v840 = vpop.f32.mrf.mxu0
  %841 = vmatprep.mubr.bf16.mxu0 0
  %842 = vmatmul.mubr.bf16.gmra.mxu0 %v506
  %v843 = vpop.f32.mrf.mxu0
  %v844 = vadd.f32 0.0, %v843
  %v845 = vpop.f32.mrf.mxu0
  %v846 = vpop.f32.mrf.mxu0
  %v847 = vadd.f32 0.0, %v846
  %v848 = vpop.f32.mrf.mxu0
  %849 = vmatprep.mubr.bf16.mxu0 0
  %850 = vmatmul.mubr.bf16.gmra.mxu0 %v509
  %v851 = vpop.f32.mrf.mxu0
  %v852 = vadd.f32 0.0, %v851
  %v853 = vpop.f32.mrf.mxu0
  %v854 = vpop.f32.mrf.mxu0
  %v855 = vadd.f32 0.0, %v854
  %v856 = vpop.f32.mrf.mxu0
  %857 = vmatprep.mubr.bf16.mxu0 0
  %858 = vmatmul.mubr.bf16.gmra.mxu0 %v512
  %v859 = vpop.f32.mrf.mxu0
  %v860 = vadd.f32 0.0, %v859
  %v861 = vpop.f32.mrf.mxu0
  %v862 = vpop.f32.mrf.mxu0
  %v863 = vadd.f32 0.0, %v862
  %v864 = vpop.f32.mrf.mxu0
  %865 = vmatprep.mubr.bf16.mxu0 0
  %866 = vmatmul.mubr.bf16.gmra.mxu0 %v515
  %v867 = vpop.f32.mrf.mxu0
  %v868 = vadd.f32 0.0, %v867
  %v869 = vpop.f32.mrf.mxu0
  %v870 = vpop.f32.mrf.mxu0
  %v871 = vadd.f32 0.0, %v870
  %v872 = vpop.f32.mrf.mxu0
  %873 = vmatprep.mubr.bf16.mxu0 0
  %874 = vmatmul.mubr.bf16.gmra.mxu0 %v518
  %v875 = vpop.f32.mrf.mxu0
  %v876 = vadd.f32 0.0, %v875
  %v877 = vpop.f32.mrf.mxu0
  %v878 = vpop.f32.mrf.mxu0
  %v879 = vadd.f32 0.0, %v878
  %v880 = vpop.f32.mrf.mxu0
  %881 = vmatprep.mubr.bf16.mxu0 0
  %882 = vmatmul.mubr.bf16.gmra.mxu0 %v521
  %v883 = vpop.f32.mrf.mxu0
  %v884 = vadd.f32 0.0, %v883
  %v885 = vpop.f32.mrf.mxu0
  %v886 = vpop.f32.mrf.mxu0
  %v887 = vadd.f32 0.0, %v886
  %v888 = vpop.f32.mrf.mxu0
  %889 = vmatprep.mubr.bf16.mxu0 0
  %890 = vmatmul.mubr.bf16.gmra.mxu0 %v524
  %v891 = vpop.f32.mrf.mxu0
  %v892 = vadd.f32 0.0, %v891
  %v893 = vpop.f32.mrf.mxu0
  %v894 = vpop.f32.mrf.mxu0
  %v895 = vadd.f32 0.0, %v894
  %v896 = vpop.f32.mrf.mxu0
  %897 = vmatprep.mubr.bf16.mxu0 0
  %898 = vmatmul.mubr.bf16.gmra.mxu0 %v527
  %v899 = vpop.f32.mrf.mxu0
  %v900 = vadd.f32 0.0, %v899
  %v901 = vpop.f32.mrf.mxu0
  %v902 = vpop.f32.mrf.mxu0
  %v903 = vadd.f32 0.0, %v902
  %v904 = vpop.f32.mrf.mxu0
  %905 = vmatprep.mubr.bf16.mxu0 0
  %906 = vmatmul.mubr.bf16.gmra.mxu0 %v530
  %v907 = vpop.f32.mrf.mxu0
  %v908 = vadd.f32 0.0, %v907
  %v909 = vpop.f32.mrf.mxu0
  %v910 = vpop.f32.mrf.mxu0
  %v911 = vadd.f32 0.0, %v910
  %v912 = vpop.f32.mrf.mxu0
  %913 = vmatprep.mubr.bf16.mxu0 0
  %914 = vmatmul.mubr.bf16.gmra.mxu0 %v533
  %v915 = vpop.f32.mrf.mxu0
  %v916 = vadd.f32 0.0, %v915
  %v917 = vpop.f32.mrf.mxu0
  %v918 = vpop.f32.mrf.mxu0
  %v919 = vadd.f32 0.0, %v918
  %v920 = vpop.f32.mrf.mxu0
  %921 = vmatprep.mubr.bf16.mxu0 0
  %922 = vmatmul.mubr.bf16.gmra.mxu0 %v536
  %v923 = vpop.f32.mrf.mxu0
  %v924 = vadd.f32 0.0, %v923
  %v925 = vpop.f32.mrf.mxu0
  %v926 = vpop.f32.mrf.mxu0
  %v927 = vadd.f32 0.0, %v926
  %v928 = vpop.f32.mrf.mxu0
  %929 = vmatprep.mubr.bf16.mxu0 0
  %930 = vmatmul.mubr.bf16.gmra.mxu0 %v539
  %v931 = vpop.f32.mrf.mxu0
  %v932 = vadd.f32 0.0, %v931
  %v933 = vpop.f32.mrf.mxu0
  %v934 = vpop.f32.mrf.mxu0
  %v935 = vadd.f32 0.0, %v934
  %v936 = vpop.f32.mrf.mxu0
  %937 = vmatprep.mubr.bf16.mxu0 0
  %938 = vmatmul.mubr.bf16.gmra.mxu0 %v542
  %v939 = vpop.f32.mrf.mxu0
  %v940 = vadd.f32 0.0, %v939
  %v941 = vpop.f32.mrf.mxu0
  %v942 = vpop.f32.mrf.mxu0
  %v943 = vadd.f32 0.0, %v942
  %v944 = vpop.f32.mrf.mxu0
  %945 = vmatprep.mubr.bf16.mxu0 0
  %946 = vmatmul.mubr.bf16.gmra.mxu0 %v545
  %v947 = vpop.f32.mrf.mxu0
  %v948 = vadd.f32 0.0, %v947
  %v949 = vpop.f32.mrf.mxu0
  %v950 = vpop.f32.mrf.mxu0
  %v951 = vadd.f32 0.0, %v950
  %v952 = vpop.f32.mrf.mxu0
  %953 = vmatprep.mubr.bf16.mxu0 0
  %954 = vmatmul.mubr.bf16.gmra.mxu0 %v548
  %v955 = vpop.f32.mrf.mxu0
  %v956 = vadd.f32 0.0, %v955
  %v957 = vpop.f32.mrf.mxu0
  %v958 = vpop.f32.mrf.mxu0
  %v959 = vadd.f32 0.0, %v958
  %v960 = vpop.f32.mrf.mxu0
  %961 = vmatprep.mubr.bf16.mxu0 0
  %962 = vmatmul.mubr.bf16.gmra.mxu0 %v551
  %v963 = vpop.f32.mrf.mxu0
  %v964 = vadd.f32 0.0, %v963
  %v965 = vpop.f32.mrf.mxu0
  %v966 = vpop.f32.mrf.mxu0
  %v967 = vadd.f32 0.0, %v966
  %v968 = vpop.f32.mrf.mxu0
  %969 = vdwg.mxu0
  %v970 = vmax.f32 %v588, %v591
  %v971 = vmax.f32 %v970, %v596
  %v972 = vmax.f32 %v971, %v599
  %v973 = vmax.f32 %v972, %v604
  %v974 = vmax.f32 %v973, %v607
  %v975 = vrot.slane %v974, 4
  %v976 = vmax.f32 %v974, %v975
  %v977 = vrot.slane %v976, 2
  %v978 = vmax.f32 %v976, %v977
  %v979 = vrot.slane %v978, 1
  %v980 = vmax.f32 %v978, %v979
  %v981 = vmax.f32 %v612, %v615
  %v982 = vmax.f32 %v981, %v620
  %v983 = vmax.f32 %v982, %v623
  %v984 = vmax.f32 %v983, %v628
  %v985 = vmax.f32 %v984, %v631
  %v986 = vrot.slane %v985, 4
  %v987 = vmax.f32 %v985, %v986
  %v988 = vrot.slane %v987, 2
  %v989 = vmax.f32 %v987, %v988
  %v990 = vrot.slane %v989, 1
  %v991 = vmax.f32 %v989, %v990
  %v992 = vmax.f32 %v636, %v639
  %v993 = vmax.f32 %v992, %v644
  %v994 = vmax.f32 %v993, %v647
  %v995 = vmax.f32 %v994, %v652
  %v996 = vmax.f32 %v995, %v655
  %v997 = vrot.slane %v996, 4
  %v998 = vmax.f32 %v996, %v997
  %v999 = vrot.slane %v998, 2
  %v1000 = vmax.f32 %v998, %v999
  %v1001 = vrot.slane %v1000, 1
  %v1002 = vmax.f32 %v1000, %v1001
  %v1003 = vmax.f32 %v660, %v663
  %v1004 = vmax.f32 %v1003, %v668
  %v1005 = vmax.f32 %v1004, %v671
  %v1006 = vmax.f32 %v1005, %v676
  %v1007 = vmax.f32 %v1006, %v679
  %v1008 = vrot.slane %v1007, 4
  %v1009 = vmax.f32 %v1007, %v1008
  %v1010 = vrot.slane %v1009, 2
  %v1011 = vmax.f32 %v1009, %v1010
  %v1012 = vrot.slane %v1011, 1
  %v1013 = vmax.f32 %v1011, %v1012
  %v1014 = vmax.f32 %v684, %v687
  %v1015 = vmax.f32 %v1014, %v692
  %v1016 = vmax.f32 %v1015, %v695
  %v1017 = vmax.f32 %v1016, %v700
  %v1018 = vmax.f32 %v1017, %v703
  %v1019 = vrot.slane %v1018, 4
  %v1020 = vmax.f32 %v1018, %v1019
  %v1021 = vrot.slane %v1020, 2
  %v1022 = vmax.f32 %v1020, %v1021
  %v1023 = vrot.slane %v1022, 1
  %v1024 = vmax.f32 %v1022, %v1023
  %v1025 = vmax.f32 %v708, %v711
  %v1026 = vmax.f32 %v1025, %v716
  %v1027 = vmax.f32 %v1026, %v719
  %v1028 = vmax.f32 %v1027, %v724
  %v1029 = vmax.f32 %v1028, %v727
  %v1030 = vrot.slane %v1029, 4
  %v1031 = vmax.f32 %v1029, %v1030
  %v1032 = vrot.slane %v1031, 2
  %v1033 = vmax.f32 %v1031, %v1032
  %v1034 = vrot.slane %v1033, 1
  %v1035 = vmax.f32 %v1033, %v1034
  %v1036 = vmax.f32 %v732, %v735
  %v1037 = vmax.f32 %v1036, %v740
  %v1038 = vmax.f32 %v1037, %v743
  %v1039 = vmax.f32 %v1038, %v748
  %v1040 = vmax.f32 %v1039, %v751
  %v1041 = vrot.slane %v1040, 4
  %v1042 = vmax.f32 %v1040, %v1041
  %v1043 = vrot.slane %v1042, 2
  %v1044 = vmax.f32 %v1042, %v1043
  %v1045 = vrot.slane %v1044, 1
  %v1046 = vmax.f32 %v1044, %v1045
  %v1047 = vmax.f32 %v756, %v759
  %v1048 = vmax.f32 %v1047, %v764
  %v1049 = vmax.f32 %v1048, %v767
  %v1050 = vmax.f32 %v1049, %v772
  %v1051 = vmax.f32 %v1050, %v775
  %v1052 = vrot.slane %v1051, 4
  %v1053 = vmax.f32 %v1051, %v1052
  %v1054 = vrot.slane %v1053, 2
  %v1055 = vmax.f32 %v1053, %v1054
  %v1056 = vrot.slane %v1055, 1
  %v1057 = vmax.f32 %v1055, %v1056
  %v1058 = vmax.f32 %v780, %v783
  %v1059 = vmax.f32 %v1058, %v788
  %v1060 = vmax.f32 %v1059, %v791
  %v1061 = vmax.f32 %v1060, %v796
  %v1062 = vmax.f32 %v1061, %v799
  %v1063 = vrot.slane %v1062, 4
  %v1064 = vmax.f32 %v1062, %v1063
  %v1065 = vrot.slane %v1064, 2
  %v1066 = vmax.f32 %v1064, %v1065
  %v1067 = vrot.slane %v1066, 1
  %v1068 = vmax.f32 %v1066, %v1067
  %v1069 = vmax.f32 %v804, %v807
  %v1070 = vmax.f32 %v1069, %v812
  %v1071 = vmax.f32 %v1070, %v815
  %v1072 = vmax.f32 %v1071, %v820
  %v1073 = vmax.f32 %v1072, %v823
  %v1074 = vrot.slane %v1073, 4
  %v1075 = vmax.f32 %v1073, %v1074
  %v1076 = vrot.slane %v1075, 2
  %v1077 = vmax.f32 %v1075, %v1076
  %v1078 = vrot.slane %v1077, 1
  %v1079 = vmax.f32 %v1077, %v1078
  %v1080 = vmax.f32 %v828, %v831
  %v1081 = vmax.f32 %v1080, %v836
  %v1082 = vmax.f32 %v1081, %v839
  %v1083 = vmax.f32 %v1082, %v844
  %v1084 = vmax.f32 %v1083, %v847
  %v1085 = vrot.slane %v1084, 4
  %v1086 = vmax.f32 %v1084, %v1085
  %v1087 = vrot.slane %v1086, 2
  %v1088 = vmax.f32 %v1086, %v1087
  %v1089 = vrot.slane %v1088, 1
  %v1090 = vmax.f32 %v1088, %v1089
  %v1091 = vmax.f32 %v852, %v855
  %v1092 = vmax.f32 %v1091, %v860
  %v1093 = vmax.f32 %v1092, %v863
  %v1094 = vmax.f32 %v1093, %v868
  %v1095 = vmax.f32 %v1094, %v871
  %v1096 = vrot.slane %v1095, 4
  %v1097 = vmax.f32 %v1095, %v1096
  %v1098 = vrot.slane %v1097, 2
  %v1099 = vmax.f32 %v1097, %v1098
  %v1100 = vrot.slane %v1099, 1
  %v1101 = vmax.f32 %v1099, %v1100
  %v1102 = vmax.f32 %v876, %v879
  %v1103 = vmax.f32 %v1102, %v884
  %v1104 = vmax.f32 %v1103, %v887
  %v1105 = vmax.f32 %v1104, %v892
  %v1106 = vmax.f32 %v1105, %v895
  %v1107 = vrot.slane %v1106, 4
  %v1108 = vmax.f32 %v1106, %v1107
  %v1109 = vrot.slane %v1108, 2
  %v1110 = vmax.f32 %v1108, %v1109
  %v1111 = vrot.slane %v1110, 1
  %v1112 = vmax.f32 %v1110, %v1111
  %v1113 = vmax.f32 %v900, %v903
  %v1114 = vmax.f32 %v1113, %v908
  %v1115 = vmax.f32 %v1114, %v911
  %v1116 = vmax.f32 %v1115, %v916
  %v1117 = vmax.f32 %v1116, %v919
  %v1118 = vrot.slane %v1117, 4
  %v1119 = vmax.f32 %v1117, %v1118
  %v1120 = vrot.slane %v1119, 2
  %v1121 = vmax.f32 %v1119, %v1120
  %v1122 = vrot.slane %v1121, 1
  %v1123 = vmax.f32 %v1121, %v1122
  %v1124 = vmax.f32 %v924, %v927
  %v1125 = vmax.f32 %v1124, %v932
  %v1126 = vmax.f32 %v1125, %v935
  %v1127 = vmax.f32 %v1126, %v940
  %v1128 = vmax.f32 %v1127, %v943
  %v1129 = vrot.slane %v1128, 4
  %v1130 = vmax.f32 %v1128, %v1129
  %v1131 = vrot.slane %v1130, 2
  %v1132 = vmax.f32 %v1130, %v1131
  %v1133 = vrot.slane %v1132, 1
  %v1134 = vmax.f32 %v1132, %v1133
  %v1135 = vmax.f32 %v948, %v951
  %v1136 = vmax.f32 %v1135, %v956
  %v1137 = vmax.f32 %v1136, %v959
  %v1138 = vmax.f32 %v1137, %v964
  %v1139 = vmax.f32 %v1138, %v967
  %v1140 = vrot.slane %v1139, 4
  %v1141 = vmax.f32 %v1139, %v1140
  %v1142 = vrot.slane %v1141, 2
  %v1143 = vmax.f32 %v1141, %v1142
  %v1144 = vrot.slane %v1143, 1
  %v1145 = vmax.f32 %v1143, %v1144
  %v1146 = vld [vmem:[%s2] sm:$0x1]
  %v1148 = vlaneseq
  %v1149 = vshrl.u32 %v1148, 7
  %v1150 = vsub.s32 0, %v1149
  %v1151 = vrot.slane %v1146, %v1150
  %v1153 = vadd.f32 %v980, %v1151
  %v1154 = vadd.f32 %v991, %v1151
  %v1155 = vadd.f32 %v1002, %v1151
  %v1156 = vadd.f32 %v1013, %v1151
  %v1157 = vadd.f32 %v1024, %v1151
  %v1158 = vadd.f32 %v1035, %v1151
  %v1159 = vadd.f32 %v1046, %v1151
  %v1160 = vadd.f32 %v1057, %v1151
  %v1161 = vadd.f32 %v1068, %v1151
  %v1162 = vadd.f32 %v1079, %v1151
  %v1163 = vadd.f32 %v1090, %v1151
  %v1164 = vadd.f32 %v1101, %v1151
  %v1165 = vadd.f32 %v1112, %v1151
  %v1166 = vadd.f32 %v1123, %v1151
  %v1167 = vadd.f32 %v1134, %v1151
  %v1168 = vadd.f32 %v1145, %v1151
  %v1169 = vmax.f32 %v1153, 0.0
  %v1170 = vmax.f32 %v1154, 0.0
  %v1171 = vmax.f32 %v1155, 0.0
  %v1172 = vmax.f32 %v1156, 0.0
  %v1173 = vmax.f32 %v1157, 0.0
  %v1174 = vmax.f32 %v1158, 0.0
  %v1175 = vmax.f32 %v1159, 0.0
  %v1176 = vmax.f32 %v1160, 0.0
  %v1177 = vmax.f32 %v1161, 0.0
  %v1178 = vmax.f32 %v1162, 0.0
  %v1179 = vmax.f32 %v1163, 0.0
  %v1180 = vmax.f32 %v1164, 0.0
  %v1181 = vmax.f32 %v1165, 0.0
  %v1182 = vmax.f32 %v1166, 0.0
  %v1183 = vmax.f32 %v1167, 0.0
  %v1184 = vmax.f32 %v1168, 0.0
  %v1185 = vpack.c.bf16 %v1169, %v1169
  %v1186 = vpack.c.bf16 %v1170, %v1170
  %v1187 = vpack.c.bf16 %v1171, %v1171
  %v1188 = vpack.c.bf16 %v1172, %v1172
  %v1189 = vpack.c.bf16 %v1173, %v1173
  %v1190 = vpack.c.bf16 %v1174, %v1174
  %v1191 = vpack.c.bf16 %v1175, %v1175
  %v1192 = vpack.c.bf16 %v1176, %v1176
  %v1193 = vpack.c.bf16 %v1177, %v1177
  %v1194 = vpack.c.bf16 %v1178, %v1178
  %v1195 = vpack.c.bf16 %v1179, %v1179
  %v1196 = vpack.c.bf16 %v1180, %v1180
  %v1197 = vpack.c.bf16 %v1181, %v1181
  %v1198 = vpack.c.bf16 %v1182, %v1182
  %v1199 = vpack.c.bf16 %v1183, %v1183
  %v1200 = vpack.c.bf16 %v1184, %v1184
  %v1201 = vld [vmem:[%s3] sm:$0xf]
  %v1202 = vld [vmem:[%s3 + $0x4] sm:$0xf]
  %v1203 = vld [vmem:[%s3 + $0x8] sm:$0xf]
  %v1204 = vld [vmem:[%s3 + $0xc] sm:$0xf]
  %v1205 = vld [vmem:[%s3 + $0x10] sm:$0xf]
  %v1206 = vld [vmem:[%s3 + $0x14] sm:$0xf]
  %v1207 = vld [vmem:[%s3 + $0x18] sm:$0xf]
  %v1208 = vld [vmem:[%s3 + $0x1c] sm:$0xf]
  %v1209 = vld [vmem:[%s3 + $0x20] sm:$0xf]
  %v1210 = vld [vmem:[%s3 + $0x24] sm:$0xf]
  %v1211 = vld [vmem:[%s3 + $0x28] sm:$0xf]
  %v1212 = vld [vmem:[%s3 + $0x2c] sm:$0xf]
  %v1213 = vld [vmem:[%s3 + $0x30] sm:$0xf]
  %v1214 = vld [vmem:[%s3 + $0x34] sm:$0xf]
  %v1215 = vld [vmem:[%s3 + $0x38] sm:$0xf]
  %v1216 = vld [vmem:[%s3 + $0x3c] sm:$0xf]
  %v1217 = vld [vmem:[%s4] sm:$0x1]
  %v1219 = vlaneseq
  %v1220 = vshrl.u32 %v1219, 7
  %v1221 = vsub.s32 0, %v1220
  %v1222 = vrot.slane %v1217, %v1221
  %v1240 = vunpack.c.l.b16 %v1185
  %v1241 = vunpack.c.l.b16 %v1186
  %v1242 = vunpack.c.l.b16 %v1187
  %v1243 = vunpack.c.l.b16 %v1188
  %v1244 = vunpack.c.l.b16 %v1189
  %v1245 = vunpack.c.l.b16 %v1190
  %v1246 = vunpack.c.l.b16 %v1191
  %v1247 = vunpack.c.l.b16 %v1192
  %v1248 = vunpack.c.l.b16 %v1193
  %v1249 = vunpack.c.l.b16 %v1194
  %v1250 = vunpack.c.l.b16 %v1195
  %v1251 = vunpack.c.l.b16 %v1196
  %v1252 = vunpack.c.l.b16 %v1197
  %v1253 = vunpack.c.l.b16 %v1198
  %v1254 = vunpack.c.l.b16 %v1199
  %v1255 = vunpack.c.l.b16 %v1200
  %v1256 = vrot.slane %v1241, 7
  %vm1257 = vcmask 1041409
  %v1258 = vsel %vm1257, %v1256, %v1240
  %v1259 = vrot.slane %v1242, 6
  %vm1260 = vcmask 1042434
  %v1261 = vsel %vm1260, %v1259, %v1258
  %v1262 = vrot.slane %v1243, 5
  %vm1263 = vcmask 1043459
  %v1264 = vsel %vm1263, %v1262, %v1261
  %v1265 = vrot.slane %v1244, 4
  %vm1266 = vcmask 1044484
  %v1267 = vsel %vm1266, %v1265, %v1264
  %v1268 = vrot.slane %v1245, 3
  %vm1269 = vcmask 1045509
  %v1270 = vsel %vm1269, %v1268, %v1267
  %v1271 = vrot.slane %v1246, 2
  %vm1272 = vcmask 1046534
  %v1273 = vsel %vm1272, %v1271, %v1270
  %v1274 = vrot.slane %v1247, 1
  %vm1275 = vcmask 1047559
  %v1276 = vsel %vm1275, %v1274, %v1273
  %v1277 = vrot.slane %v1249, 7
  %v1278 = vsel %vm1257, %v1277, %v1248
  %v1279 = vrot.slane %v1250, 6
  %v1280 = vsel %vm1260, %v1279, %v1278
  %v1281 = vrot.slane %v1251, 5
  %v1282 = vsel %vm1263, %v1281, %v1280
  %v1283 = vrot.slane %v1252, 4
  %v1284 = vsel %vm1266, %v1283, %v1282
  %v1285 = vrot.slane %v1253, 3
  %v1286 = vsel %vm1269, %v1285, %v1284
  %v1287 = vrot.slane %v1254, 2
  %v1288 = vsel %vm1272, %v1287, %v1286
  %v1289 = vrot.slane %v1255, 1
  %v1290 = vsel %vm1275, %v1289, %v1288
  %v1291 = vpack.c.b16 %v1290, %v1276
  %v1309 = vunpack.c.l.b16 %v1201
  %v1310 = vunpack.c.l.b16 %v1202
  %v1311 = vunpack.c.l.b16 %v1203
  %v1312 = vunpack.c.l.b16 %v1204
  %v1313 = vunpack.c.l.b16 %v1205
  %v1314 = vunpack.c.l.b16 %v1206
  %v1315 = vunpack.c.l.b16 %v1207
  %v1316 = vunpack.c.l.b16 %v1208
  %v1317 = vunpack.c.l.b16 %v1209
  %v1318 = vunpack.c.l.b16 %v1210
  %v1319 = vunpack.c.l.b16 %v1211
  %v1320 = vunpack.c.l.b16 %v1212
  %v1321 = vunpack.c.l.b16 %v1213
  %v1322 = vunpack.c.l.b16 %v1214
  %v1323 = vunpack.c.l.b16 %v1215
  %v1324 = vunpack.c.l.b16 %v1216
  %v1325 = vpack.c.b16 %v1310, %v1309
  %v1326 = vpack.c.b16 %v1312, %v1311
  %v1327 = vpack.c.b16 %v1314, %v1313
  %v1328 = vpack.c.b16 %v1316, %v1315
  %v1329 = vpack.c.b16 %v1318, %v1317
  %v1330 = vpack.c.b16 %v1320, %v1319
  %v1331 = vpack.c.b16 %v1322, %v1321
  %v1332 = vpack.c.b16 %v1324, %v1323
  %1341 = vmatprep.subr.bf16.mxu0 0
  %1342 = vmatpush1.bf16.msra.mxu0 %v1332
  %1343 = vmatprep.subr.bf16.mxu0 0
  %1344 = vmatpush1.bf16.msra.mxu0 %v1331
  %1345 = vmatprep.subr.bf16.mxu0 0
  %1346 = vmatpush1.bf16.msra.mxu0 %v1330
  %1347 = vmatprep.subr.bf16.mxu0 0
  %1348 = vmatpush1.bf16.msra.mxu0 %v1329
  %1349 = vmatprep.subr.bf16.mxu0 0
  %1350 = vmatpush1.bf16.msra.mxu0 %v1328
  %1351 = vmatprep.subr.bf16.mxu0 0
  %1352 = vmatpush1.bf16.msra.mxu0 %v1327
  %1353 = vmatprep.subr.bf16.mxu0 0
  %1354 = vmatpush1.bf16.msra.mxu0 %v1326
  %1355 = vmatprep.subr.bf16.mxu0 0
  %1356 = vmatpush1.bf16.msra.mxu0 %v1325
  %1357 = vmatprep.subr.bf16.mxu0 0
  %1358 = vmatpush2.bf16.msra.mxu0 0
  %1359 = vmatprep.subr.bf16.mxu0 0
  %1360 = vmatpush2.bf16.msra.mxu0 0
  %1361 = vmatprep.subr.bf16.mxu0 0
  %1362 = vmatpush2.bf16.msra.mxu0 0
  %1363 = vmatprep.subr.bf16.mxu0 0
  %1364 = vmatpush2.bf16.msra.mxu0 0
  %1365 = vmatprep.subr.bf16.mxu0 0
  %1366 = vmatpush2.bf16.msra.mxu0 0
  %1367 = vmatprep.subr.bf16.mxu0 0
  %1368 = vmatpush2.bf16.msra.mxu0 0
  %1369 = vmatprep.subr.bf16.mxu0 0
  %1370 = vmatpush2.bf16.msra.mxu0 0
  %1371 = vmatprep.subr.bf16.mxu0 0
  %1372 = vmatpush2.bf16.msra.mxu0 0
  %1373 = vmatprep.mubr.bf16.mxu0 0
  %1374 = vmatmul.mubr.bf16.gmra.mxu0 %v1291
  %v1375 = vpop.f32.mrf.mxu0
  %v1376 = vadd.f32 %v1222, %v1375
  %v1377 = vpop.f32.mrf.mxu0
  %v1378 = vpop.f32.mrf.mxu0
  %v1379 = vadd.f32 %v1222, %v1378
  %v1380 = vpop.f32.mrf.mxu0
  %1381 = vdwg.mxu0
  %v1382 = vmax.f32 %v1376, 0.0
  %v1383 = vmax.f32 %v1379, 0.0
  %v1384 = vld [vmem:[%s5] sm:$0xf]
  %v1385 = vld [vmem:[%s5 + $0x4] sm:$0xf]
  %v1386 = vld [vmem:[%s5 + $0x8] sm:$0xf]
  %v1387 = vld [vmem:[%s5 + $0xc] sm:$0xf]
  %v1388 = vld [vmem:[%s5 + $0x10] sm:$0xf]
  %v1389 = vld [vmem:[%s5 + $0x14] sm:$0xf]
  %v1390 = vld [vmem:[%s5 + $0x18] sm:$0xf]
  %v1391 = vld [vmem:[%s5 + $0x1c] sm:$0xf]
  %v1392 = vld [vmem:[%s5 + $0x20] sm:$0xf]
  %v1393 = vld [vmem:[%s5 + $0x24] sm:$0xf]
  %v1394 = vld [vmem:[%s5 + $0x28] sm:$0xf]
  %v1395 = vld [vmem:[%s5 + $0x2c] sm:$0xf]
  %v1396 = vld [vmem:[%s5 + $0x30] sm:$0xf]
  %v1397 = vld [vmem:[%s5 + $0x34] sm:$0xf]
  %v1398 = vld [vmem:[%s5 + $0x38] sm:$0xf]
  %v1399 = vld [vmem:[%s5 + $0x3c] sm:$0xf]
  %v1400 = vld [vmem:[%s6] sm:$0x1]
  %v1402 = vlaneseq
  %v1403 = vshrl.u32 %v1402, 7
  %v1404 = vsub.s32 0, %v1403
  %v1405 = vrot.slane %v1400, %v1404
  %v1423 = vunpack.c.l.b16 %v1384
  %v1424 = vunpack.c.l.b16 %v1385
  %v1425 = vunpack.c.l.b16 %v1386
  %v1426 = vunpack.c.l.b16 %v1387
  %v1427 = vunpack.c.l.b16 %v1388
  %v1428 = vunpack.c.l.b16 %v1389
  %v1429 = vunpack.c.l.b16 %v1390
  %v1430 = vunpack.c.l.b16 %v1391
  %v1431 = vunpack.c.l.b16 %v1392
  %v1432 = vunpack.c.l.b16 %v1393
  %v1433 = vunpack.c.l.b16 %v1394
  %v1434 = vunpack.c.l.b16 %v1395
  %v1435 = vunpack.c.l.b16 %v1396
  %v1436 = vunpack.c.l.b16 %v1397
  %v1437 = vunpack.c.l.b16 %v1398
  %v1438 = vunpack.c.l.b16 %v1399
  %v1439 = vpack.c.b16 %v1424, %v1423
  %v1440 = vpack.c.b16 %v1426, %v1425
  %v1441 = vpack.c.b16 %v1428, %v1427
  %v1442 = vpack.c.b16 %v1430, %v1429
  %v1443 = vpack.c.b16 %v1432, %v1431
  %v1444 = vpack.c.b16 %v1434, %v1433
  %v1445 = vpack.c.b16 %v1436, %v1435
  %v1446 = vpack.c.b16 %v1438, %v1437
  %1455 = vmatprep.subr.bf16.mxu0 0
  %1456 = vmatpush1.bf16.msra.mxu0 %v1446
  %1457 = vmatprep.subr.bf16.mxu0 0
  %1458 = vmatpush1.bf16.msra.mxu0 %v1445
  %1459 = vmatprep.subr.bf16.mxu0 0
  %1460 = vmatpush1.bf16.msra.mxu0 %v1444
  %1461 = vmatprep.subr.bf16.mxu0 0
  %1462 = vmatpush1.bf16.msra.mxu0 %v1443
  %1463 = vmatprep.subr.bf16.mxu0 0
  %1464 = vmatpush1.bf16.msra.mxu0 %v1442
  %1465 = vmatprep.subr.bf16.mxu0 0
  %1466 = vmatpush1.bf16.msra.mxu0 %v1441
  %1467 = vmatprep.subr.bf16.mxu0 0
  %1468 = vmatpush1.bf16.msra.mxu0 %v1440
  %1469 = vmatprep.subr.bf16.mxu0 0
  %1470 = vmatpush1.bf16.msra.mxu0 %v1439
  %1471 = vmatprep.subr.bf16.mxu0 0
  %1472 = vmatpush2.bf16.msra.mxu0 0
  %1473 = vmatprep.subr.bf16.mxu0 0
  %1474 = vmatpush2.bf16.msra.mxu0 0
  %1475 = vmatprep.subr.bf16.mxu0 0
  %1476 = vmatpush2.bf16.msra.mxu0 0
  %1477 = vmatprep.subr.bf16.mxu0 0
  %1478 = vmatpush2.bf16.msra.mxu0 0
  %1479 = vmatprep.subr.bf16.mxu0 0
  %1480 = vmatpush2.bf16.msra.mxu0 0
  %1481 = vmatprep.subr.bf16.mxu0 0
  %1482 = vmatpush2.bf16.msra.mxu0 0
  %1483 = vmatprep.subr.bf16.mxu0 0
  %1484 = vmatpush2.bf16.msra.mxu0 0
  %1485 = vmatprep.subr.bf16.mxu0 0
  %1486 = vmatpush2.bf16.msra.mxu0 0
  %1487 = vmatprep.mubr.bf16.mxu0 0
  %1488 = vmatmul.mubr.bf16.gmra.mxu0 %v1291
  %v1489 = vpop.f32.mrf.mxu0
  %v1490 = vadd.f32 %v1405, %v1489
  %v1491 = vpop.f32.mrf.mxu0
  %v1492 = vpop.f32.mrf.mxu0
  %v1493 = vadd.f32 %v1405, %v1492
  %v1494 = vpop.f32.mrf.mxu0
  %1495 = vdwg.mxu0
  %v1496 = vxor.u32 %v1490, 2147483648
  %v1497 = vxor.u32 %v1493, 2147483648
  %v1498 = vmul.f32 %v1496, 1.442695
  %v1499 = vpow.pop %v1498
  %v1500 = vmul.f32 %v1497, 1.442695
  %v1501 = vpow.pop %v1500
  %v1502 = vadd.f32 %v1499, 1.0
  %v1503 = vadd.f32 %v1501, 1.0
  %v1504 = vrcp.pop %v1502
  %v1505 = vmul.f32 1.0, %v1504
  %v1506 = vrcp.pop %v1503
  %v1507 = vmul.f32 1.0, %v1506
  %v1508 = vmul.f32 %v1505, %v1382
  %v1509 = vmul.f32 %v1507, %v1383
  %v1510 = vsub.f32 1.0, %v1505
  %v1511 = vsub.f32 1.0, %v1507
  %v1528 = vrot.slane %v1170, 7
  %v1529 = vsel %vm1257, %v1528, %v1169
  %v1530 = vrot.slane %v1171, 6
  %v1531 = vsel %vm1260, %v1530, %v1529
  %v1532 = vrot.slane %v1172, 5
  %v1533 = vsel %vm1263, %v1532, %v1531
  %v1534 = vrot.slane %v1173, 4
  %v1535 = vsel %vm1266, %v1534, %v1533
  %v1536 = vrot.slane %v1174, 3
  %v1537 = vsel %vm1269, %v1536, %v1535
  %v1538 = vrot.slane %v1175, 2
  %v1539 = vsel %vm1272, %v1538, %v1537
  %v1540 = vrot.slane %v1176, 1
  %v1541 = vsel %vm1275, %v1540, %v1539
  %v1542 = vrot.slane %v1178, 7
  %v1543 = vsel %vm1257, %v1542, %v1177
  %v1544 = vrot.slane %v1179, 6
  %v1545 = vsel %vm1260, %v1544, %v1543
  %v1546 = vrot.slane %v1180, 5
  %v1547 = vsel %vm1263, %v1546, %v1545
  %v1548 = vrot.slane %v1181, 4
  %v1549 = vsel %vm1266, %v1548, %v1547
  %v1550 = vrot.slane %v1182, 3
  %v1551 = vsel %vm1269, %v1550, %v1549
  %v1552 = vrot.slane %v1183, 2
  %v1553 = vsel %vm1272, %v1552, %v1551
  %v1554 = vrot.slane %v1184, 1
  %v1555 = vsel %vm1275, %v1554, %v1553
  %v1558 = vmul.f32 %v1510, %v1541
  %v1559 = vmul.f32 %v1511, %v1555
  %v1560 = vadd.f32 %v1508, %v1558
  %v1561 = vadd.f32 %v1509, %v1559
  %v1562 = vpack.c.bf16 %v1561, %v1560
  %v1563 = vld [vmem:[%s7] sm:$0xf]
  %v1564 = vld [vmem:[%s7 + $0x4] sm:$0xf]
  %v1565 = vld [vmem:[%s7 + $0x8] sm:$0xf]
  %v1566 = vld [vmem:[%s7 + $0xc] sm:$0xf]
  %v1567 = vld [vmem:[%s7 + $0x10] sm:$0xf]
  %v1568 = vld [vmem:[%s7 + $0x14] sm:$0xf]
  %v1569 = vld [vmem:[%s7 + $0x18] sm:$0xf]
  %v1570 = vld [vmem:[%s7 + $0x1c] sm:$0xf]
  %v1571 = vld [vmem:[%s7 + $0x20] sm:$0xf]
  %v1572 = vld [vmem:[%s7 + $0x24] sm:$0xf]
  %v1573 = vld [vmem:[%s7 + $0x28] sm:$0xf]
  %v1574 = vld [vmem:[%s7 + $0x2c] sm:$0xf]
  %v1575 = vld [vmem:[%s7 + $0x30] sm:$0xf]
  %v1576 = vld [vmem:[%s7 + $0x34] sm:$0xf]
  %v1577 = vld [vmem:[%s7 + $0x38] sm:$0xf]
  %v1578 = vld [vmem:[%s7 + $0x3c] sm:$0xf]
  %v1579 = vld [vmem:[%s8] sm:$0x1]
  %v1581 = vlaneseq
  %v1582 = vshrl.u32 %v1581, 7
  %v1583 = vsub.s32 0, %v1582
  %v1584 = vrot.slane %v1579, %v1583
  %v1602 = vunpack.c.l.b16 %v1563
  %v1603 = vunpack.c.l.b16 %v1564
  %v1604 = vunpack.c.l.b16 %v1565
  %v1605 = vunpack.c.l.b16 %v1566
  %v1606 = vunpack.c.l.b16 %v1567
  %v1607 = vunpack.c.l.b16 %v1568
  %v1608 = vunpack.c.l.b16 %v1569
  %v1609 = vunpack.c.l.b16 %v1570
  %v1610 = vunpack.c.l.b16 %v1571
  %v1611 = vunpack.c.l.b16 %v1572
  %v1612 = vunpack.c.l.b16 %v1573
  %v1613 = vunpack.c.l.b16 %v1574
  %v1614 = vunpack.c.l.b16 %v1575
  %v1615 = vunpack.c.l.b16 %v1576
  %v1616 = vunpack.c.l.b16 %v1577
  %v1617 = vunpack.c.l.b16 %v1578
  %v1618 = vpack.c.b16 %v1603, %v1602
  %v1619 = vpack.c.b16 %v1605, %v1604
  %v1620 = vpack.c.b16 %v1607, %v1606
  %v1621 = vpack.c.b16 %v1609, %v1608
  %v1622 = vpack.c.b16 %v1611, %v1610
  %v1623 = vpack.c.b16 %v1613, %v1612
  %v1624 = vpack.c.b16 %v1615, %v1614
  %v1625 = vpack.c.b16 %v1617, %v1616
  %1634 = vmatprep.subr.bf16.mxu0 0
  %1635 = vmatpush1.bf16.msra.mxu0 %v1625
  %1636 = vmatprep.subr.bf16.mxu0 0
  %1637 = vmatpush1.bf16.msra.mxu0 %v1624
  %1638 = vmatprep.subr.bf16.mxu0 0
  %1639 = vmatpush1.bf16.msra.mxu0 %v1623
  %1640 = vmatprep.subr.bf16.mxu0 0
  %1641 = vmatpush1.bf16.msra.mxu0 %v1622
  %1642 = vmatprep.subr.bf16.mxu0 0
  %1643 = vmatpush1.bf16.msra.mxu0 %v1621
  %1644 = vmatprep.subr.bf16.mxu0 0
  %1645 = vmatpush1.bf16.msra.mxu0 %v1620
  %1646 = vmatprep.subr.bf16.mxu0 0
  %1647 = vmatpush1.bf16.msra.mxu0 %v1619
  %1648 = vmatprep.subr.bf16.mxu0 0
  %1649 = vmatpush1.bf16.msra.mxu0 %v1618
  %1650 = vmatprep.subr.bf16.mxu0 0
  %1651 = vmatpush2.bf16.msra.mxu0 0
  %1652 = vmatprep.subr.bf16.mxu0 0
  %1653 = vmatpush2.bf16.msra.mxu0 0
  %1654 = vmatprep.subr.bf16.mxu0 0
  %1655 = vmatpush2.bf16.msra.mxu0 0
  %1656 = vmatprep.subr.bf16.mxu0 0
  %1657 = vmatpush2.bf16.msra.mxu0 0
  %1658 = vmatprep.subr.bf16.mxu0 0
  %1659 = vmatpush2.bf16.msra.mxu0 0
  %1660 = vmatprep.subr.bf16.mxu0 0
  %1661 = vmatpush2.bf16.msra.mxu0 0
  %1662 = vmatprep.subr.bf16.mxu0 0
  %1663 = vmatpush2.bf16.msra.mxu0 0
  %1664 = vmatprep.subr.bf16.mxu0 0
  %1665 = vmatpush2.bf16.msra.mxu0 0
  %1666 = vmatprep.mubr.bf16.mxu0 0
  %1667 = vmatmul.mubr.bf16.gmra.mxu0 %v1562
  %v1668 = vpop.f32.mrf.mxu0
  %v1669 = vadd.f32 %v1584, %v1668
  %v1670 = vpop.f32.mrf.mxu0
  %v1671 = vpop.f32.mrf.mxu0
  %v1672 = vadd.f32 %v1584, %v1671
  %v1673 = vpop.f32.mrf.mxu0
  %1674 = vdwg.mxu0
  %vm1675 = vcmask 261120
  %1676 = vst.msk [vmem:[%s13] sm:$0xff] %vm1675, %v1669
  %1677 = vst.msk [vmem:[%s13 + $0x8] sm:$0xff] %vm1675, %v1672
  %v1678 = vld [vmem:[%s9] sm:$0xf]
  %v1679 = vld [vmem:[%s9 + $0x4] sm:$0xf]
  %v1680 = vld [vmem:[%s9 + $0x8] sm:$0xf]
  %v1681 = vld [vmem:[%s9 + $0xc] sm:$0xf]
  %v1682 = vld [vmem:[%s9 + $0x10] sm:$0xf]
  %v1683 = vld [vmem:[%s9 + $0x14] sm:$0xf]
  %v1684 = vld [vmem:[%s9 + $0x18] sm:$0xf]
  %v1685 = vld [vmem:[%s9 + $0x1c] sm:$0xf]
  %v1686 = vld [vmem:[%s9 + $0x20] sm:$0xf]
  %v1687 = vld [vmem:[%s9 + $0x24] sm:$0xf]
  %v1688 = vld [vmem:[%s9 + $0x28] sm:$0xf]
  %v1689 = vld [vmem:[%s9 + $0x2c] sm:$0xf]
  %v1690 = vld [vmem:[%s9 + $0x30] sm:$0xf]
  %v1691 = vld [vmem:[%s9 + $0x34] sm:$0xf]
  %v1692 = vld [vmem:[%s9 + $0x38] sm:$0xf]
  %v1693 = vld [vmem:[%s9 + $0x3c] sm:$0xf]
  %v1694 = vld [vmem:[%s10] sm:$0x1]
  %v1696 = vlaneseq
  %v1697 = vshrl.u32 %v1696, 7
  %v1698 = vsub.s32 0, %v1697
  %v1699 = vrot.slane %v1694, %v1698
  %v1717 = vunpack.c.l.b16 %v1678
  %v1718 = vunpack.c.l.b16 %v1679
  %v1719 = vunpack.c.l.b16 %v1680
  %v1720 = vunpack.c.l.b16 %v1681
  %v1721 = vunpack.c.l.b16 %v1682
  %v1722 = vunpack.c.l.b16 %v1683
  %v1723 = vunpack.c.l.b16 %v1684
  %v1724 = vunpack.c.l.b16 %v1685
  %v1725 = vunpack.c.l.b16 %v1686
  %v1726 = vunpack.c.l.b16 %v1687
  %v1727 = vunpack.c.l.b16 %v1688
  %v1728 = vunpack.c.l.b16 %v1689
  %v1729 = vunpack.c.l.b16 %v1690
  %v1730 = vunpack.c.l.b16 %v1691
  %v1731 = vunpack.c.l.b16 %v1692
  %v1732 = vunpack.c.l.b16 %v1693
  %v1733 = vpack.c.b16 %v1718, %v1717
  %v1734 = vpack.c.b16 %v1720, %v1719
  %v1735 = vpack.c.b16 %v1722, %v1721
  %v1736 = vpack.c.b16 %v1724, %v1723
  %v1737 = vpack.c.b16 %v1726, %v1725
  %v1738 = vpack.c.b16 %v1728, %v1727
  %v1739 = vpack.c.b16 %v1730, %v1729
  %v1740 = vpack.c.b16 %v1732, %v1731
  %1749 = vmatprep.subr.bf16.mxu0 0
  %1750 = vmatpush1.bf16.msra.mxu0 %v1740
  %1751 = vmatprep.subr.bf16.mxu0 0
  %1752 = vmatpush1.bf16.msra.mxu0 %v1739
  %1753 = vmatprep.subr.bf16.mxu0 0
  %1754 = vmatpush1.bf16.msra.mxu0 %v1738
  %1755 = vmatprep.subr.bf16.mxu0 0
  %1756 = vmatpush1.bf16.msra.mxu0 %v1737
  %1757 = vmatprep.subr.bf16.mxu0 0
  %1758 = vmatpush1.bf16.msra.mxu0 %v1736
  %1759 = vmatprep.subr.bf16.mxu0 0
  %1760 = vmatpush1.bf16.msra.mxu0 %v1735
  %1761 = vmatprep.subr.bf16.mxu0 0
  %1762 = vmatpush1.bf16.msra.mxu0 %v1734
  %1763 = vmatprep.subr.bf16.mxu0 0
  %1764 = vmatpush1.bf16.msra.mxu0 %v1733
  %1765 = vmatprep.subr.bf16.mxu0 0
  %1766 = vmatpush2.bf16.msra.mxu0 0
  %1767 = vmatprep.subr.bf16.mxu0 0
  %1768 = vmatpush2.bf16.msra.mxu0 0
  %1769 = vmatprep.subr.bf16.mxu0 0
  %1770 = vmatpush2.bf16.msra.mxu0 0
  %1771 = vmatprep.subr.bf16.mxu0 0
  %1772 = vmatpush2.bf16.msra.mxu0 0
  %1773 = vmatprep.subr.bf16.mxu0 0
  %1774 = vmatpush2.bf16.msra.mxu0 0
  %1775 = vmatprep.subr.bf16.mxu0 0
  %1776 = vmatpush2.bf16.msra.mxu0 0
  %1777 = vmatprep.subr.bf16.mxu0 0
  %1778 = vmatpush2.bf16.msra.mxu0 0
  %1779 = vmatprep.subr.bf16.mxu0 0
  %1780 = vmatpush2.bf16.msra.mxu0 0
  %1781 = vmatprep.mubr.bf16.mxu0 0
  %1782 = vmatmul.mubr.bf16.gmra.mxu0 %v1562
  %v1783 = vpop.f32.mrf.mxu0
  %v1784 = vadd.f32 %v1699, %v1783
  %v1785 = vpop.f32.mrf.mxu0
  %v1786 = vpop.f32.mrf.mxu0
  %v1787 = vadd.f32 %v1699, %v1786
  %v1788 = vpop.f32.mrf.mxu0
  %1789 = vdwg.mxu0
  %1790 = vst [vmem:[%s14] sm:$0xff] %v1784
  %1791 = vst [vmem:[%s14 + $0x8] sm:$0xff] %v1787
  %v1792 = vld [vmem:[%s11] sm:$0xf]
  %v1793 = vld [vmem:[%s11 + $0x4] sm:$0xf]
  %v1794 = vld [vmem:[%s11 + $0x8] sm:$0xf]
  %v1795 = vld [vmem:[%s11 + $0xc] sm:$0xf]
  %v1796 = vld [vmem:[%s11 + $0x10] sm:$0xf]
  %v1797 = vld [vmem:[%s11 + $0x14] sm:$0xf]
  %v1798 = vld [vmem:[%s11 + $0x18] sm:$0xf]
  %v1799 = vld [vmem:[%s11 + $0x1c] sm:$0xf]
  %v1800 = vld [vmem:[%s11 + $0x20] sm:$0xf]
  %v1801 = vld [vmem:[%s11 + $0x24] sm:$0xf]
  %v1802 = vld [vmem:[%s11 + $0x28] sm:$0xf]
  %v1803 = vld [vmem:[%s11 + $0x2c] sm:$0xf]
  %v1804 = vld [vmem:[%s11 + $0x30] sm:$0xf]
  %v1805 = vld [vmem:[%s11 + $0x34] sm:$0xf]
  %v1806 = vld [vmem:[%s11 + $0x38] sm:$0xf]
  %v1807 = vld [vmem:[%s11 + $0x3c] sm:$0xf]
  %v1808 = vld [vmem:[%s12] sm:$0x1]
  %v1810 = vlaneseq
  %v1811 = vshrl.u32 %v1810, 7
  %v1812 = vsub.s32 0, %v1811
  %v1813 = vrot.slane %v1808, %v1812
  %v1831 = vunpack.c.l.b16 %v1792
  %v1832 = vunpack.c.l.b16 %v1793
  %v1833 = vunpack.c.l.b16 %v1794
  %v1834 = vunpack.c.l.b16 %v1795
  %v1835 = vunpack.c.l.b16 %v1796
  %v1836 = vunpack.c.l.b16 %v1797
  %v1837 = vunpack.c.l.b16 %v1798
  %v1838 = vunpack.c.l.b16 %v1799
  %v1839 = vunpack.c.l.b16 %v1800
  %v1840 = vunpack.c.l.b16 %v1801
  %v1841 = vunpack.c.l.b16 %v1802
  %v1842 = vunpack.c.l.b16 %v1803
  %v1843 = vunpack.c.l.b16 %v1804
  %v1844 = vunpack.c.l.b16 %v1805
  %v1845 = vunpack.c.l.b16 %v1806
  %v1846 = vunpack.c.l.b16 %v1807
  %v1847 = vpack.c.b16 %v1832, %v1831
  %v1848 = vpack.c.b16 %v1834, %v1833
  %v1849 = vpack.c.b16 %v1836, %v1835
  %v1850 = vpack.c.b16 %v1838, %v1837
  %v1851 = vpack.c.b16 %v1840, %v1839
  %v1852 = vpack.c.b16 %v1842, %v1841
  %v1853 = vpack.c.b16 %v1844, %v1843
  %v1854 = vpack.c.b16 %v1846, %v1845
  %1863 = vmatprep.subr.bf16.mxu0 0
  %1864 = vmatpush1.bf16.msra.mxu0 %v1854
  %1865 = vmatprep.subr.bf16.mxu0 0
  %1866 = vmatpush1.bf16.msra.mxu0 %v1853
  %1867 = vmatprep.subr.bf16.mxu0 0
  %1868 = vmatpush1.bf16.msra.mxu0 %v1852
  %1869 = vmatprep.subr.bf16.mxu0 0
  %1870 = vmatpush1.bf16.msra.mxu0 %v1851
  %1871 = vmatprep.subr.bf16.mxu0 0
  %1872 = vmatpush1.bf16.msra.mxu0 %v1850
  %1873 = vmatprep.subr.bf16.mxu0 0
  %1874 = vmatpush1.bf16.msra.mxu0 %v1849
  %1875 = vmatprep.subr.bf16.mxu0 0
  %1876 = vmatpush1.bf16.msra.mxu0 %v1848
  %1877 = vmatprep.subr.bf16.mxu0 0
  %1878 = vmatpush1.bf16.msra.mxu0 %v1847
  %1879 = vmatprep.subr.bf16.mxu0 0
  %1880 = vmatpush2.bf16.msra.mxu0 0
  %1881 = vmatprep.subr.bf16.mxu0 0
  %1882 = vmatpush2.bf16.msra.mxu0 0
  %1883 = vmatprep.subr.bf16.mxu0 0
  %1884 = vmatpush2.bf16.msra.mxu0 0
  %1885 = vmatprep.subr.bf16.mxu0 0
  %1886 = vmatpush2.bf16.msra.mxu0 0
  %1887 = vmatprep.subr.bf16.mxu0 0
  %1888 = vmatpush2.bf16.msra.mxu0 0
  %1889 = vmatprep.subr.bf16.mxu0 0
  %1890 = vmatpush2.bf16.msra.mxu0 0
  %1891 = vmatprep.subr.bf16.mxu0 0
  %1892 = vmatpush2.bf16.msra.mxu0 0
  %1893 = vmatprep.subr.bf16.mxu0 0
  %1894 = vmatpush2.bf16.msra.mxu0 0
  %1895 = vmatprep.mubr.bf16.mxu0 0
  %1896 = vmatmul.mubr.bf16.gmra.mxu0 %v1562
  %v1897 = vpop.f32.mrf.mxu0
  %v1898 = vadd.f32 %v1813, %v1897
  %v1899 = vpop.f32.mrf.mxu0
  %v1900 = vpop.f32.mrf.mxu0
  %v1901 = vadd.f32 %v1813, %v1900
  %v1902 = vpop.f32.mrf.mxu0
  %1903 = vdwg.mxu0
  %1904 = vst [vmem:[%s15] sm:$0xff] %v1898
  %1905 = vst [vmem:[%s15 + $0x8] sm:$0xff] %v1901
  // Predicated region
  $region54: #{elmo_embedding_forward.2} parent=0 // pred_check
    _
  $region55: #{elmo_embedding_forward.2} parent=0 // pred_check_branch
    %1907 = sbr.rel (0) target = $region57
  $region56: #{elmo_embedding_forward.2} parent=0 // pred_region
    _
  $region57: #{elmo_embedding_forward.2} parent=0 // pred_fallthru
    _
  // Predicated region
  $region58: #{elmo_embedding_forward.2} parent=0 // pred_check
    _
  $region59: #{elmo_embedding_forward.2} parent=0 // pred_check_branch
    %1909 = sbr.rel (0) target = $region61
  $region60: #{elmo_embedding_forward.2} parent=0 // pred_region
    _
  $region61: #{elmo_embedding_forward.2} parent=0 // pred_fallthru
    _
  // Predicated region
  $region62: #{elmo_embedding_forward.2} parent=0 // pred_check
    _
  $region63: #{elmo_embedding_forward.2} parent=0 // pred_check_branch
    %1911 = sbr.rel (0) target = $region65
  $region64: #{elmo_embedding_forward.2} parent=0 // pred_region
    _
  $region65: #{elmo_embedding_forward.2} parent=0 // pred_fallthru
    _
  // Predicated region
  $region66: #{elmo_embedding_forward.2} parent=0 // pred_check
    _
  $region67: #{elmo_embedding_forward.2} parent=0 // pred_check_branch
    %1913 = sbr.rel (0) target = $region69
  $region68: #{elmo_embedding_forward.2} parent=0 // pred_region
    _
  $region69: #{elmo_embedding_forward.2} parent=0 // pred_fallthru
    _
  // Predicated region
  $region70: #{elmo_embedding_forward.2} parent=0 // pred_check
    _
  $region71: #{elmo_embedding_forward.2} parent=0 // pred_check_branch
    %1915 = sbr.rel (0) target = $region73
  $region72: #{elmo_embedding_forward.2} parent=0 // pred_region
    _
  $region73: #{elmo_embedding_forward.2} parent=0 // pred_fallthru
    _
  // Predicated region
  $region74: #{elmo_embedding_forward.2} parent=0 // pred_check
    _
  $region75: #{elmo_embedding_forward.2} parent=0 // pred_check_branch
    %1917 = sbr.rel (0) target = $region77
  $region76: #{elmo_embedding_forward.2} parent=0 // pred_region
    _
  $region77: #{elmo_embedding_forward.2} parent=0 // pred_fallthru
    _

</llo_original>
